<compile_context>
chip_gen: v5e
topology: v5e:2x2
jax: 0.10.0
libtpu: 0.0.40
codegen_flags: <defaults>
</compile_context>

<pallas_src>
import jax
import jax.numpy as jnp
from jax.experimental import pallas as pl
from jax.experimental.pallas import tpu as pltpu

D_IN = 2048
HID = 512
C = 10
C_PAD = 128          # lane-dense output / one MXU N-tile. Do NOT grow to 256: the
                     # second matmul is <3% of FLOPs and padding further only doubles
                     # the padded store + slice traffic.
NEG_BIG = -1.0e30    # padded-logit bias; never wins max, exp() underflows to 0 (f32!)


def _class_classifier_kernel(x_ref, w1_ref, b1_ref, w2_ref, b2_ref, o_ref):
    # x streams as f32; cast to bf16 in-kernel (VPU work hidden under the MXU) so the
    # wrapper never pays a separate HBM cast pass on the dominant streaming operand.
    x = x_ref[...].astype(jnp.bfloat16)

    # First linear + ReLU: bf16 operands, f32 accumulation on the MXU.
    h = jnp.dot(x, w1_ref[...], preferred_element_type=jnp.float32)
    h = h + b1_ref[...]                       # (TB, 512) + (1, 512) broadcast, f32
    h = jnp.maximum(h, 0.0)                   # ReLU(inplace=True) semantics

    # Second linear on the padded 128-wide output tile.
    logits = jnp.dot(h.astype(jnp.bfloat16), w2_ref[...],
                     preferred_element_type=jnp.float32)
    # NOTE: this bias add MUST stay in f32 -- padded b2 lanes hold -1e30, which would
    # overflow to -inf (and give NaN after the max-subtraction) if done in bf16.
    logits = logits + b2_ref[...]             # (TB, 128) + (1, 128) broadcast

    # Numerically stable log_softmax over the last axis. Padded columns sit at ~-1e30:
    # they never win the max and exp(shifted) underflows to 0, so the log-sum-exp over
    # 128 lanes equals the one over the 10 real classes.
    m = jnp.max(logits, axis=-1, keepdims=True)
    shifted = logits - m
    lse = jnp.log(jnp.sum(jnp.exp(shifted), axis=-1, keepdims=True))
    o_ref[...] = (shifted - lse).astype(o_ref.dtype)


def _round_up(x, m):
    return ((x + m - 1) // m) * m


def _choose_batch_tile(B, tb):
    """Pick the per-step batch tile.

    * multiple of 16 (vreg sublane packing) for non-tiny batches, multiple of 8 always
      (satisfies the (8, 128) block constraint for any B),
    * at least 2 grid steps when B > 32 so the "parallel" batch axis can shard across
      v7x's two TensorCores,
    * capped by `tb` (VMEM budget) and by the (rounded-up) batch itself.
    """
    if B > 32:
        tb_eff = min(tb, _round_up(pl.cdiv(B, 2), 16))
    else:
        tb_eff = _round_up(B, 8)
    return max(8, min(tb_eff, _round_up(B, 8)))


def prepare_class_classifier_params(w1, b1, w2, b2):
    """One-time weight packing (bf16 cast + 128-lane padding).

    Call once and reuse across forwards -- doing this per call would re-read 4 MiB of
    f32 W1 and re-write 2 MiB of bf16 every step, which dominates small-batch latency.
    """
    assert w1.shape == (D_IN, HID) and b1.shape == (HID,)
    assert w2.shape == (HID, C) and b2.shape == (C,)
    w1_bf = w1.astype(jnp.bfloat16)
    b1_2d = b1.reshape(1, HID).astype(jnp.float32)
    w2_pad = (jnp.zeros((HID, C_PAD), jnp.float32)
              .at[:, :C].set(w2.astype(jnp.float32))
              .astype(jnp.bfloat16))
    b2_pad = (jnp.full((1, C_PAD), NEG_BIG, jnp.float32)
              .at[0, :C].set(b2.astype(jnp.float32)))
    return w1_bf, b1_2d, w2_pad, b2_pad


def class_classifier_forward(feature, params, *, tb=1024, return_padded=False,
                             out_dtype=jnp.float32):
    """feature: (B, 2048); params: output of prepare_class_classifier_params.

    Returns (B, 10) log-probabilities (or the padded (B, 128) slab if
    return_padded=True, letting the consumer index the 10 real columns and skip the
    slice copy). If B is not a multiple of the chosen tile, the final partial tile's
    out-of-range rows are computed on unspecified data and their stores dropped; valid
    rows are unaffected.
    """
    w1_bf, b1_2d, w2_pad, b2_pad = params
    B, d_in = feature.shape
    assert d_in == D_IN

    TB = _choose_batch_tile(B, tb)
    grid = (pl.cdiv(B, TB),)

    cost = pl.CostEstimate(
        flops=2 * B * D_IN * HID + 2 * B * HID * C_PAD,
        transcendentals=B * (C_PAD + 1),
        bytes_accessed=(B * D_IN * 4                      # f32 x stream
                        + D_IN * HID * 2 + HID * 4        # W1 bf16 + b1 f32
                        + HID * C_PAD * 2 + C_PAD * 4     # W2 bf16 + b2 f32
                        + B * C_PAD * jnp.dtype(out_dtype).itemsize),
    )

    # Resident operands: block index never changes, so a single buffer suffices
    # (frees ~2 MiB of VMEM vs. the default double buffer for W1 alone).
    resident = dict(pipeline_mode=pl.Buffered(1))

    out_pad = pl.pallas_call(
        _class_classifier_kernel,
        out_shape=jax.ShapeDtypeStruct((B, C_PAD), out_dtype),
        grid=grid,
        in_specs=[
            pl.BlockSpec((TB, D_IN), lambda i: (i, 0)),               # x streams/tile
            pl.BlockSpec((D_IN, HID), lambda i: (0, 0), **resident),  # W1 resident
            pl.BlockSpec((1, HID), lambda i: (0, 0), **resident),     # b1 resident
            pl.BlockSpec((HID, C_PAD), lambda i: (0, 0), **resident), # W2 resident
            pl.BlockSpec((1, C_PAD), lambda i: (0, 0), **resident),   # b2 resident
        ],
        out_specs=pl.BlockSpec((TB, C_PAD), lambda i: (i, 0)),
        compiler_params=pltpu.CompilerParams(
            dimension_semantics=("parallel",),
            vmem_limit_bytes=64 * 1024 * 1024,   # TB=1024 footprint ~25 MiB, headroom
        ),
        cost_estimate=cost,
    )(feature.astype(jnp.float32), w1_bf, b1_2d, w2_pad, b2_pad)

    if return_padded:
        return out_pad
    return out_pad[:, :C]


def _init_params(key):
    """Deterministic init matching the module's shapes (PyTorch-default-style uniform)."""
    k1, k2, k3, k4 = jax.random.split(key, 4)
    bound1 = 1.0 / jnp.sqrt(D_IN)
    bound2 = 1.0 / jnp.sqrt(HID)
    w1 = jax.random.uniform(k1, (D_IN, HID), jnp.float32, -bound1, bound1)
    b1 = jax.random.uniform(k2, (HID,), jnp.float32, -bound1, bound1)
    w2 = jax.random.uniform(k3, (HID, C), jnp.float32, -bound2, bound2)
    b2 = jax.random.uniform(k4, (C,), jnp.float32, -bound2, bound2)
    return w1, b1, w2, b2


def _reference_f32(feature, w1, b1, w2, b2):
    h = jnp.maximum(feature @ w1 + b1, 0.0)
    logits = h @ w2 + b2
    return jax.nn.log_softmax(logits, axis=1)


def _reference_bf16(feature, w1, b1, w2, b2):
    """Mirrors the kernel's bf16-operand / f32-accumulate arithmetic."""
    x = feature.astype(jnp.bfloat16)
    h = jnp.dot(x, w1.astype(jnp.bfloat16), preferred_element_type=jnp.float32) + b1
    h = jnp.maximum(h, 0.0)
    logits = jnp.dot(h.astype(jnp.bfloat16), w2.astype(jnp.bfloat16),
                     preferred_element_type=jnp.float32) + b2
    return jax.nn.log_softmax(logits, axis=1)


if __name__ == "__main__":
    key = jax.random.PRNGKey(0)
    k_param, k_x = jax.random.split(key)

    w1, b1, w2, b2 = _init_params(k_param)
    params = prepare_class_classifier_params(w1, b1, w2, b2)   # one-time packing

    B = 8  # small batch; feature dim fixed at 2048 by the module
    feature = jax.random.normal(k_x, (B, D_IN), jnp.float32)

    out = class_classifier_forward(feature, params)
    out = jax.block_until_ready(out)

    assert out.shape == (B, C)
    assert bool(jnp.all(jnp.isfinite(out)))

    # Tight check vs. a reference using identical bf16/f32 mixed precision.
    ref_bf = _reference_bf16(feature, w1, b1, w2, b2)
    assert jnp.allclose(out, ref_bf, atol=2e-3, rtol=2e-3)

    # Loose check vs. the full-f32 PyTorch-equivalent math (bf16 weight quantization
    # error only).
    ref_f32 = _reference_f32(feature, w1, b1, w2, b2)
    assert jnp.allclose(out, ref_f32, atol=5e-2, rtol=5e-2)

    print("KERNEL_OK")
</pallas_src>

<mosaic_0001>
module attributes {stable_mosaic.version = 11 : i64} {
  func.func @_class_classifier_kernel(%arg0: i32, %arg1: memref<8x2048xf32, #tpu.memory_space<vmem>>, %arg2: memref<2048x512xbf16, #tpu.memory_space<vmem>>, %arg3: memref<1x512xf32, #tpu.memory_space<vmem>>, %arg4: memref<512x128xbf16, #tpu.memory_space<vmem>>, %arg5: memref<1x128xf32, #tpu.memory_space<vmem>>, %arg6: memref<8x128xf32, #tpu.memory_space<vmem>>) attributes {dimension_semantics = [#tpu.dimension_semantics<parallel>], iteration_bounds = array<i64: 1>, scalar_prefetch = 0 : i64, scratch_operands = 0 : i64, tpu.core_type = #tpu.core_type<tc>, window_params = [{transform_indices = @transform_0, window_bounds = array<i64: 8, 2048>}, {pipeline_mode = #tpu.pipeline_mode<synchronous>, transform_indices = @transform_1, window_bounds = array<i64: 2048, 512>}, {pipeline_mode = #tpu.pipeline_mode<synchronous>, transform_indices = @transform_2, window_bounds = array<i64: 1, 512>}, {pipeline_mode = #tpu.pipeline_mode<synchronous>, transform_indices = @transform_3, window_bounds = array<i64: 512, 128>}, {pipeline_mode = #tpu.pipeline_mode<synchronous>, transform_indices = @transform_4, window_bounds = array<i64: 1, 128>}, {transform_indices = @transform_5, window_bounds = array<i64: 8, 128>}]} {
    %c0 = arith.constant 0 : index
    %c0_0 = arith.constant 0 : index
    %0 = vector.load %arg1[%c0, %c0_0] : memref<8x2048xf32, #tpu.memory_space<vmem>>, vector<8x2048xf32>
    %1 = arith.truncf %0 : vector<8x2048xf32> to vector<8x2048xbf16>
    %c0_1 = arith.constant 0 : index
    %c0_2 = arith.constant 0 : index
    %2 = vector.load %arg2[%c0_1, %c0_2] : memref<2048x512xbf16, #tpu.memory_space<vmem>>, vector<2048x512xbf16>
    %cst = arith.constant dense<0.000000e+00> : vector<8x512xf32>
    %3 = tpu.matmul %1, %2, %cst {dimension_numbers = #tpu.dot_dimension_numbers<[1], [0], [0], [1], [0, 0, 1, 1], [], []>} : vector<8x2048xbf16>, vector<2048x512xbf16>, vector<8x512xf32> -> vector<8x512xf32>
    %c0_3 = arith.constant 0 : index
    %c0_4 = arith.constant 0 : index
    %4 = vector.load %arg3[%c0_3, %c0_4] : memref<1x512xf32, #tpu.memory_space<vmem>>, vector<1x512xf32>
    %5 = vector.broadcast %4 : vector<1x512xf32> to vector<8x512xf32>
    %6 = arith.addf %3, %5 : vector<8x512xf32>
    %cst_5 = arith.constant 0.000000e+00 : f32
    %7 = vector.broadcast %cst_5 : f32 to vector<8x512xf32>
    %8 = arith.maximumf %6, %7 : vector<8x512xf32>
    %9 = arith.truncf %8 : vector<8x512xf32> to vector<8x512xbf16>
    %c0_6 = arith.constant 0 : index
    %c0_7 = arith.constant 0 : index
    %10 = vector.load %arg4[%c0_6, %c0_7] : memref<512x128xbf16, #tpu.memory_space<vmem>>, vector<512x128xbf16>
    %cst_8 = arith.constant dense<0.000000e+00> : vector<8x128xf32>
    %11 = tpu.matmul %9, %10, %cst_8 {dimension_numbers = #tpu.dot_dimension_numbers<[1], [0], [0], [1], [0, 0, 1, 1], [], []>} : vector<8x512xbf16>, vector<512x128xbf16>, vector<8x128xf32> -> vector<8x128xf32>
    %c0_9 = arith.constant 0 : index
    %c0_10 = arith.constant 0 : index
    %12 = vector.load %arg5[%c0_9, %c0_10] : memref<1x128xf32, #tpu.memory_space<vmem>>, vector<1x128xf32>
    %13 = vector.broadcast %12 : vector<1x128xf32> to vector<8x128xf32>
    %14 = arith.addf %11, %13 : vector<8x128xf32>
    %cst_11 = arith.constant dense<0xFF800000> : vector<8xf32>
    %15 = vector.multi_reduction <maximumf>, %14, %cst_11 [1] : vector<8x128xf32> to vector<8xf32>
    %16 = vector.shape_cast %15 : vector<8xf32> to vector<8x1xf32>
    %17 = vector.broadcast %16 : vector<8x1xf32> to vector<8x128xf32>
    %18 = arith.subf %14, %17 : vector<8x128xf32>
    %19 = math.exp %18 : vector<8x128xf32>
    %cst_12 = arith.constant dense<0.000000e+00> : vector<8xf32>
    %20 = vector.multi_reduction <add>, %19, %cst_12 [1] : vector<8x128xf32> to vector<8xf32>
    %21 = vector.shape_cast %20 : vector<8xf32> to vector<8x1xf32>
    %22 = math.log %21 : vector<8x1xf32>
    %23 = vector.broadcast %22 : vector<8x1xf32> to vector<8x128xf32>
    %24 = arith.subf %18, %23 : vector<8x128xf32>
    %c0_13 = arith.constant 0 : index
    %c0_14 = arith.constant 0 : index
    %25 = vector.load %arg6[%c0_13, %c0_14] : memref<8x128xf32, #tpu.memory_space<vmem>>, vector<8x128xf32>
    tpu.vector_store %arg6[%c0_13, %c0_14], %24 {strides = array<i32>} : memref<8x128xf32, #tpu.memory_space<vmem>>, vector<8x128xf32>,
    return
  }
  func.func @transform_0(%arg0: i32) -> (i32, i32) {
    %c0_i32 = arith.constant 0 : i32
    %c0_i32_0 = arith.constant 0 : i32
    return %arg0, %c0_i32 : i32, i32
  }
  func.func @transform_1(%arg0: i32) -> (i32, i32) {
    %c0_i32 = arith.constant 0 : i32
    %c0_i32_0 = arith.constant 0 : i32
    %c0_i32_1 = arith.constant 0 : i32
    return %c0_i32, %c0_i32_0 : i32, i32
  }
  func.func @transform_2(%arg0: i32) -> (i32, i32) {
    %c0_i32 = arith.constant 0 : i32
    %c0_i32_0 = arith.constant 0 : i32
    %c0_i32_1 = arith.constant 0 : i32
    return %c0_i32, %c0_i32_0 : i32, i32
  }
  func.func @transform_3(%arg0: i32) -> (i32, i32) {
    %c0_i32 = arith.constant 0 : i32
    %c0_i32_0 = arith.constant 0 : i32
    %c0_i32_1 = arith.constant 0 : i32
    return %c0_i32, %c0_i32_0 : i32, i32
  }
  func.func @transform_4(%arg0: i32) -> (i32, i32) {
    %c0_i32 = arith.constant 0 : i32
    %c0_i32_0 = arith.constant 0 : i32
    %c0_i32_1 = arith.constant 0 : i32
    return %c0_i32, %c0_i32_0 : i32, i32
  }
  func.func @transform_5(%arg0: i32) -> (i32, i32) {
    %c0_i32 = arith.constant 0 : i32
    %c0_i32_0 = arith.constant 0 : i32
    return %arg0, %c0_i32 : i32, i32
  }
}

</mosaic_0001>

<llo_original>
// kernel: tpu_custom_call.1
$region0: #{tpu_custom_call.1}
  #allocation0 [shape = 'u32[]', space=smem, size = 0x4, offset = 0x4, fixed_abs, tag = 'smem constant byte address 0x4 - core index']
  #allocation1 [shape = 'u32[72,128]{1,0:T(1,128)}', space=vmem, size = 0x9000, scoped, tag = 'internal scratch']
  %s0 = inlined_call_operand.hbm [shape: f32[8,2048], index: 0, kind: input, shape index: {}]
  %s1 = inlined_call_operand.hbm [shape: bf16[2048,512], index: 1, kind: input, shape index: {}]
  %s2 = inlined_call_operand.hbm [shape: f32[1,512], index: 2, kind: input, shape index: {}]
  %s3 = inlined_call_operand.hbm [shape: bf16[512,128], index: 3, kind: input, shape index: {}]
  %s4 = inlined_call_operand.hbm [shape: f32[1,128], index: 4, kind: input, shape index: {}]
  %s5 = inlined_call_operand.hbm [shape: f32[8,128], index: 5, kind: output, shape index: {}]
  %s6 = sld [smem:[#allocation0]]
  $region50: #{tpu_custom_call.1} parent=0
    _
  %s8 = ssub.s32 1, %s6
  %s9 = scalar_select 0, %s8, %s6
  $region1: #{tpu_custom_call.1} parent=0
    #allocation2 [shape = 'u8[65536]{0}', space=vmem, size = 0x10000, scoped, tag = 'input window, operand 0, single buffered']
    #allocation3 [shape = 's32[1]{0}', space=sflag, size = 0x4, scoped, tag = 'scoped memory for tpu_custom_call.1']
    #allocation4 [shape = 's32[1]{0}', space=sflag, size = 0x4, scoped, tag = 'scoped memory for tpu_custom_call.1']
    #allocation5 [shape = 'u8[2097152]{0}', space=vmem, size = 0x200000, scoped, tag = 'input window, operand 1, single buffered']
    #allocation6 [shape = 's32[1]{0}', space=sflag, size = 0x4, scoped, tag = 'scoped memory for tpu_custom_call.1']
    #allocation7 [shape = 'u8[2048]{0}', space=vmem, size = 0x800, scoped, tag = 'input window, operand 2, single buffered']
    #allocation8 [shape = 'u8[131072]{0}', space=vmem, size = 0x20000, scoped, tag = 'input window, operand 3, single buffered']
    #allocation9 [shape = 's32[1]{0}', space=sflag, size = 0x4, scoped, tag = 'scoped memory for tpu_custom_call.1']
    #allocation10 [shape = 'u8[512]{0}', space=vmem, size = 0x400, scoped, tag = 'input window, operand 4, single buffered']
    #allocation11 [shape = 'u8[4096]{0}', space=vmem, size = 0x1000, scoped, tag = 'output window, operand 0, single buffered']
    %10 = vsyncpa [#allocation3], 0
    %11 = vsyncpa [#allocation6], 0
    %12 = vsyncpa [#allocation9], 0
    %13 = vsyncpa [#allocation4], 0
    // Predicated region
    $region2: #{tpu_custom_call.1} parent=1 // pred_check
      _
    $region3: #{tpu_custom_call.1} parent=1 // pred_check_branch
      %15 = sbr.rel (0) target = $region5
    $region4: #{tpu_custom_call.1} parent=1 // pred_region
      %17 = vsyncadd [#allocation3], 0
      %s19 = sshll.u32 %s0, 4
      %s20 = int_to_ptr.hbm [resolvable:$true] %s19
      %s21 = sshll.u32 [#allocation2], 4
      %s22 = int_to_ptr.vmem [resolvable:$true] %s21
      %24 = dma.hbm_to_vmem [thread:$0]  %s20, 2048, %s22, [#allocation3]
    $region5: #{tpu_custom_call.1} parent=1 // pred_fallthru
      _
    // Predicated region
    $region6: #{tpu_custom_call.1} parent=1 // pred_check
      _
    $region7: #{tpu_custom_call.1} parent=1 // pred_check_branch
      %26 = sbr.rel (0) target = $region9
    $region8: #{tpu_custom_call.1} parent=1 // pred_region
      %28 = vsyncadd [#allocation6], 0
      %s29 = sshll.u32 %s1, 4
      %s30 = int_to_ptr.hbm [resolvable:$true] %s29
      %s31 = sshll.u32 [#allocation5], 4
      %s32 = int_to_ptr.vmem [resolvable:$true] %s31
      %37 = dma.hbm_to_vmem [thread:$0]  %s30, 65536, %s32, [#allocation6], 256, 256, 16
    $region9: #{tpu_custom_call.1} parent=1 // pred_fallthru
      _
    // Predicated region
    $region10: #{tpu_custom_call.1} parent=1 // pred_check
      _
    $region11: #{tpu_custom_call.1} parent=1 // pred_check_branch
      %39 = sbr.rel (0) target = $region13
    $region12: #{tpu_custom_call.1} parent=1 // pred_region
      %41 = vsyncadd [#allocation6], 0
      %s43 = sshll.u32 %s2, 4
      %s44 = int_to_ptr.hbm [resolvable:$true] %s43
      %s45 = sshll.u32 [#allocation7], 4
      %s46 = int_to_ptr.vmem [resolvable:$true] %s45
      %48 = dma.hbm_to_vmem [thread:$0]  %s44, 64, %s46, [#allocation6]
    $region13: #{tpu_custom_call.1} parent=1 // pred_fallthru
      _
    // Predicated region
    $region14: #{tpu_custom_call.1} parent=1 // pred_check
      _
    $region15: #{tpu_custom_call.1} parent=1 // pred_check_branch
      %50 = sbr.rel (0) target = $region17
    $region16: #{tpu_custom_call.1} parent=1 // pred_region
      %52 = vsyncadd [#allocation9], 0
      %s53 = sshll.u32 %s3, 4
      %s54 = int_to_ptr.hbm [resolvable:$true] %s53
      %s55 = sshll.u32 [#allocation8], 4
      %s56 = int_to_ptr.vmem [resolvable:$true] %s55
      %61 = dma.hbm_to_vmem [thread:$0]  %s54, 4096, %s56, [#allocation9], 64, 64, 4
    $region17: #{tpu_custom_call.1} parent=1 // pred_fallthru
      _
    // Predicated region
    $region18: #{tpu_custom_call.1} parent=1 // pred_check
      _
    $region19: #{tpu_custom_call.1} parent=1 // pred_check_branch
      %63 = sbr.rel (0) target = $region21
    $region20: #{tpu_custom_call.1} parent=1 // pred_region
      %65 = vsyncadd [#allocation9], 0
      %s67 = sshll.u32 %s4, 4
      %s68 = int_to_ptr.hbm [resolvable:$true] %s67
      %s69 = sshll.u32 [#allocation10], 4
      %s70 = int_to_ptr.vmem [resolvable:$true] %s69
      %72 = dma.hbm_to_vmem [thread:$0]  %s68, 16, %s70, [#allocation9]
    $region21: #{tpu_custom_call.1} parent=1 // pred_fallthru
      _
    // Predicated region
    $region22: #{tpu_custom_call.1} parent=1 // pred_check
      _
    $region23: #{tpu_custom_call.1} parent=1 // pred_check_branch
      %74 = sbr.rel (0) target = $region25
    $region24: #{tpu_custom_call.1} parent=1 // pred_region
      %76 = dma.done [#allocation3], 2048
    $region25: #{tpu_custom_call.1} parent=1 // pred_fallthru
      _
    // Predicated region
    $region26: #{tpu_custom_call.1} parent=1 // pred_check
      _
    $region27: #{tpu_custom_call.1} parent=1 // pred_check_branch
      %78 = sbr.rel (0) target = $region29
    $region28: #{tpu_custom_call.1} parent=1 // pred_region
      %80 = dma.done [#allocation6], 65536
    $region29: #{tpu_custom_call.1} parent=1 // pred_fallthru
      _
    // Predicated region
    $region30: #{tpu_custom_call.1} parent=1 // pred_check
      _
    $region31: #{tpu_custom_call.1} parent=1 // pred_check_branch
      %82 = sbr.rel (0) target = $region33
    $region32: #{tpu_custom_call.1} parent=1 // pred_region
      %84 = dma.done [#allocation6], 64
    $region33: #{tpu_custom_call.1} parent=1 // pred_fallthru
      _
    // Predicated region
    $region34: #{tpu_custom_call.1} parent=1 // pred_check
      _
    $region35: #{tpu_custom_call.1} parent=1 // pred_check_branch
      %86 = sbr.rel (0) target = $region37
    $region36: #{tpu_custom_call.1} parent=1 // pred_region
      %88 = dma.done [#allocation9], 4096
    $region37: #{tpu_custom_call.1} parent=1 // pred_fallthru
      _
    // Predicated region
    $region38: #{tpu_custom_call.1} parent=1 // pred_check
      _
    $region39: #{tpu_custom_call.1} parent=1 // pred_check_branch
      %90 = sbr.rel (0) target = $region41
    $region40: #{tpu_custom_call.1} parent=1 // pred_region
      %92 = dma.done [#allocation9], 16
    $region41: #{tpu_custom_call.1} parent=1 // pred_fallthru
      _
    %v93 = vld [vmem:[#allocation2] sm:$0xff]
    %v94 = vld [vmem:[#allocation2 + $0x8] sm:$0xff]
    %v95 = vld [vmem:[#allocation2 + $0x10] sm:$0xff]
    %v96 = vld [vmem:[#allocation2 + $0x18] sm:$0xff]
    %v97 = vld [vmem:[#allocation2 + $0x20] sm:$0xff]
    %v98 = vld [vmem:[#allocation2 + $0x28] sm:$0xff]
    %v99 = vld [vmem:[#allocation2 + $0x30] sm:$0xff]
    %v100 = vld [vmem:[#allocation2 + $0x38] sm:$0xff]
    %v101 = vld [vmem:[#allocation2 + $0x40] sm:$0xff]
    %v102 = vld [vmem:[#allocation2 + $0x48] sm:$0xff]
    %v103 = vld [vmem:[#allocation2 + $0x50] sm:$0xff]
    %v104 = vld [vmem:[#allocation2 + $0x58] sm:$0xff]
    %v105 = vld [vmem:[#allocation2 + $0x60] sm:$0xff]
    %v106 = vld [vmem:[#allocation2 + $0x68] sm:$0xff]
    %v107 = vld [vmem:[#allocation2 + $0x70] sm:$0xff]
    %v108 = vld [vmem:[#allocation2 + $0x78] sm:$0xff]
    %v109 = vpack.c.bf16 %v93, %v93
    %v110 = vpack.c.bf16 %v94, %v94
    %v111 = vpack.c.bf16 %v95, %v95
    %v112 = vpack.c.bf16 %v96, %v96
    %v113 = vpack.c.bf16 %v97, %v97
    %v114 = vpack.c.bf16 %v98, %v98
    %v115 = vpack.c.bf16 %v99, %v99
    %v116 = vpack.c.bf16 %v100, %v100
    %v117 = vpack.c.bf16 %v101, %v101
    %v118 = vpack.c.bf16 %v102, %v102
    %v119 = vpack.c.bf16 %v103, %v103
    %v120 = vpack.c.bf16 %v104, %v104
    %v121 = vpack.c.bf16 %v105, %v105
    %v122 = vpack.c.bf16 %v106, %v106
    %v123 = vpack.c.bf16 %v107, %v107
    %v124 = vpack.c.bf16 %v108, %v108
    %v125 = vld [vmem:[#allocation5] sm:$0xff]
    %v126 = vld [vmem:[#allocation5 + $0x8] sm:$0xff]
    %v127 = vld [vmem:[#allocation5 + $0x10] sm:$0xff]
    %v128 = vld [vmem:[#allocation5 + $0x18] sm:$0xff]
    %v129 = vld [vmem:[#allocation5 + $0x20] sm:$0xff]
    %v130 = vld [vmem:[#allocation5 + $0x28] sm:$0xff]
    %v131 = vld [vmem:[#allocation5 + $0x30] sm:$0xff]
    %v132 = vld [vmem:[#allocation5 + $0x38] sm:$0xff]
    %v133 = vld [vmem:[#allocation5 + $0x40] sm:$0xff]
    %v134 = vld [vmem:[#allocation5 + $0x48] sm:$0xff]
    %v135 = vld [vmem:[#allocation5 + $0x50] sm:$0xff]
    %v136 = vld [vmem:[#allocation5 + $0x58] sm:$0xff]
    %v137 = vld [vmem:[#allocation5 + $0x60] sm:$0xff]
    %v138 = vld [vmem:[#allocation5 + $0x68] sm:$0xff]
    %v139 = vld [vmem:[#allocation5 + $0x70] sm:$0xff]
    %v140 = vld [vmem:[#allocation5 + $0x78] sm:$0xff]
    %v141 = vld [vmem:[#allocation5 + $0x80] sm:$0xff]
    %v142 = vld [vmem:[#allocation5 + $0x88] sm:$0xff]
    %v143 = vld [vmem:[#allocation5 + $0x90] sm:$0xff]
    %v144 = vld [vmem:[#allocation5 + $0x98] sm:$0xff]
    %v145 = vld [vmem:[#allocation5 + $0xa0] sm:$0xff]
    %v146 = vld [vmem:[#allocation5 + $0xa8] sm:$0xff]
    %v147 = vld [vmem:[#allocation5 + $0xb0] sm:$0xff]
    %v148 = vld [vmem:[#allocation5 + $0xb8] sm:$0xff]
    %v149 = vld [vmem:[#allocation5 + $0xc0] sm:$0xff]
    %v150 = vld [vmem:[#allocation5 + $0xc8] sm:$0xff]
    %v151 = vld [vmem:[#allocation5 + $0xd0] sm:$0xff]
    %v152 = vld [vmem:[#allocation5 + $0xd8] sm:$0xff]
    %v153 = vld [vmem:[#allocation5 + $0xe0] sm:$0xff]
    %v154 = vld [vmem:[#allocation5 + $0xe8] sm:$0xff]
    %v155 = vld [vmem:[#allocation5 + $0xf0] sm:$0xff]
    %v156 = vld [vmem:[#allocation5 + $0xf8] sm:$0xff]
    %v157 = vld [vmem:[#allocation5 + $0x100] sm:$0xff]
    %v158 = vld [vmem:[#allocation5 + $0x108] sm:$0xff]
    %v159 = vld [vmem:[#allocation5 + $0x110] sm:$0xff]
    %v160 = vld [vmem:[#allocation5 + $0x118] sm:$0xff]
    %v161 = vld [vmem:[#allocation5 + $0x120] sm:$0xff]
    %v162 = vld [vmem:[#allocation5 + $0x128] sm:$0xff]
    %v163 = vld [vmem:[#allocation5 + $0x130] sm:$0xff]
    %v164 = vld [vmem:[#allocation5 + $0x138] sm:$0xff]
    %v165 = vld [vmem:[#allocation5 + $0x140] sm:$0xff]
    %v166 = vld [vmem:[#allocation5 + $0x148] sm:$0xff]
    %v167 = vld [vmem:[#allocation5 + $0x150] sm:$0xff]
    %v168 = vld [vmem:[#allocation5 + $0x158] sm:$0xff]
    %v169 = vld [vmem:[#allocation5 + $0x160] sm:$0xff]
    %v170 = vld [vmem:[#allocation5 + $0x168] sm:$0xff]
    %v171 = vld [vmem:[#allocation5 + $0x170] sm:$0xff]
    %v172 = vld [vmem:[#allocation5 + $0x178] sm:$0xff]
    %v173 = vld [vmem:[#allocation5 + $0x180] sm:$0xff]
    %v174 = vld [vmem:[#allocation5 + $0x188] sm:$0xff]
    %v175 = vld [vmem:[#allocation5 + $0x190] sm:$0xff]
    %v176 = vld [vmem:[#allocation5 + $0x198] sm:$0xff]
    %v177 = vld [vmem:[#allocation5 + $0x1a0] sm:$0xff]
    %v178 = vld [vmem:[#allocation5 + $0x1a8] sm:$0xff]
    %v179 = vld [vmem:[#allocation5 + $0x1b0] sm:$0xff]
    %v180 = vld [vmem:[#allocation5 + $0x1b8] sm:$0xff]
    %v181 = vld [vmem:[#allocation5 + $0x1c0] sm:$0xff]
    %v182 = vld [vmem:[#allocation5 + $0x1c8] sm:$0xff]
    %v183 = vld [vmem:[#allocation5 + $0x1d0] sm:$0xff]
    %v184 = vld [vmem:[#allocation5 + $0x1d8] sm:$0xff]
    %v185 = vld [vmem:[#allocation5 + $0x1e0] sm:$0xff]
    %v186 = vld [vmem:[#allocation5 + $0x1e8] sm:$0xff]
    %v187 = vld [vmem:[#allocation5 + $0x1f0] sm:$0xff]
    %v188 = vld [vmem:[#allocation5 + $0x1f8] sm:$0xff]
    %v189 = vld [vmem:[#allocation5 + $0x200] sm:$0xff]
    %v190 = vld [vmem:[#allocation5 + $0x208] sm:$0xff]
    %v191 = vld [vmem:[#allocation5 + $0x210] sm:$0xff]
    %v192 = vld [vmem:[#allocation5 + $0x218] sm:$0xff]
    %v193 = vld [vmem:[#allocation5 + $0x220] sm:$0xff]
    %v194 = vld [vmem:[#allocation5 + $0x228] sm:$0xff]
    %v195 = vld [vmem:[#allocation5 + $0x230] sm:$0xff]
    %v196 = vld [vmem:[#allocation5 + $0x238] sm:$0xff]
    %v197 = vld [vmem:[#allocation5 + $0x240] sm:$0xff]
    %v198 = vld [vmem:[#allocation5 + $0x248] sm:$0xff]
    %v199 = vld [vmem:[#allocation5 + $0x250] sm:$0xff]
    %v200 = vld [vmem:[#allocation5 + $0x258] sm:$0xff]
    %v201 = vld [vmem:[#allocation5 + $0x260] sm:$0xff]
    %v202 = vld [vmem:[#allocation5 + $0x268] sm:$0xff]
    %v203 = vld [vmem:[#allocation5 + $0x270] sm:$0xff]
    %v204 = vld [vmem:[#allocation5 + $0x278] sm:$0xff]
    %v205 = vld [vmem:[#allocation5 + $0x280] sm:$0xff]
    %v206 = vld [vmem:[#allocation5 + $0x288] sm:$0xff]
    %v207 = vld [vmem:[#allocation5 + $0x290] sm:$0xff]
    %v208 = vld [vmem:[#allocation5 + $0x298] sm:$0xff]
    %v209 = vld [vmem:[#allocation5 + $0x2a0] sm:$0xff]
    %v210 = vld [vmem:[#allocation5 + $0x2a8] sm:$0xff]
    %v211 = vld [vmem:[#allocation5 + $0x2b0] sm:$0xff]
    %v212 = vld [vmem:[#allocation5 + $0x2b8] sm:$0xff]
    %v213 = vld [vmem:[#allocation5 + $0x2c0] sm:$0xff]
    %v214 = vld [vmem:[#allocation5 + $0x2c8] sm:$0xff]
    %v215 = vld [vmem:[#allocation5 + $0x2d0] sm:$0xff]
    %v216 = vld [vmem:[#allocation5 + $0x2d8] sm:$0xff]
    %v217 = vld [vmem:[#allocation5 + $0x2e0] sm:$0xff]
    %v218 = vld [vmem:[#allocation5 + $0x2e8] sm:$0xff]
    %v219 = vld [vmem:[#allocation5 + $0x2f0] sm:$0xff]
    %v220 = vld [vmem:[#allocation5 + $0x2f8] sm:$0xff]
    %v221 = vld [vmem:[#allocation5 + $0x300] sm:$0xff]
    %v222 = vld [vmem:[#allocation5 + $0x308] sm:$0xff]
    %v223 = vld [vmem:[#allocation5 + $0x310] sm:$0xff]
    %v224 = vld [vmem:[#allocation5 + $0x318] sm:$0xff]
    %v225 = vld [vmem:[#allocation5 + $0x320] sm:$0xff]
    %v226 = vld [vmem:[#allocation5 + $0x328] sm:$0xff]
    %v227 = vld [vmem:[#allocation5 + $0x330] sm:$0xff]
    %v228 = vld [vmem:[#allocation5 + $0x338] sm:$0xff]
    %v229 = vld [vmem:[#allocation5 + $0x340] sm:$0xff]
    %v230 = vld [vmem:[#allocation5 + $0x348] sm:$0xff]
    %v231 = vld [vmem:[#allocation5 + $0x350] sm:$0xff]
    %v232 = vld [vmem:[#allocation5 + $0x358] sm:$0xff]
    %v233 = vld [vmem:[#allocation5 + $0x360] sm:$0xff]
    %v234 = vld [vmem:[#allocation5 + $0x368] sm:$0xff]
    %v235 = vld [vmem:[#allocation5 + $0x370] sm:$0xff]
    %v236 = vld [vmem:[#allocation5 + $0x378] sm:$0xff]
    %v237 = vld [vmem:[#allocation5 + $0x380] sm:$0xff]
    %v238 = vld [vmem:[#allocation5 + $0x388] sm:$0xff]
    %v239 = vld [vmem:[#allocation5 + $0x390] sm:$0xff]
    %v240 = vld [vmem:[#allocation5 + $0x398] sm:$0xff]
    %v241 = vld [vmem:[#allocation5 + $0x3a0] sm:$0xff]
    %v242 = vld [vmem:[#allocation5 + $0x3a8] sm:$0xff]
    %v243 = vld [vmem:[#allocation5 + $0x3b0] sm:$0xff]
    %v244 = vld [vmem:[#allocation5 + $0x3b8] sm:$0xff]
    %v245 = vld [vmem:[#allocation5 + $0x3c0] sm:$0xff]
    %v246 = vld [vmem:[#allocation5 + $0x3c8] sm:$0xff]
    %v247 = vld [vmem:[#allocation5 + $0x3d0] sm:$0xff]
    %v248 = vld [vmem:[#allocation5 + $0x3d8] sm:$0xff]
    %v249 = vld [vmem:[#allocation5 + $0x3e0] sm:$0xff]
    %v250 = vld [vmem:[#allocation5 + $0x3e8] sm:$0xff]
    %v251 = vld [vmem:[#allocation5 + $0x3f0] sm:$0xff]
    %v252 = vld [vmem:[#allocation5 + $0x3f8] sm:$0xff]
    %v253 = vld [vmem:[#allocation5 + $0x400] sm:$0xff]
    %v254 = vld [vmem:[#allocation5 + $0x408] sm:$0xff]
    %v255 = vld [vmem:[#allocation5 + $0x410] sm:$0xff]
    %v256 = vld [vmem:[#allocation5 + $0x418] sm:$0xff]
    %v257 = vld [vmem:[#allocation5 + $0x420] sm:$0xff]
    %v258 = vld [vmem:[#allocation5 + $0x428] sm:$0xff]
    %v259 = vld [vmem:[#allocation5 + $0x430] sm:$0xff]
    %v260 = vld [vmem:[#allocation5 + $0x438] sm:$0xff]
    %v261 = vld [vmem:[#allocation5 + $0x440] sm:$0xff]
    %v262 = vld [vmem:[#allocation5 + $0x448] sm:$0xff]
    %v263 = vld [vmem:[#allocation5 + $0x450] sm:$0xff]
    %v264 = vld [vmem:[#allocation5 + $0x458] sm:$0xff]
    %v265 = vld [vmem:[#allocation5 + $0x460] sm:$0xff]
    %v266 = vld [vmem:[#allocation5 + $0x468] sm:$0xff]
    %v267 = vld [vmem:[#allocation5 + $0x470] sm:$0xff]
    %v268 = vld [vmem:[#allocation5 + $0x478] sm:$0xff]
    %v269 = vld [vmem:[#allocation5 + $0x480] sm:$0xff]
    %v270 = vld [vmem:[#allocation5 + $0x488] sm:$0xff]
    %v271 = vld [vmem:[#allocation5 + $0x490] sm:$0xff]
    %v272 = vld [vmem:[#allocation5 + $0x498] sm:$0xff]
    %v273 = vld [vmem:[#allocation5 + $0x4a0] sm:$0xff]
    %v274 = vld [vmem:[#allocation5 + $0x4a8] sm:$0xff]
    %v275 = vld [vmem:[#allocation5 + $0x4b0] sm:$0xff]
    %v276 = vld [vmem:[#allocation5 + $0x4b8] sm:$0xff]
    %v277 = vld [vmem:[#allocation5 + $0x4c0] sm:$0xff]
    %v278 = vld [vmem:[#allocation5 + $0x4c8] sm:$0xff]
    %v279 = vld [vmem:[#allocation5 + $0x4d0] sm:$0xff]
    %v280 = vld [vmem:[#allocation5 + $0x4d8] sm:$0xff]
    %v281 = vld [vmem:[#allocation5 + $0x4e0] sm:$0xff]
    %v282 = vld [vmem:[#allocation5 + $0x4e8] sm:$0xff]
    %v283 = vld [vmem:[#allocation5 + $0x4f0] sm:$0xff]
    %v284 = vld [vmem:[#allocation5 + $0x4f8] sm:$0xff]
    %v285 = vld [vmem:[#allocation5 + $0x500] sm:$0xff]
    %v286 = vld [vmem:[#allocation5 + $0x508] sm:$0xff]
    %v287 = vld [vmem:[#allocation5 + $0x510] sm:$0xff]
    %v288 = vld [vmem:[#allocation5 + $0x518] sm:$0xff]
    %v289 = vld [vmem:[#allocation5 + $0x520] sm:$0xff]
    %v290 = vld [vmem:[#allocation5 + $0x528] sm:$0xff]
    %v291 = vld [vmem:[#allocation5 + $0x530] sm:$0xff]
    %v292 = vld [vmem:[#allocation5 + $0x538] sm:$0xff]
    %v293 = vld [vmem:[#allocation5 + $0x540] sm:$0xff]
    %v294 = vld [vmem:[#allocation5 + $0x548] sm:$0xff]
    %v295 = vld [vmem:[#allocation5 + $0x550] sm:$0xff]
    %v296 = vld [vmem:[#allocation5 + $0x558] sm:$0xff]
    %v297 = vld [vmem:[#allocation5 + $0x560] sm:$0xff]
    %v298 = vld [vmem:[#allocation5 + $0x568] sm:$0xff]
    %v299 = vld [vmem:[#allocation5 + $0x570] sm:$0xff]
    %v300 = vld [vmem:[#allocation5 + $0x578] sm:$0xff]
    %v301 = vld [vmem:[#allocation5 + $0x580] sm:$0xff]
    %v302 = vld [vmem:[#allocation5 + $0x588] sm:$0xff]
    %v303 = vld [vmem:[#allocation5 + $0x590] sm:$0xff]
    %v304 = vld [vmem:[#allocation5 + $0x598] sm:$0xff]
    %v305 = vld [vmem:[#allocation5 + $0x5a0] sm:$0xff]
    %v306 = vld [vmem:[#allocation5 + $0x5a8] sm:$0xff]
    %v307 = vld [vmem:[#allocation5 + $0x5b0] sm:$0xff]
    %v308 = vld [vmem:[#allocation5 + $0x5b8] sm:$0xff]
    %v309 = vld [vmem:[#allocation5 + $0x5c0] sm:$0xff]
    %v310 = vld [vmem:[#allocation5 + $0x5c8] sm:$0xff]
    %v311 = vld [vmem:[#allocation5 + $0x5d0] sm:$0xff]
    %v312 = vld [vmem:[#allocation5 + $0x5d8] sm:$0xff]
    %v313 = vld [vmem:[#allocation5 + $0x5e0] sm:$0xff]
    %v314 = vld [vmem:[#allocation5 + $0x5e8] sm:$0xff]
    %v315 = vld [vmem:[#allocation5 + $0x5f0] sm:$0xff]
    %v316 = vld [vmem:[#allocation5 + $0x5f8] sm:$0xff]
    %v317 = vld [vmem:[#allocation5 + $0x600] sm:$0xff]
    %v318 = vld [vmem:[#allocation5 + $0x608] sm:$0xff]
    %v319 = vld [vmem:[#allocation5 + $0x610] sm:$0xff]
    %v320 = vld [vmem:[#allocation5 + $0x618] sm:$0xff]
    %v321 = vld [vmem:[#allocation5 + $0x620] sm:$0xff]
    %v322 = vld [vmem:[#allocation5 + $0x628] sm:$0xff]
    %v323 = vld [vmem:[#allocation5 + $0x630] sm:$0xff]
    %v324 = vld [vmem:[#allocation5 + $0x638] sm:$0xff]
    %v325 = vld [vmem:[#allocation5 + $0x640] sm:$0xff]
    %v326 = vld [vmem:[#allocation5 + $0x648] sm:$0xff]
    %v327 = vld [vmem:[#allocation5 + $0x650] sm:$0xff]
    %v328 = vld [vmem:[#allocation5 + $0x658] sm:$0xff]
    %v329 = vld [vmem:[#allocation5 + $0x660] sm:$0xff]
    %v330 = vld [vmem:[#allocation5 + $0x668] sm:$0xff]
    %v331 = vld [vmem:[#allocation5 + $0x670] sm:$0xff]
    %v332 = vld [vmem:[#allocation5 + $0x678] sm:$0xff]
    %v333 = vld [vmem:[#allocation5 + $0x680] sm:$0xff]
    %v334 = vld [vmem:[#allocation5 + $0x688] sm:$0xff]
    %v335 = vld [vmem:[#allocation5 + $0x690] sm:$0xff]
    %v336 = vld [vmem:[#allocation5 + $0x698] sm:$0xff]
    %v337 = vld [vmem:[#allocation5 + $0x6a0] sm:$0xff]
    %v338 = vld [vmem:[#allocation5 + $0x6a8] sm:$0xff]
    %v339 = vld [vmem:[#allocation5 + $0x6b0] sm:$0xff]
    %v340 = vld [vmem:[#allocation5 + $0x6b8] sm:$0xff]
    %v341 = vld [vmem:[#allocation5 + $0x6c0] sm:$0xff]
    %v342 = vld [vmem:[#allocation5 + $0x6c8] sm:$0xff]
    %v343 = vld [vmem:[#allocation5 + $0x6d0] sm:$0xff]
    %v344 = vld [vmem:[#allocation5 + $0x6d8] sm:$0xff]
    %v345 = vld [vmem:[#allocation5 + $0x6e0] sm:$0xff]
    %v346 = vld [vmem:[#allocation5 + $0x6e8] sm:$0xff]
    %v347 = vld [vmem:[#allocation5 + $0x6f0] sm:$0xff]
    %v348 = vld [vmem:[#allocation5 + $0x6f8] sm:$0xff]
    %v349 = vld [vmem:[#allocation5 + $0x700] sm:$0xff]
    %v350 = vld [vmem:[#allocation5 + $0x708] sm:$0xff]
    %v351 = vld [vmem:[#allocation5 + $0x710] sm:$0xff]
    %v352 = vld [vmem:[#allocation5 + $0x718] sm:$0xff]
    %v353 = vld [vmem:[#allocation5 + $0x720] sm:$0xff]
    %v354 = vld [vmem:[#allocation5 + $0x728] sm:$0xff]
    %v355 = vld [vmem:[#allocation5 + $0x730] sm:$0xff]
    %v356 = vld [vmem:[#allocation5 + $0x738] sm:$0xff]
    %v357 = vld [vmem:[#allocation5 + $0x740] sm:$0xff]
    %v358 = vld [vmem:[#allocation5 + $0x748] sm:$0xff]
    %v359 = vld [vmem:[#allocation5 + $0x750] sm:$0xff]
    %v360 = vld [vmem:[#allocation5 + $0x758] sm:$0xff]
    %v361 = vld [vmem:[#allocation5 + $0x760] sm:$0xff]
    %v362 = vld [vmem:[#allocation5 + $0x768] sm:$0xff]
    %v363 = vld [vmem:[#allocation5 + $0x770] sm:$0xff]
    %v364 = vld [vmem:[#allocation5 + $0x778] sm:$0xff]
    %v365 = vld [vmem:[#allocation5 + $0x780] sm:$0xff]
    %v366 = vld [vmem:[#allocation5 + $0x788] sm:$0xff]
    %v367 = vld [vmem:[#allocation5 + $0x790] sm:$0xff]
    %v368 = vld [vmem:[#allocation5 + $0x798] sm:$0xff]
    %v369 = vld [vmem:[#allocation5 + $0x7a0] sm:$0xff]
    %v370 = vld [vmem:[#allocation5 + $0x7a8] sm:$0xff]
    %v371 = vld [vmem:[#allocation5 + $0x7b0] sm:$0xff]
    %v372 = vld [vmem:[#allocation5 + $0x7b8] sm:$0xff]
    %v373 = vld [vmem:[#allocation5 + $0x7c0] sm:$0xff]
    %v374 = vld [vmem:[#allocation5 + $0x7c8] sm:$0xff]
    %v375 = vld [vmem:[#allocation5 + $0x7d0] sm:$0xff]
    %v376 = vld [vmem:[#allocation5 + $0x7d8] sm:$0xff]
    %v377 = vld [vmem:[#allocation5 + $0x7e0] sm:$0xff]
    %v378 = vld [vmem:[#allocation5 + $0x7e8] sm:$0xff]
    %v379 = vld [vmem:[#allocation5 + $0x7f0] sm:$0xff]
    %v380 = vld [vmem:[#allocation5 + $0x7f8] sm:$0xff]
    %v381 = vld [vmem:[#allocation5 + $0x800] sm:$0xff]
    %v382 = vld [vmem:[#allocation5 + $0x808] sm:$0xff]
    %v383 = vld [vmem:[#allocation5 + $0x810] sm:$0xff]
    %v384 = vld [vmem:[#allocation5 + $0x818] sm:$0xff]
    %v385 = vld [vmem:[#allocation5 + $0x820] sm:$0xff]
    %v386 = vld [vmem:[#allocation5 + $0x828] sm:$0xff]
    %v387 = vld [vmem:[#allocation5 + $0x830] sm:$0xff]
    %v388 = vld [vmem:[#allocation5 + $0x838] sm:$0xff]
    %v389 = vld [vmem:[#allocation5 + $0x840] sm:$0xff]
    %v390 = vld [vmem:[#allocation5 + $0x848] sm:$0xff]
    %v391 = vld [vmem:[#allocation5 + $0x850] sm:$0xff]
    %v392 = vld [vmem:[#allocation5 + $0x858] sm:$0xff]
    %v393 = vld [vmem:[#allocation5 + $0x860] sm:$0xff]
    %v394 = vld [vmem:[#allocation5 + $0x868] sm:$0xff]
    %v395 = vld [vmem:[#allocation5 + $0x870] sm:$0xff]
    %v396 = vld [vmem:[#allocation5 + $0x878] sm:$0xff]
    %v397 = vld [vmem:[#allocation5 + $0x880] sm:$0xff]
    %v398 = vld [vmem:[#allocation5 + $0x888] sm:$0xff]
    %v399 = vld [vmem:[#allocation5 + $0x890] sm:$0xff]
    %v400 = vld [vmem:[#allocation5 + $0x898] sm:$0xff]
    %v401 = vld [vmem:[#allocation5 + $0x8a0] sm:$0xff]
    %v402 = vld [vmem:[#allocation5 + $0x8a8] sm:$0xff]
    %v403 = vld [vmem:[#allocation5 + $0x8b0] sm:$0xff]
    %v404 = vld [vmem:[#allocation5 + $0x8b8] sm:$0xff]
    %v405 = vld [vmem:[#allocation5 + $0x8c0] sm:$0xff]
    %v406 = vld [vmem:[#allocation5 + $0x8c8] sm:$0xff]
    %v407 = vld [vmem:[#allocation5 + $0x8d0] sm:$0xff]
    %v408 = vld [vmem:[#allocation5 + $0x8d8] sm:$0xff]
    %v409 = vld [vmem:[#allocation5 + $0x8e0] sm:$0xff]
    %v410 = vld [vmem:[#allocation5 + $0x8e8] sm:$0xff]
    %v411 = vld [vmem:[#allocation5 + $0x8f0] sm:$0xff]
    %v412 = vld [vmem:[#allocation5 + $0x8f8] sm:$0xff]
    %v413 = vld [vmem:[#allocation5 + $0x900] sm:$0xff]
    %v414 = vld [vmem:[#allocation5 + $0x908] sm:$0xff]
    %v415 = vld [vmem:[#allocation5 + $0x910] sm:$0xff]
    %v416 = vld [vmem:[#allocation5 + $0x918] sm:$0xff]
    %v417 = vld [vmem:[#allocation5 + $0x920] sm:$0xff]
    %v418 = vld [vmem:[#allocation5 + $0x928] sm:$0xff]
    %v419 = vld [vmem:[#allocation5 + $0x930] sm:$0xff]
    %v420 = vld [vmem:[#allocation5 + $0x938] sm:$0xff]
    %v421 = vld [vmem:[#allocation5 + $0x940] sm:$0xff]
    %v422 = vld [vmem:[#allocation5 + $0x948] sm:$0xff]
    %v423 = vld [vmem:[#allocation5 + $0x950] sm:$0xff]
    %v424 = vld [vmem:[#allocation5 + $0x958] sm:$0xff]
    %v425 = vld [vmem:[#allocation5 + $0x960] sm:$0xff]
    %v426 = vld [vmem:[#allocation5 + $0x968] sm:$0xff]
    %v427 = vld [vmem:[#allocation5 + $0x970] sm:$0xff]
    %v428 = vld [vmem:[#allocation5 + $0x978] sm:$0xff]
    %v429 = vld [vmem:[#allocation5 + $0x980] sm:$0xff]
    %v430 = vld [vmem:[#allocation5 + $0x988] sm:$0xff]
    %v431 = vld [vmem:[#allocation5 + $0x990] sm:$0xff]
    %v432 = vld [vmem:[#allocation5 + $0x998] sm:$0xff]
    %v433 = vld [vmem:[#allocation5 + $0x9a0] sm:$0xff]
    %v434 = vld [vmem:[#allocation5 + $0x9a8] sm:$0xff]
    %v435 = vld [vmem:[#allocation5 + $0x9b0] sm:$0xff]
    %v436 = vld [vmem:[#allocation5 + $0x9b8] sm:$0xff]
    %v437 = vld [vmem:[#allocation5 + $0x9c0] sm:$0xff]
    %v438 = vld [vmem:[#allocation5 + $0x9c8] sm:$0xff]
    %v439 = vld [vmem:[#allocation5 + $0x9d0] sm:$0xff]
    %v440 = vld [vmem:[#allocation5 + $0x9d8] sm:$0xff]
    %v441 = vld [vmem:[#allocation5 + $0x9e0] sm:$0xff]
    %v442 = vld [vmem:[#allocation5 + $0x9e8] sm:$0xff]
    %v443 = vld [vmem:[#allocation5 + $0x9f0] sm:$0xff]
    %v444 = vld [vmem:[#allocation5 + $0x9f8] sm:$0xff]
    %v445 = vld [vmem:[#allocation5 + $0xa00] sm:$0xff]
    %v446 = vld [vmem:[#allocation5 + $0xa08] sm:$0xff]
    %v447 = vld [vmem:[#allocation5 + $0xa10] sm:$0xff]
    %v448 = vld [vmem:[#allocation5 + $0xa18] sm:$0xff]
    %v449 = vld [vmem:[#allocation5 + $0xa20] sm:$0xff]
    %v450 = vld [vmem:[#allocation5 + $0xa28] sm:$0xff]
    %v451 = vld [vmem:[#allocation5 + $0xa30] sm:$0xff]
    %v452 = vld [vmem:[#allocation5 + $0xa38] sm:$0xff]
    %v453 = vld [vmem:[#allocation5 + $0xa40] sm:$0xff]
    %v454 = vld [vmem:[#allocation5 + $0xa48] sm:$0xff]
    %v455 = vld [vmem:[#allocation5 + $0xa50] sm:$0xff]
    %v456 = vld [vmem:[#allocation5 + $0xa58] sm:$0xff]
    %v457 = vld [vmem:[#allocation5 + $0xa60] sm:$0xff]
    %v458 = vld [vmem:[#allocation5 + $0xa68] sm:$0xff]
    %v459 = vld [vmem:[#allocation5 + $0xa70] sm:$0xff]
    %v460 = vld [vmem:[#allocation5 + $0xa78] sm:$0xff]
    %v461 = vld [vmem:[#allocation5 + $0xa80] sm:$0xff]
    %v462 = vld [vmem:[#allocation5 + $0xa88] sm:$0xff]
    %v463 = vld [vmem:[#allocation5 + $0xa90] sm:$0xff]
    %v464 = vld [vmem:[#allocation5 + $0xa98] sm:$0xff]
    %v465 = vld [vmem:[#allocation5 + $0xaa0] sm:$0xff]
    %v466 = vld [vmem:[#allocation5 + $0xaa8] sm:$0xff]
    %v467 = vld [vmem:[#allocation5 + $0xab0] sm:$0xff]
    %v468 = vld [vmem:[#allocation5 + $0xab8] sm:$0xff]
    %v469 = vld [vmem:[#allocation5 + $0xac0] sm:$0xff]
    %v470 = vld [vmem:[#allocation5 + $0xac8] sm:$0xff]
    %v471 = vld [vmem:[#allocation5 + $0xad0] sm:$0xff]
    %v472 = vld [vmem:[#allocation5 + $0xad8] sm:$0xff]
    %v473 = vld [vmem:[#allocation5 + $0xae0] sm:$0xff]
    %v474 = vld [vmem:[#allocation5 + $0xae8] sm:$0xff]
    %v475 = vld [vmem:[#allocation5 + $0xaf0] sm:$0xff]
    %v476 = vld [vmem:[#allocation5 + $0xaf8] sm:$0xff]
    %v477 = vld [vmem:[#allocation5 + $0xb00] sm:$0xff]
    %v478 = vld [vmem:[#allocation5 + $0xb08] sm:$0xff]
    %v479 = vld [vmem:[#allocation5 + $0xb10] sm:$0xff]
    %v480 = vld [vmem:[#allocation5 + $0xb18] sm:$0xff]
    %v481 = vld [vmem:[#allocation5 + $0xb20] sm:$0xff]
    %v482 = vld [vmem:[#allocation5 + $0xb28] sm:$0xff]
    %v483 = vld [vmem:[#allocation5 + $0xb30] sm:$0xff]
    %v484 = vld [vmem:[#allocation5 + $0xb38] sm:$0xff]
    %v485 = vld [vmem:[#allocation5 + $0xb40] sm:$0xff]
    %v486 = vld [vmem:[#allocation5 + $0xb48] sm:$0xff]
    %v487 = vld [vmem:[#allocation5 + $0xb50] sm:$0xff]
    %v488 = vld [vmem:[#allocation5 + $0xb58] sm:$0xff]
    %v489 = vld [vmem:[#allocation5 + $0xb60] sm:$0xff]
    %v490 = vld [vmem:[#allocation5 + $0xb68] sm:$0xff]
    %v491 = vld [vmem:[#allocation5 + $0xb70] sm:$0xff]
    %v492 = vld [vmem:[#allocation5 + $0xb78] sm:$0xff]
    %v493 = vld [vmem:[#allocation5 + $0xb80] sm:$0xff]
    %v494 = vld [vmem:[#allocation5 + $0xb88] sm:$0xff]
    %v495 = vld [vmem:[#allocation5 + $0xb90] sm:$0xff]
    %v496 = vld [vmem:[#allocation5 + $0xb98] sm:$0xff]
    %v497 = vld [vmem:[#allocation5 + $0xba0] sm:$0xff]
    %v498 = vld [vmem:[#allocation5 + $0xba8] sm:$0xff]
    %v499 = vld [vmem:[#allocation5 + $0xbb0] sm:$0xff]
    %v500 = vld [vmem:[#allocation5 + $0xbb8] sm:$0xff]
    %v501 = vld [vmem:[#allocation5 + $0xbc0] sm:$0xff]
    %v502 = vld [vmem:[#allocation5 + $0xbc8] sm:$0xff]
    %v503 = vld [vmem:[#allocation5 + $0xbd0] sm:$0xff]
    %v504 = vld [vmem:[#allocation5 + $0xbd8] sm:$0xff]
    %v505 = vld [vmem:[#allocation5 + $0xbe0] sm:$0xff]
    %v506 = vld [vmem:[#allocation5 + $0xbe8] sm:$0xff]
    %v507 = vld [vmem:[#allocation5 + $0xbf0] sm:$0xff]
    %v508 = vld [vmem:[#allocation5 + $0xbf8] sm:$0xff]
    %v509 = vld [vmem:[#allocation5 + $0xc00] sm:$0xff]
    %v510 = vld [vmem:[#allocation5 + $0xc08] sm:$0xff]
    %v511 = vld [vmem:[#allocation5 + $0xc10] sm:$0xff]
    %v512 = vld [vmem:[#allocation5 + $0xc18] sm:$0xff]
    %v513 = vld [vmem:[#allocation5 + $0xc20] sm:$0xff]
    %v514 = vld [vmem:[#allocation5 + $0xc28] sm:$0xff]
    %v515 = vld [vmem:[#allocation5 + $0xc30] sm:$0xff]
    %v516 = vld [vmem:[#allocation5 + $0xc38] sm:$0xff]
    %v517 = vld [vmem:[#allocation5 + $0xc40] sm:$0xff]
    %v518 = vld [vmem:[#allocation5 + $0xc48] sm:$0xff]
    %v519 = vld [vmem:[#allocation5 + $0xc50] sm:$0xff]
    %v520 = vld [vmem:[#allocation5 + $0xc58] sm:$0xff]
    %v521 = vld [vmem:[#allocation5 + $0xc60] sm:$0xff]
    %v522 = vld [vmem:[#allocation5 + $0xc68] sm:$0xff]
    %v523 = vld [vmem:[#allocation5 + $0xc70] sm:$0xff]
    %v524 = vld [vmem:[#allocation5 + $0xc78] sm:$0xff]
    %v525 = vld [vmem:[#allocation5 + $0xc80] sm:$0xff]
    %v526 = vld [vmem:[#allocation5 + $0xc88] sm:$0xff]
    %v527 = vld [vmem:[#allocation5 + $0xc90] sm:$0xff]
    %v528 = vld [vmem:[#allocation5 + $0xc98] sm:$0xff]
    %v529 = vld [vmem:[#allocation5 + $0xca0] sm:$0xff]
    %v530 = vld [vmem:[#allocation5 + $0xca8] sm:$0xff]
    %v531 = vld [vmem:[#allocation5 + $0xcb0] sm:$0xff]
    %v532 = vld [vmem:[#allocation5 + $0xcb8] sm:$0xff]
    %v533 = vld [vmem:[#allocation5 + $0xcc0] sm:$0xff]
    %v534 = vld [vmem:[#allocation5 + $0xcc8] sm:$0xff]
    %v535 = vld [vmem:[#allocation5 + $0xcd0] sm:$0xff]
    %v536 = vld [vmem:[#allocation5 + $0xcd8] sm:$0xff]
    %v537 = vld [vmem:[#allocation5 + $0xce0] sm:$0xff]
    %v538 = vld [vmem:[#allocation5 + $0xce8] sm:$0xff]
    %v539 = vld [vmem:[#allocation5 + $0xcf0] sm:$0xff]
    %v540 = vld [vmem:[#allocation5 + $0xcf8] sm:$0xff]
    %v541 = vld [vmem:[#allocation5 + $0xd00] sm:$0xff]
    %v542 = vld [vmem:[#allocation5 + $0xd08] sm:$0xff]
    %v543 = vld [vmem:[#allocation5 + $0xd10] sm:$0xff]
    %v544 = vld [vmem:[#allocation5 + $0xd18] sm:$0xff]
    %v545 = vld [vmem:[#allocation5 + $0xd20] sm:$0xff]
    %v546 = vld [vmem:[#allocation5 + $0xd28] sm:$0xff]
    %v547 = vld [vmem:[#allocation5 + $0xd30] sm:$0xff]
    %v548 = vld [vmem:[#allocation5 + $0xd38] sm:$0xff]
    %v549 = vld [vmem:[#allocation5 + $0xd40] sm:$0xff]
    %v550 = vld [vmem:[#allocation5 + $0xd48] sm:$0xff]
    %v551 = vld [vmem:[#allocation5 + $0xd50] sm:$0xff]
    %v552 = vld [vmem:[#allocation5 + $0xd58] sm:$0xff]
    %v553 = vld [vmem:[#allocation5 + $0xd60] sm:$0xff]
    %v554 = vld [vmem:[#allocation5 + $0xd68] sm:$0xff]
    %v555 = vld [vmem:[#allocation5 + $0xd70] sm:$0xff]
    %v556 = vld [vmem:[#allocation5 + $0xd78] sm:$0xff]
    %v557 = vld [vmem:[#allocation5 + $0xd80] sm:$0xff]
    %v558 = vld [vmem:[#allocation5 + $0xd88] sm:$0xff]
    %v559 = vld [vmem:[#allocation5 + $0xd90] sm:$0xff]
    %v560 = vld [vmem:[#allocation5 + $0xd98] sm:$0xff]
    %v561 = vld [vmem:[#allocation5 + $0xda0] sm:$0xff]
    %v562 = vld [vmem:[#allocation5 + $0xda8] sm:$0xff]
    %v563 = vld [vmem:[#allocation5 + $0xdb0] sm:$0xff]
    %v564 = vld [vmem:[#allocation5 + $0xdb8] sm:$0xff]
    %v565 = vld [vmem:[#allocation5 + $0xdc0] sm:$0xff]
    %v566 = vld [vmem:[#allocation5 + $0xdc8] sm:$0xff]
    %v567 = vld [vmem:[#allocation5 + $0xdd0] sm:$0xff]
    %v568 = vld [vmem:[#allocation5 + $0xdd8] sm:$0xff]
    %v569 = vld [vmem:[#allocation5 + $0xde0] sm:$0xff]
    %v570 = vld [vmem:[#allocation5 + $0xde8] sm:$0xff]
    %v571 = vld [vmem:[#allocation5 + $0xdf0] sm:$0xff]
    %v572 = vld [vmem:[#allocation5 + $0xdf8] sm:$0xff]
    %v573 = vld [vmem:[#allocation5 + $0xe00] sm:$0xff]
    %v574 = vld [vmem:[#allocation5 + $0xe08] sm:$0xff]
    %v575 = vld [vmem:[#allocation5 + $0xe10] sm:$0xff]
    %v576 = vld [vmem:[#allocation5 + $0xe18] sm:$0xff]
    %v577 = vld [vmem:[#allocation5 + $0xe20] sm:$0xff]
    %v578 = vld [vmem:[#allocation5 + $0xe28] sm:$0xff]
    %v579 = vld [vmem:[#allocation5 + $0xe30] sm:$0xff]
    %v580 = vld [vmem:[#allocation5 + $0xe38] sm:$0xff]
    %v581 = vld [vmem:[#allocation5 + $0xe40] sm:$0xff]
    %v582 = vld [vmem:[#allocation5 + $0xe48] sm:$0xff]
    %v583 = vld [vmem:[#allocation5 + $0xe50] sm:$0xff]
    %v584 = vld [vmem:[#allocation5 + $0xe58] sm:$0xff]
    %v585 = vld [vmem:[#allocation5 + $0xe60] sm:$0xff]
    %v586 = vld [vmem:[#allocation5 + $0xe68] sm:$0xff]
    %v587 = vld [vmem:[#allocation5 + $0xe70] sm:$0xff]
    %v588 = vld [vmem:[#allocation5 + $0xe78] sm:$0xff]
    %v589 = vld [vmem:[#allocation5 + $0xe80] sm:$0xff]
    %v590 = vld [vmem:[#allocation5 + $0xe88] sm:$0xff]
    %v591 = vld [vmem:[#allocation5 + $0xe90] sm:$0xff]
    %v592 = vld [vmem:[#allocation5 + $0xe98] sm:$0xff]
    %v593 = vld [vmem:[#allocation5 + $0xea0] sm:$0xff]
    %v594 = vld [vmem:[#allocation5 + $0xea8] sm:$0xff]
    %v595 = vld [vmem:[#allocation5 + $0xeb0] sm:$0xff]
    %v596 = vld [vmem:[#allocation5 + $0xeb8] sm:$0xff]
    %v597 = vld [vmem:[#allocation5 + $0xec0] sm:$0xff]
    %v598 = vld [vmem:[#allocation5 + $0xec8] sm:$0xff]
    %v599 = vld [vmem:[#allocation5 + $0xed0] sm:$0xff]
    %v600 = vld [vmem:[#allocation5 + $0xed8] sm:$0xff]
    %v601 = vld [vmem:[#allocation5 + $0xee0] sm:$0xff]
    %v602 = vld [vmem:[#allocation5 + $0xee8] sm:$0xff]
    %v603 = vld [vmem:[#allocation5 + $0xef0] sm:$0xff]
    %v604 = vld [vmem:[#allocation5 + $0xef8] sm:$0xff]
    %v605 = vld [vmem:[#allocation5 + $0xf00] sm:$0xff]
    %v606 = vld [vmem:[#allocation5 + $0xf08] sm:$0xff]
    %v607 = vld [vmem:[#allocation5 + $0xf10] sm:$0xff]
    %v608 = vld [vmem:[#allocation5 + $0xf18] sm:$0xff]
    %v609 = vld [vmem:[#allocation5 + $0xf20] sm:$0xff]
    %v610 = vld [vmem:[#allocation5 + $0xf28] sm:$0xff]
    %v611 = vld [vmem:[#allocation5 + $0xf30] sm:$0xff]
    %v612 = vld [vmem:[#allocation5 + $0xf38] sm:$0xff]
    %v613 = vld [vmem:[#allocation5 + $0xf40] sm:$0xff]
    %v614 = vld [vmem:[#allocation5 + $0xf48] sm:$0xff]
    %v615 = vld [vmem:[#allocation5 + $0xf50] sm:$0xff]
    %v616 = vld [vmem:[#allocation5 + $0xf58] sm:$0xff]
    %v617 = vld [vmem:[#allocation5 + $0xf60] sm:$0xff]
    %v618 = vld [vmem:[#allocation5 + $0xf68] sm:$0xff]
    %v619 = vld [vmem:[#allocation5 + $0xf70] sm:$0xff]
    %v620 = vld [vmem:[#allocation5 + $0xf78] sm:$0xff]
    %v621 = vld [vmem:[#allocation5 + $0xf80] sm:$0xff]
    %v622 = vld [vmem:[#allocation5 + $0xf88] sm:$0xff]
    %v623 = vld [vmem:[#allocation5 + $0xf90] sm:$0xff]
    %v624 = vld [vmem:[#allocation5 + $0xf98] sm:$0xff]
    %v625 = vld [vmem:[#allocation5 + $0xfa0] sm:$0xff]
    %v626 = vld [vmem:[#allocation5 + $0xfa8] sm:$0xff]
    %v627 = vld [vmem:[#allocation5 + $0xfb0] sm:$0xff]
    %v628 = vld [vmem:[#allocation5 + $0xfb8] sm:$0xff]
    %v629 = vld [vmem:[#allocation5 + $0xfc0] sm:$0xff]
    %v630 = vld [vmem:[#allocation5 + $0xfc8] sm:$0xff]
    %v631 = vld [vmem:[#allocation5 + $0xfd0] sm:$0xff]
    %v632 = vld [vmem:[#allocation5 + $0xfd8] sm:$0xff]
    %v633 = vld [vmem:[#allocation5 + $0xfe0] sm:$0xff]
    %v634 = vld [vmem:[#allocation5 + $0xfe8] sm:$0xff]
    %v635 = vld [vmem:[#allocation5 + $0xff0] sm:$0xff]
    %v636 = vld [vmem:[#allocation5 + $0xff8] sm:$0xff]
    %v637 = vld [vmem:[#allocation7] sm:$0xf]
    %v639 = vperm.slane %v637, 0
    %v640 = vperm.slane %v637, 1
    %v641 = vperm.slane %v637, 2
    %v642 = vperm.slane %v637, 3
    %v1159 = vunpack.c.l.b16 %v125
    %v1160 = vunpack.c.h.b16 %v125
    %v1161 = vunpack.c.l.b16 %v126
    %v1162 = vunpack.c.h.b16 %v126
    %v1163 = vunpack.c.l.b16 %v127
    %v1164 = vunpack.c.h.b16 %v127
    %v1165 = vunpack.c.l.b16 %v128
    %v1166 = vunpack.c.h.b16 %v128
    %v1167 = vunpack.c.l.b16 %v129
    %v1168 = vunpack.c.h.b16 %v129
    %v1169 = vunpack.c.l.b16 %v130
    %v1170 = vunpack.c.h.b16 %v130
    %v1171 = vunpack.c.l.b16 %v131
    %v1172 = vunpack.c.h.b16 %v131
    %v1173 = vunpack.c.l.b16 %v132
    %v1174 = vunpack.c.h.b16 %v132
    %v1175 = vunpack.c.l.b16 %v133
    %v1176 = vunpack.c.h.b16 %v133
    %v1177 = vunpack.c.l.b16 %v134
    %v1178 = vunpack.c.h.b16 %v134
    %v1179 = vunpack.c.l.b16 %v135
    %v1180 = vunpack.c.h.b16 %v135
    %v1181 = vunpack.c.l.b16 %v136
    %v1182 = vunpack.c.h.b16 %v136
    %v1183 = vunpack.c.l.b16 %v137
    %v1184 = vunpack.c.h.b16 %v137
    %v1185 = vunpack.c.l.b16 %v138
    %v1186 = vunpack.c.h.b16 %v138
    %v1187 = vunpack.c.l.b16 %v139
    %v1188 = vunpack.c.h.b16 %v139
    %v1189 = vunpack.c.l.b16 %v140
    %v1190 = vunpack.c.h.b16 %v140
    %v1191 = vunpack.c.l.b16 %v141
    %v1192 = vunpack.c.h.b16 %v141
    %v1193 = vunpack.c.l.b16 %v142
    %v1194 = vunpack.c.h.b16 %v142
    %v1195 = vunpack.c.l.b16 %v143
    %v1196 = vunpack.c.h.b16 %v143
    %v1197 = vunpack.c.l.b16 %v144
    %v1198 = vunpack.c.h.b16 %v144
    %v1199 = vunpack.c.l.b16 %v145
    %v1200 = vunpack.c.h.b16 %v145
    %v1201 = vunpack.c.l.b16 %v146
    %v1202 = vunpack.c.h.b16 %v146
    %v1203 = vunpack.c.l.b16 %v147
    %v1204 = vunpack.c.h.b16 %v147
    %v1205 = vunpack.c.l.b16 %v148
    %v1206 = vunpack.c.h.b16 %v148
    %v1207 = vunpack.c.l.b16 %v149
    %v1208 = vunpack.c.h.b16 %v149
    %v1209 = vunpack.c.l.b16 %v150
    %v1210 = vunpack.c.h.b16 %v150
    %v1211 = vunpack.c.l.b16 %v151
    %v1212 = vunpack.c.h.b16 %v151
    %v1213 = vunpack.c.l.b16 %v152
    %v1214 = vunpack.c.h.b16 %v152
    %v1215 = vunpack.c.l.b16 %v153
    %v1216 = vunpack.c.h.b16 %v153
    %v1217 = vunpack.c.l.b16 %v154
    %v1218 = vunpack.c.h.b16 %v154
    %v1219 = vunpack.c.l.b16 %v155
    %v1220 = vunpack.c.h.b16 %v155
    %v1221 = vunpack.c.l.b16 %v156
    %v1222 = vunpack.c.h.b16 %v156
    %v1223 = vunpack.c.l.b16 %v157
    %v1224 = vunpack.c.h.b16 %v157
    %v1225 = vunpack.c.l.b16 %v158
    %v1226 = vunpack.c.h.b16 %v158
    %v1227 = vunpack.c.l.b16 %v159
    %v1228 = vunpack.c.h.b16 %v159
    %v1229 = vunpack.c.l.b16 %v160
    %v1230 = vunpack.c.h.b16 %v160
    %v1231 = vunpack.c.l.b16 %v161
    %v1232 = vunpack.c.h.b16 %v161
    %v1233 = vunpack.c.l.b16 %v162
    %v1234 = vunpack.c.h.b16 %v162
    %v1235 = vunpack.c.l.b16 %v163
    %v1236 = vunpack.c.h.b16 %v163
    %v1237 = vunpack.c.l.b16 %v164
    %v1238 = vunpack.c.h.b16 %v164
    %v1239 = vunpack.c.l.b16 %v165
    %v1240 = vunpack.c.h.b16 %v165
    %v1241 = vunpack.c.l.b16 %v166
    %v1242 = vunpack.c.h.b16 %v166
    %v1243 = vunpack.c.l.b16 %v167
    %v1244 = vunpack.c.h.b16 %v167
    %v1245 = vunpack.c.l.b16 %v168
    %v1246 = vunpack.c.h.b16 %v168
    %v1247 = vunpack.c.l.b16 %v169
    %v1248 = vunpack.c.h.b16 %v169
    %v1249 = vunpack.c.l.b16 %v170
    %v1250 = vunpack.c.h.b16 %v170
    %v1251 = vunpack.c.l.b16 %v171
    %v1252 = vunpack.c.h.b16 %v171
    %v1253 = vunpack.c.l.b16 %v172
    %v1254 = vunpack.c.h.b16 %v172
    %v1255 = vunpack.c.l.b16 %v173
    %v1256 = vunpack.c.h.b16 %v173
    %v1257 = vunpack.c.l.b16 %v174
    %v1258 = vunpack.c.h.b16 %v174
    %v1259 = vunpack.c.l.b16 %v175
    %v1260 = vunpack.c.h.b16 %v175
    %v1261 = vunpack.c.l.b16 %v176
    %v1262 = vunpack.c.h.b16 %v176
    %v1263 = vunpack.c.l.b16 %v177
    %v1264 = vunpack.c.h.b16 %v177
    %v1265 = vunpack.c.l.b16 %v178
    %v1266 = vunpack.c.h.b16 %v178
    %v1267 = vunpack.c.l.b16 %v179
    %v1268 = vunpack.c.h.b16 %v179
    %v1269 = vunpack.c.l.b16 %v180
    %v1270 = vunpack.c.h.b16 %v180
    %v1271 = vunpack.c.l.b16 %v181
    %v1272 = vunpack.c.h.b16 %v181
    %v1273 = vunpack.c.l.b16 %v182
    %v1274 = vunpack.c.h.b16 %v182
    %v1275 = vunpack.c.l.b16 %v183
    %v1276 = vunpack.c.h.b16 %v183
    %v1277 = vunpack.c.l.b16 %v184
    %v1278 = vunpack.c.h.b16 %v184
    %v1279 = vunpack.c.l.b16 %v185
    %v1280 = vunpack.c.h.b16 %v185
    %v1281 = vunpack.c.l.b16 %v186
    %v1282 = vunpack.c.h.b16 %v186
    %v1283 = vunpack.c.l.b16 %v187
    %v1284 = vunpack.c.h.b16 %v187
    %v1285 = vunpack.c.l.b16 %v188
    %v1286 = vunpack.c.h.b16 %v188
    %v1287 = vunpack.c.l.b16 %v189
    %v1288 = vunpack.c.h.b16 %v189
    %v1289 = vunpack.c.l.b16 %v190
    %v1290 = vunpack.c.h.b16 %v190
    %v1291 = vunpack.c.l.b16 %v191
    %v1292 = vunpack.c.h.b16 %v191
    %v1293 = vunpack.c.l.b16 %v192
    %v1294 = vunpack.c.h.b16 %v192
    %v1295 = vunpack.c.l.b16 %v193
    %v1296 = vunpack.c.h.b16 %v193
    %v1297 = vunpack.c.l.b16 %v194
    %v1298 = vunpack.c.h.b16 %v194
    %v1299 = vunpack.c.l.b16 %v195
    %v1300 = vunpack.c.h.b16 %v195
    %v1301 = vunpack.c.l.b16 %v196
    %v1302 = vunpack.c.h.b16 %v196
    %v1303 = vunpack.c.l.b16 %v197
    %v1304 = vunpack.c.h.b16 %v197
    %v1305 = vunpack.c.l.b16 %v198
    %v1306 = vunpack.c.h.b16 %v198
    %v1307 = vunpack.c.l.b16 %v199
    %v1308 = vunpack.c.h.b16 %v199
    %v1309 = vunpack.c.l.b16 %v200
    %v1310 = vunpack.c.h.b16 %v200
    %v1311 = vunpack.c.l.b16 %v201
    %v1312 = vunpack.c.h.b16 %v201
    %v1313 = vunpack.c.l.b16 %v202
    %v1314 = vunpack.c.h.b16 %v202
    %v1315 = vunpack.c.l.b16 %v203
    %v1316 = vunpack.c.h.b16 %v203
    %v1317 = vunpack.c.l.b16 %v204
    %v1318 = vunpack.c.h.b16 %v204
    %v1319 = vunpack.c.l.b16 %v205
    %v1320 = vunpack.c.h.b16 %v205
    %v1321 = vunpack.c.l.b16 %v206
    %v1322 = vunpack.c.h.b16 %v206
    %v1323 = vunpack.c.l.b16 %v207
    %v1324 = vunpack.c.h.b16 %v207
    %v1325 = vunpack.c.l.b16 %v208
    %v1326 = vunpack.c.h.b16 %v208
    %v1327 = vunpack.c.l.b16 %v209
    %v1328 = vunpack.c.h.b16 %v209
    %v1329 = vunpack.c.l.b16 %v210
    %v1330 = vunpack.c.h.b16 %v210
    %v1331 = vunpack.c.l.b16 %v211
    %v1332 = vunpack.c.h.b16 %v211
    %v1333 = vunpack.c.l.b16 %v212
    %v1334 = vunpack.c.h.b16 %v212
    %v1335 = vunpack.c.l.b16 %v213
    %v1336 = vunpack.c.h.b16 %v213
    %v1337 = vunpack.c.l.b16 %v214
    %v1338 = vunpack.c.h.b16 %v214
    %v1339 = vunpack.c.l.b16 %v215
    %v1340 = vunpack.c.h.b16 %v215
    %v1341 = vunpack.c.l.b16 %v216
    %v1342 = vunpack.c.h.b16 %v216
    %v1343 = vunpack.c.l.b16 %v217
    %v1344 = vunpack.c.h.b16 %v217
    %v1345 = vunpack.c.l.b16 %v218
    %v1346 = vunpack.c.h.b16 %v218
    %v1347 = vunpack.c.l.b16 %v219
    %v1348 = vunpack.c.h.b16 %v219
    %v1349 = vunpack.c.l.b16 %v220
    %v1350 = vunpack.c.h.b16 %v220
    %v1351 = vunpack.c.l.b16 %v221
    %v1352 = vunpack.c.h.b16 %v221
    %v1353 = vunpack.c.l.b16 %v222
    %v1354 = vunpack.c.h.b16 %v222
    %v1355 = vunpack.c.l.b16 %v223
    %v1356 = vunpack.c.h.b16 %v223
    %v1357 = vunpack.c.l.b16 %v224
    %v1358 = vunpack.c.h.b16 %v224
    %v1359 = vunpack.c.l.b16 %v225
    %v1360 = vunpack.c.h.b16 %v225
    %v1361 = vunpack.c.l.b16 %v226
    %v1362 = vunpack.c.h.b16 %v226
    %v1363 = vunpack.c.l.b16 %v227
    %v1364 = vunpack.c.h.b16 %v227
    %v1365 = vunpack.c.l.b16 %v228
    %v1366 = vunpack.c.h.b16 %v228
    %v1367 = vunpack.c.l.b16 %v229
    %v1368 = vunpack.c.h.b16 %v229
    %v1369 = vunpack.c.l.b16 %v230
    %v1370 = vunpack.c.h.b16 %v230
    %v1371 = vunpack.c.l.b16 %v231
    %v1372 = vunpack.c.h.b16 %v231
    %v1373 = vunpack.c.l.b16 %v232
    %v1374 = vunpack.c.h.b16 %v232
    %v1375 = vunpack.c.l.b16 %v233
    %v1376 = vunpack.c.h.b16 %v233
    %v1377 = vunpack.c.l.b16 %v234
    %v1378 = vunpack.c.h.b16 %v234
    %v1379 = vunpack.c.l.b16 %v235
    %v1380 = vunpack.c.h.b16 %v235
    %v1381 = vunpack.c.l.b16 %v236
    %v1382 = vunpack.c.h.b16 %v236
    %v1383 = vunpack.c.l.b16 %v237
    %v1384 = vunpack.c.h.b16 %v237
    %v1385 = vunpack.c.l.b16 %v238
    %v1386 = vunpack.c.h.b16 %v238
    %v1387 = vunpack.c.l.b16 %v239
    %v1388 = vunpack.c.h.b16 %v239
    %v1389 = vunpack.c.l.b16 %v240
    %v1390 = vunpack.c.h.b16 %v240
    %v1391 = vunpack.c.l.b16 %v241
    %v1392 = vunpack.c.h.b16 %v241
    %v1393 = vunpack.c.l.b16 %v242
    %v1394 = vunpack.c.h.b16 %v242
    %v1395 = vunpack.c.l.b16 %v243
    %v1396 = vunpack.c.h.b16 %v243
    %v1397 = vunpack.c.l.b16 %v244
    %v1398 = vunpack.c.h.b16 %v244
    %v1399 = vunpack.c.l.b16 %v245
    %v1400 = vunpack.c.h.b16 %v245
    %v1401 = vunpack.c.l.b16 %v246
    %v1402 = vunpack.c.h.b16 %v246
    %v1403 = vunpack.c.l.b16 %v247
    %v1404 = vunpack.c.h.b16 %v247
    %v1405 = vunpack.c.l.b16 %v248
    %v1406 = vunpack.c.h.b16 %v248
    %v1407 = vunpack.c.l.b16 %v249
    %v1408 = vunpack.c.h.b16 %v249
    %v1409 = vunpack.c.l.b16 %v250
    %v1410 = vunpack.c.h.b16 %v250
    %v1411 = vunpack.c.l.b16 %v251
    %v1412 = vunpack.c.h.b16 %v251
    %v1413 = vunpack.c.l.b16 %v252
    %v1414 = vunpack.c.h.b16 %v252
    %v1415 = vunpack.c.l.b16 %v253
    %v1416 = vunpack.c.h.b16 %v253
    %v1417 = vunpack.c.l.b16 %v254
    %v1418 = vunpack.c.h.b16 %v254
    %v1419 = vunpack.c.l.b16 %v255
    %v1420 = vunpack.c.h.b16 %v255
    %v1421 = vunpack.c.l.b16 %v256
    %v1422 = vunpack.c.h.b16 %v256
    %v1423 = vunpack.c.l.b16 %v257
    %v1424 = vunpack.c.h.b16 %v257
    %v1425 = vunpack.c.l.b16 %v258
    %v1426 = vunpack.c.h.b16 %v258
    %v1427 = vunpack.c.l.b16 %v259
    %v1428 = vunpack.c.h.b16 %v259
    %v1429 = vunpack.c.l.b16 %v260
    %v1430 = vunpack.c.h.b16 %v260
    %v1431 = vunpack.c.l.b16 %v261
    %v1432 = vunpack.c.h.b16 %v261
    %v1433 = vunpack.c.l.b16 %v262
    %v1434 = vunpack.c.h.b16 %v262
    %v1435 = vunpack.c.l.b16 %v263
    %v1436 = vunpack.c.h.b16 %v263
    %v1437 = vunpack.c.l.b16 %v264
    %v1438 = vunpack.c.h.b16 %v264
    %v1439 = vunpack.c.l.b16 %v265
    %v1440 = vunpack.c.h.b16 %v265
    %v1441 = vunpack.c.l.b16 %v266
    %v1442 = vunpack.c.h.b16 %v266
    %v1443 = vunpack.c.l.b16 %v267
    %v1444 = vunpack.c.h.b16 %v267
    %v1445 = vunpack.c.l.b16 %v268
    %v1446 = vunpack.c.h.b16 %v268
    %v1447 = vunpack.c.l.b16 %v269
    %v1448 = vunpack.c.h.b16 %v269
    %v1449 = vunpack.c.l.b16 %v270
    %v1450 = vunpack.c.h.b16 %v270
    %v1451 = vunpack.c.l.b16 %v271
    %v1452 = vunpack.c.h.b16 %v271
    %v1453 = vunpack.c.l.b16 %v272
    %v1454 = vunpack.c.h.b16 %v272
    %v1455 = vunpack.c.l.b16 %v273
    %v1456 = vunpack.c.h.b16 %v273
    %v1457 = vunpack.c.l.b16 %v274
    %v1458 = vunpack.c.h.b16 %v274
    %v1459 = vunpack.c.l.b16 %v275
    %v1460 = vunpack.c.h.b16 %v275
    %v1461 = vunpack.c.l.b16 %v276
    %v1462 = vunpack.c.h.b16 %v276
    %v1463 = vunpack.c.l.b16 %v277
    %v1464 = vunpack.c.h.b16 %v277
    %v1465 = vunpack.c.l.b16 %v278
    %v1466 = vunpack.c.h.b16 %v278
    %v1467 = vunpack.c.l.b16 %v279
    %v1468 = vunpack.c.h.b16 %v279
    %v1469 = vunpack.c.l.b16 %v280
    %v1470 = vunpack.c.h.b16 %v280
    %v1471 = vunpack.c.l.b16 %v281
    %v1472 = vunpack.c.h.b16 %v281
    %v1473 = vunpack.c.l.b16 %v282
    %v1474 = vunpack.c.h.b16 %v282
    %v1475 = vunpack.c.l.b16 %v283
    %v1476 = vunpack.c.h.b16 %v283
    %v1477 = vunpack.c.l.b16 %v284
    %v1478 = vunpack.c.h.b16 %v284
    %v1479 = vunpack.c.l.b16 %v285
    %v1480 = vunpack.c.h.b16 %v285
    %v1481 = vunpack.c.l.b16 %v286
    %v1482 = vunpack.c.h.b16 %v286
    %v1483 = vunpack.c.l.b16 %v287
    %v1484 = vunpack.c.h.b16 %v287
    %v1485 = vunpack.c.l.b16 %v288
    %v1486 = vunpack.c.h.b16 %v288
    %v1487 = vunpack.c.l.b16 %v289
    %v1488 = vunpack.c.h.b16 %v289
    %v1489 = vunpack.c.l.b16 %v290
    %v1490 = vunpack.c.h.b16 %v290
    %v1491 = vunpack.c.l.b16 %v291
    %v1492 = vunpack.c.h.b16 %v291
    %v1493 = vunpack.c.l.b16 %v292
    %v1494 = vunpack.c.h.b16 %v292
    %v1495 = vunpack.c.l.b16 %v293
    %v1496 = vunpack.c.h.b16 %v293
    %v1497 = vunpack.c.l.b16 %v294
    %v1498 = vunpack.c.h.b16 %v294
    %v1499 = vunpack.c.l.b16 %v295
    %v1500 = vunpack.c.h.b16 %v295
    %v1501 = vunpack.c.l.b16 %v296
    %v1502 = vunpack.c.h.b16 %v296
    %v1503 = vunpack.c.l.b16 %v297
    %v1504 = vunpack.c.h.b16 %v297
    %v1505 = vunpack.c.l.b16 %v298
    %v1506 = vunpack.c.h.b16 %v298
    %v1507 = vunpack.c.l.b16 %v299
    %v1508 = vunpack.c.h.b16 %v299
    %v1509 = vunpack.c.l.b16 %v300
    %v1510 = vunpack.c.h.b16 %v300
    %v1511 = vunpack.c.l.b16 %v301
    %v1512 = vunpack.c.h.b16 %v301
    %v1513 = vunpack.c.l.b16 %v302
    %v1514 = vunpack.c.h.b16 %v302
    %v1515 = vunpack.c.l.b16 %v303
    %v1516 = vunpack.c.h.b16 %v303
    %v1517 = vunpack.c.l.b16 %v304
    %v1518 = vunpack.c.h.b16 %v304
    %v1519 = vunpack.c.l.b16 %v305
    %v1520 = vunpack.c.h.b16 %v305
    %v1521 = vunpack.c.l.b16 %v306
    %v1522 = vunpack.c.h.b16 %v306
    %v1523 = vunpack.c.l.b16 %v307
    %v1524 = vunpack.c.h.b16 %v307
    %v1525 = vunpack.c.l.b16 %v308
    %v1526 = vunpack.c.h.b16 %v308
    %v1527 = vunpack.c.l.b16 %v309
    %v1528 = vunpack.c.h.b16 %v309
    %v1529 = vunpack.c.l.b16 %v310
    %v1530 = vunpack.c.h.b16 %v310
    %v1531 = vunpack.c.l.b16 %v311
    %v1532 = vunpack.c.h.b16 %v311
    %v1533 = vunpack.c.l.b16 %v312
    %v1534 = vunpack.c.h.b16 %v312
    %v1535 = vunpack.c.l.b16 %v313
    %v1536 = vunpack.c.h.b16 %v313
    %v1537 = vunpack.c.l.b16 %v314
    %v1538 = vunpack.c.h.b16 %v314
    %v1539 = vunpack.c.l.b16 %v315
    %v1540 = vunpack.c.h.b16 %v315
    %v1541 = vunpack.c.l.b16 %v316
    %v1542 = vunpack.c.h.b16 %v316
    %v1543 = vunpack.c.l.b16 %v317
    %v1544 = vunpack.c.h.b16 %v317
    %v1545 = vunpack.c.l.b16 %v318
    %v1546 = vunpack.c.h.b16 %v318
    %v1547 = vunpack.c.l.b16 %v319
    %v1548 = vunpack.c.h.b16 %v319
    %v1549 = vunpack.c.l.b16 %v320
    %v1550 = vunpack.c.h.b16 %v320
    %v1551 = vunpack.c.l.b16 %v321
    %v1552 = vunpack.c.h.b16 %v321
    %v1553 = vunpack.c.l.b16 %v322
    %v1554 = vunpack.c.h.b16 %v322
    %v1555 = vunpack.c.l.b16 %v323
    %v1556 = vunpack.c.h.b16 %v323
    %v1557 = vunpack.c.l.b16 %v324
    %v1558 = vunpack.c.h.b16 %v324
    %v1559 = vunpack.c.l.b16 %v325
    %v1560 = vunpack.c.h.b16 %v325
    %v1561 = vunpack.c.l.b16 %v326
    %v1562 = vunpack.c.h.b16 %v326
    %v1563 = vunpack.c.l.b16 %v327
    %v1564 = vunpack.c.h.b16 %v327
    %v1565 = vunpack.c.l.b16 %v328
    %v1566 = vunpack.c.h.b16 %v328
    %v1567 = vunpack.c.l.b16 %v329
    %v1568 = vunpack.c.h.b16 %v329
    %v1569 = vunpack.c.l.b16 %v330
    %v1570 = vunpack.c.h.b16 %v330
    %v1571 = vunpack.c.l.b16 %v331
    %v1572 = vunpack.c.h.b16 %v331
    %v1573 = vunpack.c.l.b16 %v332
    %v1574 = vunpack.c.h.b16 %v332
    %v1575 = vunpack.c.l.b16 %v333
    %v1576 = vunpack.c.h.b16 %v333
    %v1577 = vunpack.c.l.b16 %v334
    %v1578 = vunpack.c.h.b16 %v334
    %v1579 = vunpack.c.l.b16 %v335
    %v1580 = vunpack.c.h.b16 %v335
    %v1581 = vunpack.c.l.b16 %v336
    %v1582 = vunpack.c.h.b16 %v336
    %v1583 = vunpack.c.l.b16 %v337
    %v1584 = vunpack.c.h.b16 %v337
    %v1585 = vunpack.c.l.b16 %v338
    %v1586 = vunpack.c.h.b16 %v338
    %v1587 = vunpack.c.l.b16 %v339
    %v1588 = vunpack.c.h.b16 %v339
    %v1589 = vunpack.c.l.b16 %v340
    %v1590 = vunpack.c.h.b16 %v340
    %v1591 = vunpack.c.l.b16 %v341
    %v1592 = vunpack.c.h.b16 %v341
    %v1593 = vunpack.c.l.b16 %v342
    %v1594 = vunpack.c.h.b16 %v342
    %v1595 = vunpack.c.l.b16 %v343
    %v1596 = vunpack.c.h.b16 %v343
    %v1597 = vunpack.c.l.b16 %v344
    %v1598 = vunpack.c.h.b16 %v344
    %v1599 = vunpack.c.l.b16 %v345
    %v1600 = vunpack.c.h.b16 %v345
    %v1601 = vunpack.c.l.b16 %v346
    %v1602 = vunpack.c.h.b16 %v346
    %v1603 = vunpack.c.l.b16 %v347
    %v1604 = vunpack.c.h.b16 %v347
    %v1605 = vunpack.c.l.b16 %v348
    %v1606 = vunpack.c.h.b16 %v348
    %v1607 = vunpack.c.l.b16 %v349
    %v1608 = vunpack.c.h.b16 %v349
    %v1609 = vunpack.c.l.b16 %v350
    %v1610 = vunpack.c.h.b16 %v350
    %v1611 = vunpack.c.l.b16 %v351
    %v1612 = vunpack.c.h.b16 %v351
    %v1613 = vunpack.c.l.b16 %v352
    %v1614 = vunpack.c.h.b16 %v352
    %v1615 = vunpack.c.l.b16 %v353
    %v1616 = vunpack.c.h.b16 %v353
    %v1617 = vunpack.c.l.b16 %v354
    %v1618 = vunpack.c.h.b16 %v354
    %v1619 = vunpack.c.l.b16 %v355
    %v1620 = vunpack.c.h.b16 %v355
    %v1621 = vunpack.c.l.b16 %v356
    %v1622 = vunpack.c.h.b16 %v356
    %v1623 = vunpack.c.l.b16 %v357
    %v1624 = vunpack.c.h.b16 %v357
    %v1625 = vunpack.c.l.b16 %v358
    %v1626 = vunpack.c.h.b16 %v358
    %v1627 = vunpack.c.l.b16 %v359
    %v1628 = vunpack.c.h.b16 %v359
    %v1629 = vunpack.c.l.b16 %v360
    %v1630 = vunpack.c.h.b16 %v360
    %v1631 = vunpack.c.l.b16 %v361
    %v1632 = vunpack.c.h.b16 %v361
    %v1633 = vunpack.c.l.b16 %v362
    %v1634 = vunpack.c.h.b16 %v362
    %v1635 = vunpack.c.l.b16 %v363
    %v1636 = vunpack.c.h.b16 %v363
    %v1637 = vunpack.c.l.b16 %v364
    %v1638 = vunpack.c.h.b16 %v364
    %v1639 = vunpack.c.l.b16 %v365
    %v1640 = vunpack.c.h.b16 %v365
    %v1641 = vunpack.c.l.b16 %v366
    %v1642 = vunpack.c.h.b16 %v366
    %v1643 = vunpack.c.l.b16 %v367
    %v1644 = vunpack.c.h.b16 %v367
    %v1645 = vunpack.c.l.b16 %v368
    %v1646 = vunpack.c.h.b16 %v368
    %v1647 = vunpack.c.l.b16 %v369
    %v1648 = vunpack.c.h.b16 %v369
    %v1649 = vunpack.c.l.b16 %v370
    %v1650 = vunpack.c.h.b16 %v370
    %v1651 = vunpack.c.l.b16 %v371
    %v1652 = vunpack.c.h.b16 %v371
    %v1653 = vunpack.c.l.b16 %v372
    %v1654 = vunpack.c.h.b16 %v372
    %v1655 = vunpack.c.l.b16 %v373
    %v1656 = vunpack.c.h.b16 %v373
    %v1657 = vunpack.c.l.b16 %v374
    %v1658 = vunpack.c.h.b16 %v374
    %v1659 = vunpack.c.l.b16 %v375
    %v1660 = vunpack.c.h.b16 %v375
    %v1661 = vunpack.c.l.b16 %v376
    %v1662 = vunpack.c.h.b16 %v376
    %v1663 = vunpack.c.l.b16 %v377
    %v1664 = vunpack.c.h.b16 %v377
    %v1665 = vunpack.c.l.b16 %v378
    %v1666 = vunpack.c.h.b16 %v378
    %v1667 = vunpack.c.l.b16 %v379
    %v1668 = vunpack.c.h.b16 %v379
    %v1669 = vunpack.c.l.b16 %v380
    %v1670 = vunpack.c.h.b16 %v380
    %v1671 = vunpack.c.l.b16 %v381
    %v1672 = vunpack.c.h.b16 %v381
    %v1673 = vunpack.c.l.b16 %v382
    %v1674 = vunpack.c.h.b16 %v382
    %v1675 = vunpack.c.l.b16 %v383
    %v1676 = vunpack.c.h.b16 %v383
    %v1677 = vunpack.c.l.b16 %v384
    %v1678 = vunpack.c.h.b16 %v384
    %v1679 = vunpack.c.l.b16 %v385
    %v1680 = vunpack.c.h.b16 %v385
    %v1681 = vunpack.c.l.b16 %v386
    %v1682 = vunpack.c.h.b16 %v386
    %v1683 = vunpack.c.l.b16 %v387
    %v1684 = vunpack.c.h.b16 %v387
    %v1685 = vunpack.c.l.b16 %v388
    %v1686 = vunpack.c.h.b16 %v388
    %v1687 = vunpack.c.l.b16 %v389
    %v1688 = vunpack.c.h.b16 %v389
    %v1689 = vunpack.c.l.b16 %v390
    %v1690 = vunpack.c.h.b16 %v390
    %v1691 = vunpack.c.l.b16 %v391
    %v1692 = vunpack.c.h.b16 %v391
    %v1693 = vunpack.c.l.b16 %v392
    %v1694 = vunpack.c.h.b16 %v392
    %v1695 = vunpack.c.l.b16 %v393
    %v1696 = vunpack.c.h.b16 %v393
    %v1697 = vunpack.c.l.b16 %v394
    %v1698 = vunpack.c.h.b16 %v394
    %v1699 = vunpack.c.l.b16 %v395
    %v1700 = vunpack.c.h.b16 %v395
    %v1701 = vunpack.c.l.b16 %v396
    %v1702 = vunpack.c.h.b16 %v396
    %v1703 = vunpack.c.l.b16 %v397
    %v1704 = vunpack.c.h.b16 %v397
    %v1705 = vunpack.c.l.b16 %v398
    %v1706 = vunpack.c.h.b16 %v398
    %v1707 = vunpack.c.l.b16 %v399
    %v1708 = vunpack.c.h.b16 %v399
    %v1709 = vunpack.c.l.b16 %v400
    %v1710 = vunpack.c.h.b16 %v400
    %v1711 = vunpack.c.l.b16 %v401
    %v1712 = vunpack.c.h.b16 %v401
    %v1713 = vunpack.c.l.b16 %v402
    %v1714 = vunpack.c.h.b16 %v402
    %v1715 = vunpack.c.l.b16 %v403
    %v1716 = vunpack.c.h.b16 %v403
    %v1717 = vunpack.c.l.b16 %v404
    %v1718 = vunpack.c.h.b16 %v404
    %v1719 = vunpack.c.l.b16 %v405
    %v1720 = vunpack.c.h.b16 %v405
    %v1721 = vunpack.c.l.b16 %v406
    %v1722 = vunpack.c.h.b16 %v406
    %v1723 = vunpack.c.l.b16 %v407
    %v1724 = vunpack.c.h.b16 %v407
    %v1725 = vunpack.c.l.b16 %v408
    %v1726 = vunpack.c.h.b16 %v408
    %v1727 = vunpack.c.l.b16 %v409
    %v1728 = vunpack.c.h.b16 %v409
    %v1729 = vunpack.c.l.b16 %v410
    %v1730 = vunpack.c.h.b16 %v410
    %v1731 = vunpack.c.l.b16 %v411
    %v1732 = vunpack.c.h.b16 %v411
    %v1733 = vunpack.c.l.b16 %v412
    %v1734 = vunpack.c.h.b16 %v412
    %v1735 = vunpack.c.l.b16 %v413
    %v1736 = vunpack.c.h.b16 %v413
    %v1737 = vunpack.c.l.b16 %v414
    %v1738 = vunpack.c.h.b16 %v414
    %v1739 = vunpack.c.l.b16 %v415
    %v1740 = vunpack.c.h.b16 %v415
    %v1741 = vunpack.c.l.b16 %v416
    %v1742 = vunpack.c.h.b16 %v416
    %v1743 = vunpack.c.l.b16 %v417
    %v1744 = vunpack.c.h.b16 %v417
    %v1745 = vunpack.c.l.b16 %v418
    %v1746 = vunpack.c.h.b16 %v418
    %v1747 = vunpack.c.l.b16 %v419
    %v1748 = vunpack.c.h.b16 %v419
    %v1749 = vunpack.c.l.b16 %v420
    %v1750 = vunpack.c.h.b16 %v420
    %v1751 = vunpack.c.l.b16 %v421
    %v1752 = vunpack.c.h.b16 %v421
    %v1753 = vunpack.c.l.b16 %v422
    %v1754 = vunpack.c.h.b16 %v422
    %v1755 = vunpack.c.l.b16 %v423
    %v1756 = vunpack.c.h.b16 %v423
    %v1757 = vunpack.c.l.b16 %v424
    %v1758 = vunpack.c.h.b16 %v424
    %v1759 = vunpack.c.l.b16 %v425
    %v1760 = vunpack.c.h.b16 %v425
    %v1761 = vunpack.c.l.b16 %v426
    %v1762 = vunpack.c.h.b16 %v426
    %v1763 = vunpack.c.l.b16 %v427
    %v1764 = vunpack.c.h.b16 %v427
    %v1765 = vunpack.c.l.b16 %v428
    %v1766 = vunpack.c.h.b16 %v428
    %v1767 = vunpack.c.l.b16 %v429
    %v1768 = vunpack.c.h.b16 %v429
    %v1769 = vunpack.c.l.b16 %v430
    %v1770 = vunpack.c.h.b16 %v430
    %v1771 = vunpack.c.l.b16 %v431
    %v1772 = vunpack.c.h.b16 %v431
    %v1773 = vunpack.c.l.b16 %v432
    %v1774 = vunpack.c.h.b16 %v432
    %v1775 = vunpack.c.l.b16 %v433
    %v1776 = vunpack.c.h.b16 %v433
    %v1777 = vunpack.c.l.b16 %v434
    %v1778 = vunpack.c.h.b16 %v434
    %v1779 = vunpack.c.l.b16 %v435
    %v1780 = vunpack.c.h.b16 %v435
    %v1781 = vunpack.c.l.b16 %v436
    %v1782 = vunpack.c.h.b16 %v436
    %v1783 = vunpack.c.l.b16 %v437
    %v1784 = vunpack.c.h.b16 %v437
    %v1785 = vunpack.c.l.b16 %v438
    %v1786 = vunpack.c.h.b16 %v438
    %v1787 = vunpack.c.l.b16 %v439
    %v1788 = vunpack.c.h.b16 %v439
    %v1789 = vunpack.c.l.b16 %v440
    %v1790 = vunpack.c.h.b16 %v440
    %v1791 = vunpack.c.l.b16 %v441
    %v1792 = vunpack.c.h.b16 %v441
    %v1793 = vunpack.c.l.b16 %v442
    %v1794 = vunpack.c.h.b16 %v442
    %v1795 = vunpack.c.l.b16 %v443
    %v1796 = vunpack.c.h.b16 %v443
    %v1797 = vunpack.c.l.b16 %v444
    %v1798 = vunpack.c.h.b16 %v444
    %v1799 = vunpack.c.l.b16 %v445
    %v1800 = vunpack.c.h.b16 %v445
    %v1801 = vunpack.c.l.b16 %v446
    %v1802 = vunpack.c.h.b16 %v446
    %v1803 = vunpack.c.l.b16 %v447
    %v1804 = vunpack.c.h.b16 %v447
    %v1805 = vunpack.c.l.b16 %v448
    %v1806 = vunpack.c.h.b16 %v448
    %v1807 = vunpack.c.l.b16 %v449
    %v1808 = vunpack.c.h.b16 %v449
    %v1809 = vunpack.c.l.b16 %v450
    %v1810 = vunpack.c.h.b16 %v450
    %v1811 = vunpack.c.l.b16 %v451
    %v1812 = vunpack.c.h.b16 %v451
    %v1813 = vunpack.c.l.b16 %v452
    %v1814 = vunpack.c.h.b16 %v452
    %v1815 = vunpack.c.l.b16 %v453
    %v1816 = vunpack.c.h.b16 %v453
    %v1817 = vunpack.c.l.b16 %v454
    %v1818 = vunpack.c.h.b16 %v454
    %v1819 = vunpack.c.l.b16 %v455
    %v1820 = vunpack.c.h.b16 %v455
    %v1821 = vunpack.c.l.b16 %v456
    %v1822 = vunpack.c.h.b16 %v456
    %v1823 = vunpack.c.l.b16 %v457
    %v1824 = vunpack.c.h.b16 %v457
    %v1825 = vunpack.c.l.b16 %v458
    %v1826 = vunpack.c.h.b16 %v458
    %v1827 = vunpack.c.l.b16 %v459
    %v1828 = vunpack.c.h.b16 %v459
    %v1829 = vunpack.c.l.b16 %v460
    %v1830 = vunpack.c.h.b16 %v460
    %v1831 = vunpack.c.l.b16 %v461
    %v1832 = vunpack.c.h.b16 %v461
    %v1833 = vunpack.c.l.b16 %v462
    %v1834 = vunpack.c.h.b16 %v462
    %v1835 = vunpack.c.l.b16 %v463
    %v1836 = vunpack.c.h.b16 %v463
    %v1837 = vunpack.c.l.b16 %v464
    %v1838 = vunpack.c.h.b16 %v464
    %v1839 = vunpack.c.l.b16 %v465
    %v1840 = vunpack.c.h.b16 %v465
    %v1841 = vunpack.c.l.b16 %v466
    %v1842 = vunpack.c.h.b16 %v466
    %v1843 = vunpack.c.l.b16 %v467
    %v1844 = vunpack.c.h.b16 %v467
    %v1845 = vunpack.c.l.b16 %v468
    %v1846 = vunpack.c.h.b16 %v468
    %v1847 = vunpack.c.l.b16 %v469
    %v1848 = vunpack.c.h.b16 %v469
    %v1849 = vunpack.c.l.b16 %v470
    %v1850 = vunpack.c.h.b16 %v470
    %v1851 = vunpack.c.l.b16 %v471
    %v1852 = vunpack.c.h.b16 %v471
    %v1853 = vunpack.c.l.b16 %v472
    %v1854 = vunpack.c.h.b16 %v472
    %v1855 = vunpack.c.l.b16 %v473
    %v1856 = vunpack.c.h.b16 %v473
    %v1857 = vunpack.c.l.b16 %v474
    %v1858 = vunpack.c.h.b16 %v474
    %v1859 = vunpack.c.l.b16 %v475
    %v1860 = vunpack.c.h.b16 %v475
    %v1861 = vunpack.c.l.b16 %v476
    %v1862 = vunpack.c.h.b16 %v476
    %v1863 = vunpack.c.l.b16 %v477
    %v1864 = vunpack.c.h.b16 %v477
    %v1865 = vunpack.c.l.b16 %v478
    %v1866 = vunpack.c.h.b16 %v478
    %v1867 = vunpack.c.l.b16 %v479
    %v1868 = vunpack.c.h.b16 %v479
    %v1869 = vunpack.c.l.b16 %v480
    %v1870 = vunpack.c.h.b16 %v480
    %v1871 = vunpack.c.l.b16 %v481
    %v1872 = vunpack.c.h.b16 %v481
    %v1873 = vunpack.c.l.b16 %v482
    %v1874 = vunpack.c.h.b16 %v482
    %v1875 = vunpack.c.l.b16 %v483
    %v1876 = vunpack.c.h.b16 %v483
    %v1877 = vunpack.c.l.b16 %v484
    %v1878 = vunpack.c.h.b16 %v484
    %v1879 = vunpack.c.l.b16 %v485
    %v1880 = vunpack.c.h.b16 %v485
    %v1881 = vunpack.c.l.b16 %v486
    %v1882 = vunpack.c.h.b16 %v486
    %v1883 = vunpack.c.l.b16 %v487
    %v1884 = vunpack.c.h.b16 %v487
    %v1885 = vunpack.c.l.b16 %v488
    %v1886 = vunpack.c.h.b16 %v488
    %v1887 = vunpack.c.l.b16 %v489
    %v1888 = vunpack.c.h.b16 %v489
    %v1889 = vunpack.c.l.b16 %v490
    %v1890 = vunpack.c.h.b16 %v490
    %v1891 = vunpack.c.l.b16 %v491
    %v1892 = vunpack.c.h.b16 %v491
    %v1893 = vunpack.c.l.b16 %v492
    %v1894 = vunpack.c.h.b16 %v492
    %v1895 = vunpack.c.l.b16 %v493
    %v1896 = vunpack.c.h.b16 %v493
    %v1897 = vunpack.c.l.b16 %v494
    %v1898 = vunpack.c.h.b16 %v494
    %v1899 = vunpack.c.l.b16 %v495
    %v1900 = vunpack.c.h.b16 %v495
    %v1901 = vunpack.c.l.b16 %v496
    %v1902 = vunpack.c.h.b16 %v496
    %v1903 = vunpack.c.l.b16 %v497
    %v1904 = vunpack.c.h.b16 %v497
    %v1905 = vunpack.c.l.b16 %v498
    %v1906 = vunpack.c.h.b16 %v498
    %v1907 = vunpack.c.l.b16 %v499
    %v1908 = vunpack.c.h.b16 %v499
    %v1909 = vunpack.c.l.b16 %v500
    %v1910 = vunpack.c.h.b16 %v500
    %v1911 = vunpack.c.l.b16 %v501
    %v1912 = vunpack.c.h.b16 %v501
    %v1913 = vunpack.c.l.b16 %v502
    %v1914 = vunpack.c.h.b16 %v502
    %v1915 = vunpack.c.l.b16 %v503
    %v1916 = vunpack.c.h.b16 %v503
    %v1917 = vunpack.c.l.b16 %v504
    %v1918 = vunpack.c.h.b16 %v504
    %v1919 = vunpack.c.l.b16 %v505
    %v1920 = vunpack.c.h.b16 %v505
    %v1921 = vunpack.c.l.b16 %v506
    %v1922 = vunpack.c.h.b16 %v506
    %v1923 = vunpack.c.l.b16 %v507
    %v1924 = vunpack.c.h.b16 %v507
    %v1925 = vunpack.c.l.b16 %v508
    %v1926 = vunpack.c.h.b16 %v508
    %v1927 = vunpack.c.l.b16 %v509
    %v1928 = vunpack.c.h.b16 %v509
    %v1929 = vunpack.c.l.b16 %v510
    %v1930 = vunpack.c.h.b16 %v510
    %v1931 = vunpack.c.l.b16 %v511
    %v1932 = vunpack.c.h.b16 %v511
    %v1933 = vunpack.c.l.b16 %v512
    %v1934 = vunpack.c.h.b16 %v512
    %v1935 = vunpack.c.l.b16 %v513
    %v1936 = vunpack.c.h.b16 %v513
    %v1937 = vunpack.c.l.b16 %v514
    %v1938 = vunpack.c.h.b16 %v514
    %v1939 = vunpack.c.l.b16 %v515
    %v1940 = vunpack.c.h.b16 %v515
    %v1941 = vunpack.c.l.b16 %v516
    %v1942 = vunpack.c.h.b16 %v516
    %v1943 = vunpack.c.l.b16 %v517
    %v1944 = vunpack.c.h.b16 %v517
    %v1945 = vunpack.c.l.b16 %v518
    %v1946 = vunpack.c.h.b16 %v518
    %v1947 = vunpack.c.l.b16 %v519
    %v1948 = vunpack.c.h.b16 %v519
    %v1949 = vunpack.c.l.b16 %v520
    %v1950 = vunpack.c.h.b16 %v520
    %v1951 = vunpack.c.l.b16 %v521
    %v1952 = vunpack.c.h.b16 %v521
    %v1953 = vunpack.c.l.b16 %v522
    %v1954 = vunpack.c.h.b16 %v522
    %v1955 = vunpack.c.l.b16 %v523
    %v1956 = vunpack.c.h.b16 %v523
    %v1957 = vunpack.c.l.b16 %v524
    %v1958 = vunpack.c.h.b16 %v524
    %v1959 = vunpack.c.l.b16 %v525
    %v1960 = vunpack.c.h.b16 %v525
    %v1961 = vunpack.c.l.b16 %v526
    %v1962 = vunpack.c.h.b16 %v526
    %v1963 = vunpack.c.l.b16 %v527
    %v1964 = vunpack.c.h.b16 %v527
    %v1965 = vunpack.c.l.b16 %v528
    %v1966 = vunpack.c.h.b16 %v528
    %v1967 = vunpack.c.l.b16 %v529
    %v1968 = vunpack.c.h.b16 %v529
    %v1969 = vunpack.c.l.b16 %v530
    %v1970 = vunpack.c.h.b16 %v530
    %v1971 = vunpack.c.l.b16 %v531
    %v1972 = vunpack.c.h.b16 %v531
    %v1973 = vunpack.c.l.b16 %v532
    %v1974 = vunpack.c.h.b16 %v532
    %v1975 = vunpack.c.l.b16 %v533
    %v1976 = vunpack.c.h.b16 %v533
    %v1977 = vunpack.c.l.b16 %v534
    %v1978 = vunpack.c.h.b16 %v534
    %v1979 = vunpack.c.l.b16 %v535
    %v1980 = vunpack.c.h.b16 %v535
    %v1981 = vunpack.c.l.b16 %v536
    %v1982 = vunpack.c.h.b16 %v536
    %v1983 = vunpack.c.l.b16 %v537
    %v1984 = vunpack.c.h.b16 %v537
    %v1985 = vunpack.c.l.b16 %v538
    %v1986 = vunpack.c.h.b16 %v538
    %v1987 = vunpack.c.l.b16 %v539
    %v1988 = vunpack.c.h.b16 %v539
    %v1989 = vunpack.c.l.b16 %v540
    %v1990 = vunpack.c.h.b16 %v540
    %v1991 = vunpack.c.l.b16 %v541
    %v1992 = vunpack.c.h.b16 %v541
    %v1993 = vunpack.c.l.b16 %v542
    %v1994 = vunpack.c.h.b16 %v542
    %v1995 = vunpack.c.l.b16 %v543
    %v1996 = vunpack.c.h.b16 %v543
    %v1997 = vunpack.c.l.b16 %v544
    %v1998 = vunpack.c.h.b16 %v544
    %v1999 = vunpack.c.l.b16 %v545
    %v2000 = vunpack.c.h.b16 %v545
    %v2001 = vunpack.c.l.b16 %v546
    %v2002 = vunpack.c.h.b16 %v546
    %v2003 = vunpack.c.l.b16 %v547
    %v2004 = vunpack.c.h.b16 %v547
    %v2005 = vunpack.c.l.b16 %v548
    %v2006 = vunpack.c.h.b16 %v548
    %v2007 = vunpack.c.l.b16 %v549
    %v2008 = vunpack.c.h.b16 %v549
    %v2009 = vunpack.c.l.b16 %v550
    %v2010 = vunpack.c.h.b16 %v550
    %v2011 = vunpack.c.l.b16 %v551
    %v2012 = vunpack.c.h.b16 %v551
    %v2013 = vunpack.c.l.b16 %v552
    %v2014 = vunpack.c.h.b16 %v552
    %v2015 = vunpack.c.l.b16 %v553
    %v2016 = vunpack.c.h.b16 %v553
    %v2017 = vunpack.c.l.b16 %v554
    %v2018 = vunpack.c.h.b16 %v554
    %v2019 = vunpack.c.l.b16 %v555
    %v2020 = vunpack.c.h.b16 %v555
    %v2021 = vunpack.c.l.b16 %v556
    %v2022 = vunpack.c.h.b16 %v556
    %v2023 = vunpack.c.l.b16 %v557
    %v2024 = vunpack.c.h.b16 %v557
    %v2025 = vunpack.c.l.b16 %v558
    %v2026 = vunpack.c.h.b16 %v558
    %v2027 = vunpack.c.l.b16 %v559
    %v2028 = vunpack.c.h.b16 %v559
    %v2029 = vunpack.c.l.b16 %v560
    %v2030 = vunpack.c.h.b16 %v560
    %v2031 = vunpack.c.l.b16 %v561
    %v2032 = vunpack.c.h.b16 %v561
    %v2033 = vunpack.c.l.b16 %v562
    %v2034 = vunpack.c.h.b16 %v562
    %v2035 = vunpack.c.l.b16 %v563
    %v2036 = vunpack.c.h.b16 %v563
    %v2037 = vunpack.c.l.b16 %v564
    %v2038 = vunpack.c.h.b16 %v564
    %v2039 = vunpack.c.l.b16 %v565
    %v2040 = vunpack.c.h.b16 %v565
    %v2041 = vunpack.c.l.b16 %v566
    %v2042 = vunpack.c.h.b16 %v566
    %v2043 = vunpack.c.l.b16 %v567
    %v2044 = vunpack.c.h.b16 %v567
    %v2045 = vunpack.c.l.b16 %v568
    %v2046 = vunpack.c.h.b16 %v568
    %v2047 = vunpack.c.l.b16 %v569
    %v2048 = vunpack.c.h.b16 %v569
    %v2049 = vunpack.c.l.b16 %v570
    %v2050 = vunpack.c.h.b16 %v570
    %v2051 = vunpack.c.l.b16 %v571
    %v2052 = vunpack.c.h.b16 %v571
    %v2053 = vunpack.c.l.b16 %v572
    %v2054 = vunpack.c.h.b16 %v572
    %v2055 = vunpack.c.l.b16 %v573
    %v2056 = vunpack.c.h.b16 %v573
    %v2057 = vunpack.c.l.b16 %v574
    %v2058 = vunpack.c.h.b16 %v574
    %v2059 = vunpack.c.l.b16 %v575
    %v2060 = vunpack.c.h.b16 %v575
    %v2061 = vunpack.c.l.b16 %v576
    %v2062 = vunpack.c.h.b16 %v576
    %v2063 = vunpack.c.l.b16 %v577
    %v2064 = vunpack.c.h.b16 %v577
    %v2065 = vunpack.c.l.b16 %v578
    %v2066 = vunpack.c.h.b16 %v578
    %v2067 = vunpack.c.l.b16 %v579
    %v2068 = vunpack.c.h.b16 %v579
    %v2069 = vunpack.c.l.b16 %v580
    %v2070 = vunpack.c.h.b16 %v580
    %v2071 = vunpack.c.l.b16 %v581
    %v2072 = vunpack.c.h.b16 %v581
    %v2073 = vunpack.c.l.b16 %v582
    %v2074 = vunpack.c.h.b16 %v582
    %v2075 = vunpack.c.l.b16 %v583
    %v2076 = vunpack.c.h.b16 %v583
    %v2077 = vunpack.c.l.b16 %v584
    %v2078 = vunpack.c.h.b16 %v584
    %v2079 = vunpack.c.l.b16 %v585
    %v2080 = vunpack.c.h.b16 %v585
    %v2081 = vunpack.c.l.b16 %v586
    %v2082 = vunpack.c.h.b16 %v586
    %v2083 = vunpack.c.l.b16 %v587
    %v2084 = vunpack.c.h.b16 %v587
    %v2085 = vunpack.c.l.b16 %v588
    %v2086 = vunpack.c.h.b16 %v588
    %v2087 = vunpack.c.l.b16 %v589
    %v2088 = vunpack.c.h.b16 %v589
    %v2089 = vunpack.c.l.b16 %v590
    %v2090 = vunpack.c.h.b16 %v590
    %v2091 = vunpack.c.l.b16 %v591
    %v2092 = vunpack.c.h.b16 %v591
    %v2093 = vunpack.c.l.b16 %v592
    %v2094 = vunpack.c.h.b16 %v592
    %v2095 = vunpack.c.l.b16 %v593
    %v2096 = vunpack.c.h.b16 %v593
    %v2097 = vunpack.c.l.b16 %v594
    %v2098 = vunpack.c.h.b16 %v594
    %v2099 = vunpack.c.l.b16 %v595
    %v2100 = vunpack.c.h.b16 %v595
    %v2101 = vunpack.c.l.b16 %v596
    %v2102 = vunpack.c.h.b16 %v596
    %v2103 = vunpack.c.l.b16 %v597
    %v2104 = vunpack.c.h.b16 %v597
    %v2105 = vunpack.c.l.b16 %v598
    %v2106 = vunpack.c.h.b16 %v598
    %v2107 = vunpack.c.l.b16 %v599
    %v2108 = vunpack.c.h.b16 %v599
    %v2109 = vunpack.c.l.b16 %v600
    %v2110 = vunpack.c.h.b16 %v600
    %v2111 = vunpack.c.l.b16 %v601
    %v2112 = vunpack.c.h.b16 %v601
    %v2113 = vunpack.c.l.b16 %v602
    %v2114 = vunpack.c.h.b16 %v602
    %v2115 = vunpack.c.l.b16 %v603
    %v2116 = vunpack.c.h.b16 %v603
    %v2117 = vunpack.c.l.b16 %v604
    %v2118 = vunpack.c.h.b16 %v604
    %v2119 = vunpack.c.l.b16 %v605
    %v2120 = vunpack.c.h.b16 %v605
    %v2121 = vunpack.c.l.b16 %v606
    %v2122 = vunpack.c.h.b16 %v606
    %v2123 = vunpack.c.l.b16 %v607
    %v2124 = vunpack.c.h.b16 %v607
    %v2125 = vunpack.c.l.b16 %v608
    %v2126 = vunpack.c.h.b16 %v608
    %v2127 = vunpack.c.l.b16 %v609
    %v2128 = vunpack.c.h.b16 %v609
    %v2129 = vunpack.c.l.b16 %v610
    %v2130 = vunpack.c.h.b16 %v610
    %v2131 = vunpack.c.l.b16 %v611
    %v2132 = vunpack.c.h.b16 %v611
    %v2133 = vunpack.c.l.b16 %v612
    %v2134 = vunpack.c.h.b16 %v612
    %v2135 = vunpack.c.l.b16 %v613
    %v2136 = vunpack.c.h.b16 %v613
    %v2137 = vunpack.c.l.b16 %v614
    %v2138 = vunpack.c.h.b16 %v614
    %v2139 = vunpack.c.l.b16 %v615
    %v2140 = vunpack.c.h.b16 %v615
    %v2141 = vunpack.c.l.b16 %v616
    %v2142 = vunpack.c.h.b16 %v616
    %v2143 = vunpack.c.l.b16 %v617
    %v2144 = vunpack.c.h.b16 %v617
    %v2145 = vunpack.c.l.b16 %v618
    %v2146 = vunpack.c.h.b16 %v618
    %v2147 = vunpack.c.l.b16 %v619
    %v2148 = vunpack.c.h.b16 %v619
    %v2149 = vunpack.c.l.b16 %v620
    %v2150 = vunpack.c.h.b16 %v620
    %v2151 = vunpack.c.l.b16 %v621
    %v2152 = vunpack.c.h.b16 %v621
    %v2153 = vunpack.c.l.b16 %v622
    %v2154 = vunpack.c.h.b16 %v622
    %v2155 = vunpack.c.l.b16 %v623
    %v2156 = vunpack.c.h.b16 %v623
    %v2157 = vunpack.c.l.b16 %v624
    %v2158 = vunpack.c.h.b16 %v624
    %v2159 = vunpack.c.l.b16 %v625
    %v2160 = vunpack.c.h.b16 %v625
    %v2161 = vunpack.c.l.b16 %v626
    %v2162 = vunpack.c.h.b16 %v626
    %v2163 = vunpack.c.l.b16 %v627
    %v2164 = vunpack.c.h.b16 %v627
    %v2165 = vunpack.c.l.b16 %v628
    %v2166 = vunpack.c.h.b16 %v628
    %v2167 = vunpack.c.l.b16 %v629
    %v2168 = vunpack.c.h.b16 %v629
    %v2169 = vunpack.c.l.b16 %v630
    %v2170 = vunpack.c.h.b16 %v630
    %v2171 = vunpack.c.l.b16 %v631
    %v2172 = vunpack.c.h.b16 %v631
    %v2173 = vunpack.c.l.b16 %v632
    %v2174 = vunpack.c.h.b16 %v632
    %v2175 = vunpack.c.l.b16 %v633
    %v2176 = vunpack.c.h.b16 %v633
    %v2177 = vunpack.c.l.b16 %v634
    %v2178 = vunpack.c.h.b16 %v634
    %v2179 = vunpack.c.l.b16 %v635
    %v2180 = vunpack.c.h.b16 %v635
    %v2181 = vunpack.c.l.b16 %v636
    %v2182 = vunpack.c.h.b16 %v636
    %v2183 = vpack.c.b16 %v1163, %v1159
    %v2184 = vpack.c.b16 %v1164, %v1160
    %v2185 = vpack.c.b16 %v1165, %v1161
    %v2186 = vpack.c.b16 %v1166, %v1162
    %v2187 = vpack.c.b16 %v1171, %v1167
    %v2188 = vpack.c.b16 %v1172, %v1168
    %v2189 = vpack.c.b16 %v1173, %v1169
    %v2190 = vpack.c.b16 %v1174, %v1170
    %v2191 = vpack.c.b16 %v1179, %v1175
    %v2192 = vpack.c.b16 %v1180, %v1176
    %v2193 = vpack.c.b16 %v1181, %v1177
    %v2194 = vpack.c.b16 %v1182, %v1178
    %v2195 = vpack.c.b16 %v1187, %v1183
    %v2196 = vpack.c.b16 %v1188, %v1184
    %v2197 = vpack.c.b16 %v1189, %v1185
    %v2198 = vpack.c.b16 %v1190, %v1186
    %v2199 = vpack.c.b16 %v1195, %v1191
    %v2200 = vpack.c.b16 %v1196, %v1192
    %v2201 = vpack.c.b16 %v1197, %v1193
    %v2202 = vpack.c.b16 %v1198, %v1194
    %v2203 = vpack.c.b16 %v1203, %v1199
    %v2204 = vpack.c.b16 %v1204, %v1200
    %v2205 = vpack.c.b16 %v1205, %v1201
    %v2206 = vpack.c.b16 %v1206, %v1202
    %v2207 = vpack.c.b16 %v1211, %v1207
    %v2208 = vpack.c.b16 %v1212, %v1208
    %v2209 = vpack.c.b16 %v1213, %v1209
    %v2210 = vpack.c.b16 %v1214, %v1210
    %v2211 = vpack.c.b16 %v1219, %v1215
    %v2212 = vpack.c.b16 %v1220, %v1216
    %v2213 = vpack.c.b16 %v1221, %v1217
    %v2214 = vpack.c.b16 %v1222, %v1218
    %v2215 = vpack.c.b16 %v1227, %v1223
    %v2216 = vpack.c.b16 %v1228, %v1224
    %v2217 = vpack.c.b16 %v1229, %v1225
    %v2218 = vpack.c.b16 %v1230, %v1226
    %v2219 = vpack.c.b16 %v1235, %v1231
    %v2220 = vpack.c.b16 %v1236, %v1232
    %v2221 = vpack.c.b16 %v1237, %v1233
    %v2222 = vpack.c.b16 %v1238, %v1234
    %v2223 = vpack.c.b16 %v1243, %v1239
    %v2224 = vpack.c.b16 %v1244, %v1240
    %v2225 = vpack.c.b16 %v1245, %v1241
    %v2226 = vpack.c.b16 %v1246, %v1242
    %v2227 = vpack.c.b16 %v1251, %v1247
    %v2228 = vpack.c.b16 %v1252, %v1248
    %v2229 = vpack.c.b16 %v1253, %v1249
    %v2230 = vpack.c.b16 %v1254, %v1250
    %v2231 = vpack.c.b16 %v1259, %v1255
    %v2232 = vpack.c.b16 %v1260, %v1256
    %v2233 = vpack.c.b16 %v1261, %v1257
    %v2234 = vpack.c.b16 %v1262, %v1258
    %v2235 = vpack.c.b16 %v1267, %v1263
    %v2236 = vpack.c.b16 %v1268, %v1264
    %v2237 = vpack.c.b16 %v1269, %v1265
    %v2238 = vpack.c.b16 %v1270, %v1266
    %v2239 = vpack.c.b16 %v1275, %v1271
    %v2240 = vpack.c.b16 %v1276, %v1272
    %v2241 = vpack.c.b16 %v1277, %v1273
    %v2242 = vpack.c.b16 %v1278, %v1274
    %v2243 = vpack.c.b16 %v1283, %v1279
    %v2244 = vpack.c.b16 %v1284, %v1280
    %v2245 = vpack.c.b16 %v1285, %v1281
    %v2246 = vpack.c.b16 %v1286, %v1282
    %v2247 = vpack.c.b16 %v1291, %v1287
    %v2248 = vpack.c.b16 %v1292, %v1288
    %v2249 = vpack.c.b16 %v1293, %v1289
    %v2250 = vpack.c.b16 %v1294, %v1290
    %v2251 = vpack.c.b16 %v1299, %v1295
    %v2252 = vpack.c.b16 %v1300, %v1296
    %v2253 = vpack.c.b16 %v1301, %v1297
    %v2254 = vpack.c.b16 %v1302, %v1298
    %v2255 = vpack.c.b16 %v1307, %v1303
    %v2256 = vpack.c.b16 %v1308, %v1304
    %v2257 = vpack.c.b16 %v1309, %v1305
    %v2258 = vpack.c.b16 %v1310, %v1306
    %v2259 = vpack.c.b16 %v1315, %v1311
    %v2260 = vpack.c.b16 %v1316, %v1312
    %v2261 = vpack.c.b16 %v1317, %v1313
    %v2262 = vpack.c.b16 %v1318, %v1314
    %v2263 = vpack.c.b16 %v1323, %v1319
    %v2264 = vpack.c.b16 %v1324, %v1320
    %v2265 = vpack.c.b16 %v1325, %v1321
    %v2266 = vpack.c.b16 %v1326, %v1322
    %v2267 = vpack.c.b16 %v1331, %v1327
    %v2268 = vpack.c.b16 %v1332, %v1328
    %v2269 = vpack.c.b16 %v1333, %v1329
    %v2270 = vpack.c.b16 %v1334, %v1330
    %v2271 = vpack.c.b16 %v1339, %v1335
    %v2272 = vpack.c.b16 %v1340, %v1336
    %v2273 = vpack.c.b16 %v1341, %v1337
    %v2274 = vpack.c.b16 %v1342, %v1338
    %v2275 = vpack.c.b16 %v1347, %v1343
    %v2276 = vpack.c.b16 %v1348, %v1344
    %v2277 = vpack.c.b16 %v1349, %v1345
    %v2278 = vpack.c.b16 %v1350, %v1346
    %v2279 = vpack.c.b16 %v1355, %v1351
    %v2280 = vpack.c.b16 %v1356, %v1352
    %v2281 = vpack.c.b16 %v1357, %v1353
    %v2282 = vpack.c.b16 %v1358, %v1354
    %v2283 = vpack.c.b16 %v1363, %v1359
    %v2284 = vpack.c.b16 %v1364, %v1360
    %v2285 = vpack.c.b16 %v1365, %v1361
    %v2286 = vpack.c.b16 %v1366, %v1362
    %v2287 = vpack.c.b16 %v1371, %v1367
    %v2288 = vpack.c.b16 %v1372, %v1368
    %v2289 = vpack.c.b16 %v1373, %v1369
    %v2290 = vpack.c.b16 %v1374, %v1370
    %v2291 = vpack.c.b16 %v1379, %v1375
    %v2292 = vpack.c.b16 %v1380, %v1376
    %v2293 = vpack.c.b16 %v1381, %v1377
    %v2294 = vpack.c.b16 %v1382, %v1378
    %v2295 = vpack.c.b16 %v1387, %v1383
    %v2296 = vpack.c.b16 %v1388, %v1384
    %v2297 = vpack.c.b16 %v1389, %v1385
    %v2298 = vpack.c.b16 %v1390, %v1386
    %v2299 = vpack.c.b16 %v1395, %v1391
    %v2300 = vpack.c.b16 %v1396, %v1392
    %v2301 = vpack.c.b16 %v1397, %v1393
    %v2302 = vpack.c.b16 %v1398, %v1394
    %v2303 = vpack.c.b16 %v1403, %v1399
    %v2304 = vpack.c.b16 %v1404, %v1400
    %v2305 = vpack.c.b16 %v1405, %v1401
    %v2306 = vpack.c.b16 %v1406, %v1402
    %v2307 = vpack.c.b16 %v1411, %v1407
    %v2308 = vpack.c.b16 %v1412, %v1408
    %v2309 = vpack.c.b16 %v1413, %v1409
    %v2310 = vpack.c.b16 %v1414, %v1410
    %v2311 = vpack.c.b16 %v1419, %v1415
    %v2312 = vpack.c.b16 %v1420, %v1416
    %v2313 = vpack.c.b16 %v1421, %v1417
    %v2314 = vpack.c.b16 %v1422, %v1418
    %v2315 = vpack.c.b16 %v1427, %v1423
    %v2316 = vpack.c.b16 %v1428, %v1424
    %v2317 = vpack.c.b16 %v1429, %v1425
    %v2318 = vpack.c.b16 %v1430, %v1426
    %v2319 = vpack.c.b16 %v1435, %v1431
    %v2320 = vpack.c.b16 %v1436, %v1432
    %v2321 = vpack.c.b16 %v1437, %v1433
    %v2322 = vpack.c.b16 %v1438, %v1434
    %v2323 = vpack.c.b16 %v1443, %v1439
    %v2324 = vpack.c.b16 %v1444, %v1440
    %v2325 = vpack.c.b16 %v1445, %v1441
    %v2326 = vpack.c.b16 %v1446, %v1442
    %v2327 = vpack.c.b16 %v1451, %v1447
    %v2328 = vpack.c.b16 %v1452, %v1448
    %v2329 = vpack.c.b16 %v1453, %v1449
    %v2330 = vpack.c.b16 %v1454, %v1450
    %v2331 = vpack.c.b16 %v1459, %v1455
    %v2332 = vpack.c.b16 %v1460, %v1456
    %v2333 = vpack.c.b16 %v1461, %v1457
    %v2334 = vpack.c.b16 %v1462, %v1458
    %v2335 = vpack.c.b16 %v1467, %v1463
    %v2336 = vpack.c.b16 %v1468, %v1464
    %v2337 = vpack.c.b16 %v1469, %v1465
    %v2338 = vpack.c.b16 %v1470, %v1466
    %v2339 = vpack.c.b16 %v1475, %v1471
    %v2340 = vpack.c.b16 %v1476, %v1472
    %v2341 = vpack.c.b16 %v1477, %v1473
    %v2342 = vpack.c.b16 %v1478, %v1474
    %v2343 = vpack.c.b16 %v1483, %v1479
    %v2344 = vpack.c.b16 %v1484, %v1480
    %v2345 = vpack.c.b16 %v1485, %v1481
    %v2346 = vpack.c.b16 %v1486, %v1482
    %v2347 = vpack.c.b16 %v1491, %v1487
    %v2348 = vpack.c.b16 %v1492, %v1488
    %v2349 = vpack.c.b16 %v1493, %v1489
    %v2350 = vpack.c.b16 %v1494, %v1490
    %v2351 = vpack.c.b16 %v1499, %v1495
    %v2352 = vpack.c.b16 %v1500, %v1496
    %v2353 = vpack.c.b16 %v1501, %v1497
    %v2354 = vpack.c.b16 %v1502, %v1498
    %v2355 = vpack.c.b16 %v1507, %v1503
    %v2356 = vpack.c.b16 %v1508, %v1504
    %v2357 = vpack.c.b16 %v1509, %v1505
    %v2358 = vpack.c.b16 %v1510, %v1506
    %v2359 = vpack.c.b16 %v1515, %v1511
    %v2360 = vpack.c.b16 %v1516, %v1512
    %v2361 = vpack.c.b16 %v1517, %v1513
    %v2362 = vpack.c.b16 %v1518, %v1514
    %v2363 = vpack.c.b16 %v1523, %v1519
    %v2364 = vpack.c.b16 %v1524, %v1520
    %v2365 = vpack.c.b16 %v1525, %v1521
    %v2366 = vpack.c.b16 %v1526, %v1522
    %v2367 = vpack.c.b16 %v1531, %v1527
    %v2368 = vpack.c.b16 %v1532, %v1528
    %v2369 = vpack.c.b16 %v1533, %v1529
    %v2370 = vpack.c.b16 %v1534, %v1530
    %v2371 = vpack.c.b16 %v1539, %v1535
    %v2372 = vpack.c.b16 %v1540, %v1536
    %v2373 = vpack.c.b16 %v1541, %v1537
    %v2374 = vpack.c.b16 %v1542, %v1538
    %v2375 = vpack.c.b16 %v1547, %v1543
    %v2376 = vpack.c.b16 %v1548, %v1544
    %v2377 = vpack.c.b16 %v1549, %v1545
    %v2378 = vpack.c.b16 %v1550, %v1546
    %v2379 = vpack.c.b16 %v1555, %v1551
    %v2380 = vpack.c.b16 %v1556, %v1552
    %v2381 = vpack.c.b16 %v1557, %v1553
    %v2382 = vpack.c.b16 %v1558, %v1554
    %v2383 = vpack.c.b16 %v1563, %v1559
    %v2384 = vpack.c.b16 %v1564, %v1560
    %v2385 = vpack.c.b16 %v1565, %v1561
    %v2386 = vpack.c.b16 %v1566, %v1562
    %v2387 = vpack.c.b16 %v1571, %v1567
    %v2388 = vpack.c.b16 %v1572, %v1568
    %v2389 = vpack.c.b16 %v1573, %v1569
    %v2390 = vpack.c.b16 %v1574, %v1570
    %v2391 = vpack.c.b16 %v1579, %v1575
    %v2392 = vpack.c.b16 %v1580, %v1576
    %v2393 = vpack.c.b16 %v1581, %v1577
    %v2394 = vpack.c.b16 %v1582, %v1578
    %v2395 = vpack.c.b16 %v1587, %v1583
    %v2396 = vpack.c.b16 %v1588, %v1584
    %v2397 = vpack.c.b16 %v1589, %v1585
    %v2398 = vpack.c.b16 %v1590, %v1586
    %v2399 = vpack.c.b16 %v1595, %v1591
    %v2400 = vpack.c.b16 %v1596, %v1592
    %v2401 = vpack.c.b16 %v1597, %v1593
    %v2402 = vpack.c.b16 %v1598, %v1594
    %v2403 = vpack.c.b16 %v1603, %v1599
    %v2404 = vpack.c.b16 %v1604, %v1600
    %v2405 = vpack.c.b16 %v1605, %v1601
    %v2406 = vpack.c.b16 %v1606, %v1602
    %v2407 = vpack.c.b16 %v1611, %v1607
    %v2408 = vpack.c.b16 %v1612, %v1608
    %v2409 = vpack.c.b16 %v1613, %v1609
    %v2410 = vpack.c.b16 %v1614, %v1610
    %v2411 = vpack.c.b16 %v1619, %v1615
    %v2412 = vpack.c.b16 %v1620, %v1616
    %v2413 = vpack.c.b16 %v1621, %v1617
    %v2414 = vpack.c.b16 %v1622, %v1618
    %v2415 = vpack.c.b16 %v1627, %v1623
    %v2416 = vpack.c.b16 %v1628, %v1624
    %v2417 = vpack.c.b16 %v1629, %v1625
    %v2418 = vpack.c.b16 %v1630, %v1626
    %v2419 = vpack.c.b16 %v1635, %v1631
    %v2420 = vpack.c.b16 %v1636, %v1632
    %v2421 = vpack.c.b16 %v1637, %v1633
    %v2422 = vpack.c.b16 %v1638, %v1634
    %v2423 = vpack.c.b16 %v1643, %v1639
    %v2424 = vpack.c.b16 %v1644, %v1640
    %v2425 = vpack.c.b16 %v1645, %v1641
    %v2426 = vpack.c.b16 %v1646, %v1642
    %v2427 = vpack.c.b16 %v1651, %v1647
    %v2428 = vpack.c.b16 %v1652, %v1648
    %v2429 = vpack.c.b16 %v1653, %v1649
    %v2430 = vpack.c.b16 %v1654, %v1650
    %v2431 = vpack.c.b16 %v1659, %v1655
    %v2432 = vpack.c.b16 %v1660, %v1656
    %v2433 = vpack.c.b16 %v1661, %v1657
    %v2434 = vpack.c.b16 %v1662, %v1658
    %v2435 = vpack.c.b16 %v1667, %v1663
    %v2436 = vpack.c.b16 %v1668, %v1664
    %v2437 = vpack.c.b16 %v1669, %v1665
    %v2438 = vpack.c.b16 %v1670, %v1666
    %v2439 = vpack.c.b16 %v1675, %v1671
    %v2440 = vpack.c.b16 %v1676, %v1672
    %v2441 = vpack.c.b16 %v1677, %v1673
    %v2442 = vpack.c.b16 %v1678, %v1674
    %v2443 = vpack.c.b16 %v1683, %v1679
    %v2444 = vpack.c.b16 %v1684, %v1680
    %v2445 = vpack.c.b16 %v1685, %v1681
    %v2446 = vpack.c.b16 %v1686, %v1682
    %v2447 = vpack.c.b16 %v1691, %v1687
    %v2448 = vpack.c.b16 %v1692, %v1688
    %v2449 = vpack.c.b16 %v1693, %v1689
    %v2450 = vpack.c.b16 %v1694, %v1690
    %v2451 = vpack.c.b16 %v1699, %v1695
    %v2452 = vpack.c.b16 %v1700, %v1696
    %v2453 = vpack.c.b16 %v1701, %v1697
    %v2454 = vpack.c.b16 %v1702, %v1698
    %v2455 = vpack.c.b16 %v1707, %v1703
    %v2456 = vpack.c.b16 %v1708, %v1704
    %v2457 = vpack.c.b16 %v1709, %v1705
    %v2458 = vpack.c.b16 %v1710, %v1706
    %v2459 = vpack.c.b16 %v1715, %v1711
    %v2460 = vpack.c.b16 %v1716, %v1712
    %v2461 = vpack.c.b16 %v1717, %v1713
    %v2462 = vpack.c.b16 %v1718, %v1714
    %v2463 = vpack.c.b16 %v1723, %v1719
    %v2464 = vpack.c.b16 %v1724, %v1720
    %v2465 = vpack.c.b16 %v1725, %v1721
    %v2466 = vpack.c.b16 %v1726, %v1722
    %v2467 = vpack.c.b16 %v1731, %v1727
    %v2468 = vpack.c.b16 %v1732, %v1728
    %v2469 = vpack.c.b16 %v1733, %v1729
    %v2470 = vpack.c.b16 %v1734, %v1730
    %v2471 = vpack.c.b16 %v1739, %v1735
    %v2472 = vpack.c.b16 %v1740, %v1736
    %v2473 = vpack.c.b16 %v1741, %v1737
    %v2474 = vpack.c.b16 %v1742, %v1738
    %v2475 = vpack.c.b16 %v1747, %v1743
    %v2476 = vpack.c.b16 %v1748, %v1744
    %v2477 = vpack.c.b16 %v1749, %v1745
    %v2478 = vpack.c.b16 %v1750, %v1746
    %v2479 = vpack.c.b16 %v1755, %v1751
    %v2480 = vpack.c.b16 %v1756, %v1752
    %v2481 = vpack.c.b16 %v1757, %v1753
    %v2482 = vpack.c.b16 %v1758, %v1754
    %v2483 = vpack.c.b16 %v1763, %v1759
    %v2484 = vpack.c.b16 %v1764, %v1760
    %v2485 = vpack.c.b16 %v1765, %v1761
    %v2486 = vpack.c.b16 %v1766, %v1762
    %v2487 = vpack.c.b16 %v1771, %v1767
    %v2488 = vpack.c.b16 %v1772, %v1768
    %v2489 = vpack.c.b16 %v1773, %v1769
    %v2490 = vpack.c.b16 %v1774, %v1770
    %v2491 = vpack.c.b16 %v1779, %v1775
    %v2492 = vpack.c.b16 %v1780, %v1776
    %v2493 = vpack.c.b16 %v1781, %v1777
    %v2494 = vpack.c.b16 %v1782, %v1778
    %v2495 = vpack.c.b16 %v1787, %v1783
    %v2496 = vpack.c.b16 %v1788, %v1784
    %v2497 = vpack.c.b16 %v1789, %v1785
    %v2498 = vpack.c.b16 %v1790, %v1786
    %v2499 = vpack.c.b16 %v1795, %v1791
    %v2500 = vpack.c.b16 %v1796, %v1792
    %v2501 = vpack.c.b16 %v1797, %v1793
    %v2502 = vpack.c.b16 %v1798, %v1794
    %v2503 = vpack.c.b16 %v1803, %v1799
    %v2504 = vpack.c.b16 %v1804, %v1800
    %v2505 = vpack.c.b16 %v1805, %v1801
    %v2506 = vpack.c.b16 %v1806, %v1802
    %v2507 = vpack.c.b16 %v1811, %v1807
    %v2508 = vpack.c.b16 %v1812, %v1808
    %v2509 = vpack.c.b16 %v1813, %v1809
    %v2510 = vpack.c.b16 %v1814, %v1810
    %v2511 = vpack.c.b16 %v1819, %v1815
    %v2512 = vpack.c.b16 %v1820, %v1816
    %v2513 = vpack.c.b16 %v1821, %v1817
    %v2514 = vpack.c.b16 %v1822, %v1818
    %v2515 = vpack.c.b16 %v1827, %v1823
    %v2516 = vpack.c.b16 %v1828, %v1824
    %v2517 = vpack.c.b16 %v1829, %v1825
    %v2518 = vpack.c.b16 %v1830, %v1826
    %v2519 = vpack.c.b16 %v1835, %v1831
    %v2520 = vpack.c.b16 %v1836, %v1832
    %v2521 = vpack.c.b16 %v1837, %v1833
    %v2522 = vpack.c.b16 %v1838, %v1834
    %v2523 = vpack.c.b16 %v1843, %v1839
    %v2524 = vpack.c.b16 %v1844, %v1840
    %v2525 = vpack.c.b16 %v1845, %v1841
    %v2526 = vpack.c.b16 %v1846, %v1842
    %v2527 = vpack.c.b16 %v1851, %v1847
    %v2528 = vpack.c.b16 %v1852, %v1848
    %v2529 = vpack.c.b16 %v1853, %v1849
    %v2530 = vpack.c.b16 %v1854, %v1850
    %v2531 = vpack.c.b16 %v1859, %v1855
    %v2532 = vpack.c.b16 %v1860, %v1856
    %v2533 = vpack.c.b16 %v1861, %v1857
    %v2534 = vpack.c.b16 %v1862, %v1858
    %v2535 = vpack.c.b16 %v1867, %v1863
    %v2536 = vpack.c.b16 %v1868, %v1864
    %v2537 = vpack.c.b16 %v1869, %v1865
    %v2538 = vpack.c.b16 %v1870, %v1866
    %v2539 = vpack.c.b16 %v1875, %v1871
    %v2540 = vpack.c.b16 %v1876, %v1872
    %v2541 = vpack.c.b16 %v1877, %v1873
    %v2542 = vpack.c.b16 %v1878, %v1874
    %v2543 = vpack.c.b16 %v1883, %v1879
    %v2544 = vpack.c.b16 %v1884, %v1880
    %v2545 = vpack.c.b16 %v1885, %v1881
    %v2546 = vpack.c.b16 %v1886, %v1882
    %v2547 = vpack.c.b16 %v1891, %v1887
    %v2548 = vpack.c.b16 %v1892, %v1888
    %v2549 = vpack.c.b16 %v1893, %v1889
    %v2550 = vpack.c.b16 %v1894, %v1890
    %v2551 = vpack.c.b16 %v1899, %v1895
    %v2552 = vpack.c.b16 %v1900, %v1896
    %v2553 = vpack.c.b16 %v1901, %v1897
    %v2554 = vpack.c.b16 %v1902, %v1898
    %v2555 = vpack.c.b16 %v1907, %v1903
    %v2556 = vpack.c.b16 %v1908, %v1904
    %v2557 = vpack.c.b16 %v1909, %v1905
    %v2558 = vpack.c.b16 %v1910, %v1906
    %v2559 = vpack.c.b16 %v1915, %v1911
    %v2560 = vpack.c.b16 %v1916, %v1912
    %v2561 = vpack.c.b16 %v1917, %v1913
    %v2562 = vpack.c.b16 %v1918, %v1914
    %v2563 = vpack.c.b16 %v1923, %v1919
    %v2564 = vpack.c.b16 %v1924, %v1920
    %v2565 = vpack.c.b16 %v1925, %v1921
    %v2566 = vpack.c.b16 %v1926, %v1922
    %v2567 = vpack.c.b16 %v1931, %v1927
    %v2568 = vpack.c.b16 %v1932, %v1928
    %v2569 = vpack.c.b16 %v1933, %v1929
    %v2570 = vpack.c.b16 %v1934, %v1930
    %v2571 = vpack.c.b16 %v1939, %v1935
    %v2572 = vpack.c.b16 %v1940, %v1936
    %v2573 = vpack.c.b16 %v1941, %v1937
    %v2574 = vpack.c.b16 %v1942, %v1938
    %v2575 = vpack.c.b16 %v1947, %v1943
    %v2576 = vpack.c.b16 %v1948, %v1944
    %v2577 = vpack.c.b16 %v1949, %v1945
    %v2578 = vpack.c.b16 %v1950, %v1946
    %v2579 = vpack.c.b16 %v1955, %v1951
    %v2580 = vpack.c.b16 %v1956, %v1952
    %v2581 = vpack.c.b16 %v1957, %v1953
    %v2582 = vpack.c.b16 %v1958, %v1954
    %v2583 = vpack.c.b16 %v1963, %v1959
    %v2584 = vpack.c.b16 %v1964, %v1960
    %v2585 = vpack.c.b16 %v1965, %v1961
    %v2586 = vpack.c.b16 %v1966, %v1962
    %v2587 = vpack.c.b16 %v1971, %v1967
    %v2588 = vpack.c.b16 %v1972, %v1968
    %v2589 = vpack.c.b16 %v1973, %v1969
    %v2590 = vpack.c.b16 %v1974, %v1970
    %v2591 = vpack.c.b16 %v1979, %v1975
    %v2592 = vpack.c.b16 %v1980, %v1976
    %v2593 = vpack.c.b16 %v1981, %v1977
    %v2594 = vpack.c.b16 %v1982, %v1978
    %v2595 = vpack.c.b16 %v1987, %v1983
    %v2596 = vpack.c.b16 %v1988, %v1984
    %v2597 = vpack.c.b16 %v1989, %v1985
    %v2598 = vpack.c.b16 %v1990, %v1986
    %v2599 = vpack.c.b16 %v1995, %v1991
    %v2600 = vpack.c.b16 %v1996, %v1992
    %v2601 = vpack.c.b16 %v1997, %v1993
    %v2602 = vpack.c.b16 %v1998, %v1994
    %v2603 = vpack.c.b16 %v2003, %v1999
    %v2604 = vpack.c.b16 %v2004, %v2000
    %v2605 = vpack.c.b16 %v2005, %v2001
    %v2606 = vpack.c.b16 %v2006, %v2002
    %v2607 = vpack.c.b16 %v2011, %v2007
    %v2608 = vpack.c.b16 %v2012, %v2008
    %v2609 = vpack.c.b16 %v2013, %v2009
    %v2610 = vpack.c.b16 %v2014, %v2010
    %v2611 = vpack.c.b16 %v2019, %v2015
    %v2612 = vpack.c.b16 %v2020, %v2016
    %v2613 = vpack.c.b16 %v2021, %v2017
    %v2614 = vpack.c.b16 %v2022, %v2018
    %v2615 = vpack.c.b16 %v2027, %v2023
    %v2616 = vpack.c.b16 %v2028, %v2024
    %v2617 = vpack.c.b16 %v2029, %v2025
    %v2618 = vpack.c.b16 %v2030, %v2026
    %v2619 = vpack.c.b16 %v2035, %v2031
    %v2620 = vpack.c.b16 %v2036, %v2032
    %v2621 = vpack.c.b16 %v2037, %v2033
    %v2622 = vpack.c.b16 %v2038, %v2034
    %v2623 = vpack.c.b16 %v2043, %v2039
    %v2624 = vpack.c.b16 %v2044, %v2040
    %v2625 = vpack.c.b16 %v2045, %v2041
    %v2626 = vpack.c.b16 %v2046, %v2042
    %v2627 = vpack.c.b16 %v2051, %v2047
    %v2628 = vpack.c.b16 %v2052, %v2048
    %v2629 = vpack.c.b16 %v2053, %v2049
    %v2630 = vpack.c.b16 %v2054, %v2050
    %v2631 = vpack.c.b16 %v2059, %v2055
    %v2632 = vpack.c.b16 %v2060, %v2056
    %v2633 = vpack.c.b16 %v2061, %v2057
    %v2634 = vpack.c.b16 %v2062, %v2058
    %v2635 = vpack.c.b16 %v2067, %v2063
    %v2636 = vpack.c.b16 %v2068, %v2064
    %v2637 = vpack.c.b16 %v2069, %v2065
    %v2638 = vpack.c.b16 %v2070, %v2066
    %v2639 = vpack.c.b16 %v2075, %v2071
    %v2640 = vpack.c.b16 %v2076, %v2072
    %v2641 = vpack.c.b16 %v2077, %v2073
    %v2642 = vpack.c.b16 %v2078, %v2074
    %v2643 = vpack.c.b16 %v2083, %v2079
    %v2644 = vpack.c.b16 %v2084, %v2080
    %v2645 = vpack.c.b16 %v2085, %v2081
    %v2646 = vpack.c.b16 %v2086, %v2082
    %v2647 = vpack.c.b16 %v2091, %v2087
    %v2648 = vpack.c.b16 %v2092, %v2088
    %v2649 = vpack.c.b16 %v2093, %v2089
    %v2650 = vpack.c.b16 %v2094, %v2090
    %v2651 = vpack.c.b16 %v2099, %v2095
    %v2652 = vpack.c.b16 %v2100, %v2096
    %v2653 = vpack.c.b16 %v2101, %v2097
    %v2654 = vpack.c.b16 %v2102, %v2098
    %v2655 = vpack.c.b16 %v2107, %v2103
    %v2656 = vpack.c.b16 %v2108, %v2104
    %v2657 = vpack.c.b16 %v2109, %v2105
    %v2658 = vpack.c.b16 %v2110, %v2106
    %v2659 = vpack.c.b16 %v2115, %v2111
    %v2660 = vpack.c.b16 %v2116, %v2112
    %v2661 = vpack.c.b16 %v2117, %v2113
    %v2662 = vpack.c.b16 %v2118, %v2114
    %v2663 = vpack.c.b16 %v2123, %v2119
    %v2664 = vpack.c.b16 %v2124, %v2120
    %v2665 = vpack.c.b16 %v2125, %v2121
    %v2666 = vpack.c.b16 %v2126, %v2122
    %v2667 = vpack.c.b16 %v2131, %v2127
    %v2668 = vpack.c.b16 %v2132, %v2128
    %v2669 = vpack.c.b16 %v2133, %v2129
    %v2670 = vpack.c.b16 %v2134, %v2130
    %v2671 = vpack.c.b16 %v2139, %v2135
    %v2672 = vpack.c.b16 %v2140, %v2136
    %v2673 = vpack.c.b16 %v2141, %v2137
    %v2674 = vpack.c.b16 %v2142, %v2138
    %v2675 = vpack.c.b16 %v2147, %v2143
    %v2676 = vpack.c.b16 %v2148, %v2144
    %v2677 = vpack.c.b16 %v2149, %v2145
    %v2678 = vpack.c.b16 %v2150, %v2146
    %v2679 = vpack.c.b16 %v2155, %v2151
    %v2680 = vpack.c.b16 %v2156, %v2152
    %v2681 = vpack.c.b16 %v2157, %v2153
    %v2682 = vpack.c.b16 %v2158, %v2154
    %v2683 = vpack.c.b16 %v2163, %v2159
    %v2684 = vpack.c.b16 %v2164, %v2160
    %v2685 = vpack.c.b16 %v2165, %v2161
    %v2686 = vpack.c.b16 %v2166, %v2162
    %v2687 = vpack.c.b16 %v2171, %v2167
    %v2688 = vpack.c.b16 %v2172, %v2168
    %v2689 = vpack.c.b16 %v2173, %v2169
    %v2690 = vpack.c.b16 %v2174, %v2170
    %v2691 = vpack.c.b16 %v2179, %v2175
    %v2692 = vpack.c.b16 %v2180, %v2176
    %v2693 = vpack.c.b16 %v2181, %v2177
    %v2694 = vpack.c.b16 %v2182, %v2178
    %3207 = vmatpush.bf16.msra.mxu0 %v2211
    %3208 = vmatpush.bf16.msra.mxu0 %v2207
    %3209 = vmatpush.bf16.msra.mxu0 %v2203
    %3210 = vmatpush.bf16.msra.mxu0 %v2199
    %3211 = vmatpush.bf16.msra.mxu0 %v2195
    %3212 = vmatpush.bf16.msra.mxu0 %v2191
    %3213 = vmatpush.bf16.msra.mxu0 %v2187
    %3214 = vmatpush.bf16.msra.mxu0 %v2183
    %3215 = vmatmul.bf16.gmra.mxu0 %v109
    %v3216 = vpop.f32.mrf.mxu0
    %v3217 = vadd.f32 %v639, %v3216
    %v3218 = vpop.f32.mrf.mxu0
    %3219 = vdwg.mxu0
    %3220 = vmatpush.bf16.msra.mxu0 %v2243
    %3221 = vmatpush.bf16.msra.mxu0 %v2239
    %3222 = vmatpush.bf16.msra.mxu0 %v2235
    %3223 = vmatpush.bf16.msra.mxu0 %v2231
    %3224 = vmatpush.bf16.msra.mxu0 %v2227
    %3225 = vmatpush.bf16.msra.mxu0 %v2223
    %3226 = vmatpush.bf16.msra.mxu0 %v2219
    %3227 = vmatpush.bf16.msra.mxu0 %v2215
    %3228 = vmatmul.bf16.gmra.mxu0 %v110
    %v3229 = vpop.f32.mrf.mxu0
    %v3230 = vadd.f32 %v3217, %v3229
    %v3231 = vpop.f32.mrf.mxu0
    %3232 = vdwg.mxu0
    %3233 = vmatpush.bf16.msra.mxu0 %v2275
    %3234 = vmatpush.bf16.msra.mxu0 %v2271
    %3235 = vmatpush.bf16.msra.mxu0 %v2267
    %3236 = vmatpush.bf16.msra.mxu0 %v2263
    %3237 = vmatpush.bf16.msra.mxu0 %v2259
    %3238 = vmatpush.bf16.msra.mxu0 %v2255
    %3239 = vmatpush.bf16.msra.mxu0 %v2251
    %3240 = vmatpush.bf16.msra.mxu0 %v2247
    %3241 = vmatmul.bf16.gmra.mxu0 %v111
    %v3242 = vpop.f32.mrf.mxu0
    %v3243 = vadd.f32 %v3230, %v3242
    %v3244 = vpop.f32.mrf.mxu0
    %3245 = vdwg.mxu0
    %3246 = vmatpush.bf16.msra.mxu0 %v2307
    %3247 = vmatpush.bf16.msra.mxu0 %v2303
    %3248 = vmatpush.bf16.msra.mxu0 %v2299
    %3249 = vmatpush.bf16.msra.mxu0 %v2295
    %3250 = vmatpush.bf16.msra.mxu0 %v2291
    %3251 = vmatpush.bf16.msra.mxu0 %v2287
    %3252 = vmatpush.bf16.msra.mxu0 %v2283
    %3253 = vmatpush.bf16.msra.mxu0 %v2279
    %3254 = vmatmul.bf16.gmra.mxu0 %v112
    %v3255 = vpop.f32.mrf.mxu0
    %v3256 = vadd.f32 %v3243, %v3255
    %v3257 = vpop.f32.mrf.mxu0
    %3258 = vdwg.mxu0
    %3259 = vmatpush.bf16.msra.mxu0 %v2339
    %3260 = vmatpush.bf16.msra.mxu0 %v2335
    %3261 = vmatpush.bf16.msra.mxu0 %v2331
    %3262 = vmatpush.bf16.msra.mxu0 %v2327
    %3263 = vmatpush.bf16.msra.mxu0 %v2323
    %3264 = vmatpush.bf16.msra.mxu0 %v2319
    %3265 = vmatpush.bf16.msra.mxu0 %v2315
    %3266 = vmatpush.bf16.msra.mxu0 %v2311
    %3267 = vmatmul.bf16.gmra.mxu0 %v113
    %v3268 = vpop.f32.mrf.mxu0
    %v3269 = vadd.f32 %v3256, %v3268
    %v3270 = vpop.f32.mrf.mxu0
    %3271 = vdwg.mxu0
    %3272 = vmatpush.bf16.msra.mxu0 %v2371
    %3273 = vmatpush.bf16.msra.mxu0 %v2367
    %3274 = vmatpush.bf16.msra.mxu0 %v2363
    %3275 = vmatpush.bf16.msra.mxu0 %v2359
    %3276 = vmatpush.bf16.msra.mxu0 %v2355
    %3277 = vmatpush.bf16.msra.mxu0 %v2351
    %3278 = vmatpush.bf16.msra.mxu0 %v2347
    %3279 = vmatpush.bf16.msra.mxu0 %v2343
    %3280 = vmatmul.bf16.gmra.mxu0 %v114
    %v3281 = vpop.f32.mrf.mxu0
    %v3282 = vadd.f32 %v3269, %v3281
    %v3283 = vpop.f32.mrf.mxu0
    %3284 = vdwg.mxu0
    %3285 = vmatpush.bf16.msra.mxu0 %v2403
    %3286 = vmatpush.bf16.msra.mxu0 %v2399
    %3287 = vmatpush.bf16.msra.mxu0 %v2395
    %3288 = vmatpush.bf16.msra.mxu0 %v2391
    %3289 = vmatpush.bf16.msra.mxu0 %v2387
    %3290 = vmatpush.bf16.msra.mxu0 %v2383
    %3291 = vmatpush.bf16.msra.mxu0 %v2379
    %3292 = vmatpush.bf16.msra.mxu0 %v2375
    %3293 = vmatmul.bf16.gmra.mxu0 %v115
    %v3294 = vpop.f32.mrf.mxu0
    %v3295 = vadd.f32 %v3282, %v3294
    %v3296 = vpop.f32.mrf.mxu0
    %3297 = vdwg.mxu0
    %3298 = vmatpush.bf16.msra.mxu0 %v2435
    %3299 = vmatpush.bf16.msra.mxu0 %v2431
    %3300 = vmatpush.bf16.msra.mxu0 %v2427
    %3301 = vmatpush.bf16.msra.mxu0 %v2423
    %3302 = vmatpush.bf16.msra.mxu0 %v2419
    %3303 = vmatpush.bf16.msra.mxu0 %v2415
    %3304 = vmatpush.bf16.msra.mxu0 %v2411
    %3305 = vmatpush.bf16.msra.mxu0 %v2407
    %3306 = vmatmul.bf16.gmra.mxu0 %v116
    %v3307 = vpop.f32.mrf.mxu0
    %v3308 = vadd.f32 %v3295, %v3307
    %v3309 = vpop.f32.mrf.mxu0
    %3310 = vdwg.mxu0
    %3311 = vmatpush.bf16.msra.mxu0 %v2467
    %3312 = vmatpush.bf16.msra.mxu0 %v2463
    %3313 = vmatpush.bf16.msra.mxu0 %v2459
    %3314 = vmatpush.bf16.msra.mxu0 %v2455
    %3315 = vmatpush.bf16.msra.mxu0 %v2451
    %3316 = vmatpush.bf16.msra.mxu0 %v2447
    %3317 = vmatpush.bf16.msra.mxu0 %v2443
    %3318 = vmatpush.bf16.msra.mxu0 %v2439
    %3319 = vmatmul.bf16.gmra.mxu0 %v117
    %v3320 = vpop.f32.mrf.mxu0
    %v3321 = vadd.f32 %v3308, %v3320
    %v3322 = vpop.f32.mrf.mxu0
    %3323 = vdwg.mxu0
    %3324 = vmatpush.bf16.msra.mxu0 %v2499
    %3325 = vmatpush.bf16.msra.mxu0 %v2495
    %3326 = vmatpush.bf16.msra.mxu0 %v2491
    %3327 = vmatpush.bf16.msra.mxu0 %v2487
    %3328 = vmatpush.bf16.msra.mxu0 %v2483
    %3329 = vmatpush.bf16.msra.mxu0 %v2479
    %3330 = vmatpush.bf16.msra.mxu0 %v2475
    %3331 = vmatpush.bf16.msra.mxu0 %v2471
    %3332 = vmatmul.bf16.gmra.mxu0 %v118
    %v3333 = vpop.f32.mrf.mxu0
    %v3334 = vadd.f32 %v3321, %v3333
    %v3335 = vpop.f32.mrf.mxu0
    %3336 = vdwg.mxu0
    %3337 = vmatpush.bf16.msra.mxu0 %v2531
    %3338 = vmatpush.bf16.msra.mxu0 %v2527
    %3339 = vmatpush.bf16.msra.mxu0 %v2523
    %3340 = vmatpush.bf16.msra.mxu0 %v2519
    %3341 = vmatpush.bf16.msra.mxu0 %v2515
    %3342 = vmatpush.bf16.msra.mxu0 %v2511
    %3343 = vmatpush.bf16.msra.mxu0 %v2507
    %3344 = vmatpush.bf16.msra.mxu0 %v2503
    %3345 = vmatmul.bf16.gmra.mxu0 %v119
    %v3346 = vpop.f32.mrf.mxu0
    %v3347 = vadd.f32 %v3334, %v3346
    %v3348 = vpop.f32.mrf.mxu0
    %3349 = vdwg.mxu0
    %3350 = vmatpush.bf16.msra.mxu0 %v2563
    %3351 = vmatpush.bf16.msra.mxu0 %v2559
    %3352 = vmatpush.bf16.msra.mxu0 %v2555
    %3353 = vmatpush.bf16.msra.mxu0 %v2551
    %3354 = vmatpush.bf16.msra.mxu0 %v2547
    %3355 = vmatpush.bf16.msra.mxu0 %v2543
    %3356 = vmatpush.bf16.msra.mxu0 %v2539
    %3357 = vmatpush.bf16.msra.mxu0 %v2535
    %3358 = vmatmul.bf16.gmra.mxu0 %v120
    %v3359 = vpop.f32.mrf.mxu0
    %v3360 = vadd.f32 %v3347, %v3359
    %v3361 = vpop.f32.mrf.mxu0
    %3362 = vdwg.mxu0
    %3363 = vmatpush.bf16.msra.mxu0 %v2595
    %3364 = vmatpush.bf16.msra.mxu0 %v2591
    %3365 = vmatpush.bf16.msra.mxu0 %v2587
    %3366 = vmatpush.bf16.msra.mxu0 %v2583
    %3367 = vmatpush.bf16.msra.mxu0 %v2579
    %3368 = vmatpush.bf16.msra.mxu0 %v2575
    %3369 = vmatpush.bf16.msra.mxu0 %v2571
    %3370 = vmatpush.bf16.msra.mxu0 %v2567
    %3371 = vmatmul.bf16.gmra.mxu0 %v121
    %v3372 = vpop.f32.mrf.mxu0
    %v3373 = vadd.f32 %v3360, %v3372
    %v3374 = vpop.f32.mrf.mxu0
    %3375 = vdwg.mxu0
    %3376 = vmatpush.bf16.msra.mxu0 %v2627
    %3377 = vmatpush.bf16.msra.mxu0 %v2623
    %3378 = vmatpush.bf16.msra.mxu0 %v2619
    %3379 = vmatpush.bf16.msra.mxu0 %v2615
    %3380 = vmatpush.bf16.msra.mxu0 %v2611
    %3381 = vmatpush.bf16.msra.mxu0 %v2607
    %3382 = vmatpush.bf16.msra.mxu0 %v2603
    %3383 = vmatpush.bf16.msra.mxu0 %v2599
    %3384 = vmatmul.bf16.gmra.mxu0 %v122
    %v3385 = vpop.f32.mrf.mxu0
    %v3386 = vadd.f32 %v3373, %v3385
    %v3387 = vpop.f32.mrf.mxu0
    %3388 = vdwg.mxu0
    %3389 = vmatpush.bf16.msra.mxu0 %v2659
    %3390 = vmatpush.bf16.msra.mxu0 %v2655
    %3391 = vmatpush.bf16.msra.mxu0 %v2651
    %3392 = vmatpush.bf16.msra.mxu0 %v2647
    %3393 = vmatpush.bf16.msra.mxu0 %v2643
    %3394 = vmatpush.bf16.msra.mxu0 %v2639
    %3395 = vmatpush.bf16.msra.mxu0 %v2635
    %3396 = vmatpush.bf16.msra.mxu0 %v2631
    %3397 = vmatmul.bf16.gmra.mxu0 %v123
    %v3398 = vpop.f32.mrf.mxu0
    %v3399 = vadd.f32 %v3386, %v3398
    %v3400 = vpop.f32.mrf.mxu0
    %3401 = vdwg.mxu0
    %3402 = vmatpush.bf16.msra.mxu0 %v2691
    %3403 = vmatpush.bf16.msra.mxu0 %v2687
    %3404 = vmatpush.bf16.msra.mxu0 %v2683
    %3405 = vmatpush.bf16.msra.mxu0 %v2679
    %3406 = vmatpush.bf16.msra.mxu0 %v2675
    %3407 = vmatpush.bf16.msra.mxu0 %v2671
    %3408 = vmatpush.bf16.msra.mxu0 %v2667
    %3409 = vmatpush.bf16.msra.mxu0 %v2663
    %3410 = vmatmul.bf16.gmra.mxu0 %v124
    %v3411 = vpop.f32.mrf.mxu0
    %v3412 = vadd.f32 %v3399, %v3411
    %v3413 = vpop.f32.mrf.mxu0
    %3414 = vdwg.mxu0
    %3415 = vmatpush.bf16.msra.mxu0 %v2212
    %3416 = vmatpush.bf16.msra.mxu0 %v2208
    %3417 = vmatpush.bf16.msra.mxu0 %v2204
    %3418 = vmatpush.bf16.msra.mxu0 %v2200
    %3419 = vmatpush.bf16.msra.mxu0 %v2196
    %3420 = vmatpush.bf16.msra.mxu0 %v2192
    %3421 = vmatpush.bf16.msra.mxu0 %v2188
    %3422 = vmatpush.bf16.msra.mxu0 %v2184
    %3423 = vmatmul.bf16.gmra.mxu0 %v109
    %v3424 = vpop.f32.mrf.mxu0
    %v3425 = vadd.f32 %v640, %v3424
    %v3426 = vpop.f32.mrf.mxu0
    %3427 = vdwg.mxu0
    %3428 = vmatpush.bf16.msra.mxu0 %v2244
    %3429 = vmatpush.bf16.msra.mxu0 %v2240
    %3430 = vmatpush.bf16.msra.mxu0 %v2236
    %3431 = vmatpush.bf16.msra.mxu0 %v2232
    %3432 = vmatpush.bf16.msra.mxu0 %v2228
    %3433 = vmatpush.bf16.msra.mxu0 %v2224
    %3434 = vmatpush.bf16.msra.mxu0 %v2220
    %3435 = vmatpush.bf16.msra.mxu0 %v2216
    %3436 = vmatmul.bf16.gmra.mxu0 %v110
    %v3437 = vpop.f32.mrf.mxu0
    %v3438 = vadd.f32 %v3425, %v3437
    %v3439 = vpop.f32.mrf.mxu0
    %3440 = vdwg.mxu0
    %3441 = vmatpush.bf16.msra.mxu0 %v2276
    %3442 = vmatpush.bf16.msra.mxu0 %v2272
    %3443 = vmatpush.bf16.msra.mxu0 %v2268
    %3444 = vmatpush.bf16.msra.mxu0 %v2264
    %3445 = vmatpush.bf16.msra.mxu0 %v2260
    %3446 = vmatpush.bf16.msra.mxu0 %v2256
    %3447 = vmatpush.bf16.msra.mxu0 %v2252
    %3448 = vmatpush.bf16.msra.mxu0 %v2248
    %3449 = vmatmul.bf16.gmra.mxu0 %v111
    %v3450 = vpop.f32.mrf.mxu0
    %v3451 = vadd.f32 %v3438, %v3450
    %v3452 = vpop.f32.mrf.mxu0
    %3453 = vdwg.mxu0
    %3454 = vmatpush.bf16.msra.mxu0 %v2308
    %3455 = vmatpush.bf16.msra.mxu0 %v2304
    %3456 = vmatpush.bf16.msra.mxu0 %v2300
    %3457 = vmatpush.bf16.msra.mxu0 %v2296
    %3458 = vmatpush.bf16.msra.mxu0 %v2292
    %3459 = vmatpush.bf16.msra.mxu0 %v2288
    %3460 = vmatpush.bf16.msra.mxu0 %v2284
    %3461 = vmatpush.bf16.msra.mxu0 %v2280
    %3462 = vmatmul.bf16.gmra.mxu0 %v112
    %v3463 = vpop.f32.mrf.mxu0
    %v3464 = vadd.f32 %v3451, %v3463
    %v3465 = vpop.f32.mrf.mxu0
    %3466 = vdwg.mxu0
    %3467 = vmatpush.bf16.msra.mxu0 %v2340
    %3468 = vmatpush.bf16.msra.mxu0 %v2336
    %3469 = vmatpush.bf16.msra.mxu0 %v2332
    %3470 = vmatpush.bf16.msra.mxu0 %v2328
    %3471 = vmatpush.bf16.msra.mxu0 %v2324
    %3472 = vmatpush.bf16.msra.mxu0 %v2320
    %3473 = vmatpush.bf16.msra.mxu0 %v2316
    %3474 = vmatpush.bf16.msra.mxu0 %v2312
    %3475 = vmatmul.bf16.gmra.mxu0 %v113
    %v3476 = vpop.f32.mrf.mxu0
    %v3477 = vadd.f32 %v3464, %v3476
    %v3478 = vpop.f32.mrf.mxu0
    %3479 = vdwg.mxu0
    %3480 = vmatpush.bf16.msra.mxu0 %v2372
    %3481 = vmatpush.bf16.msra.mxu0 %v2368
    %3482 = vmatpush.bf16.msra.mxu0 %v2364
    %3483 = vmatpush.bf16.msra.mxu0 %v2360
    %3484 = vmatpush.bf16.msra.mxu0 %v2356
    %3485 = vmatpush.bf16.msra.mxu0 %v2352
    %3486 = vmatpush.bf16.msra.mxu0 %v2348
    %3487 = vmatpush.bf16.msra.mxu0 %v2344
    %3488 = vmatmul.bf16.gmra.mxu0 %v114
    %v3489 = vpop.f32.mrf.mxu0
    %v3490 = vadd.f32 %v3477, %v3489
    %v3491 = vpop.f32.mrf.mxu0
    %3492 = vdwg.mxu0
    %3493 = vmatpush.bf16.msra.mxu0 %v2404
    %3494 = vmatpush.bf16.msra.mxu0 %v2400
    %3495 = vmatpush.bf16.msra.mxu0 %v2396
    %3496 = vmatpush.bf16.msra.mxu0 %v2392
    %3497 = vmatpush.bf16.msra.mxu0 %v2388
    %3498 = vmatpush.bf16.msra.mxu0 %v2384
    %3499 = vmatpush.bf16.msra.mxu0 %v2380
    %3500 = vmatpush.bf16.msra.mxu0 %v2376
    %3501 = vmatmul.bf16.gmra.mxu0 %v115
    %v3502 = vpop.f32.mrf.mxu0
    %v3503 = vadd.f32 %v3490, %v3502
    %v3504 = vpop.f32.mrf.mxu0
    %3505 = vdwg.mxu0
    %3506 = vmatpush.bf16.msra.mxu0 %v2436
    %3507 = vmatpush.bf16.msra.mxu0 %v2432
    %3508 = vmatpush.bf16.msra.mxu0 %v2428
    %3509 = vmatpush.bf16.msra.mxu0 %v2424
    %3510 = vmatpush.bf16.msra.mxu0 %v2420
    %3511 = vmatpush.bf16.msra.mxu0 %v2416
    %3512 = vmatpush.bf16.msra.mxu0 %v2412
    %3513 = vmatpush.bf16.msra.mxu0 %v2408
    %3514 = vmatmul.bf16.gmra.mxu0 %v116
    %v3515 = vpop.f32.mrf.mxu0
    %v3516 = vadd.f32 %v3503, %v3515
    %v3517 = vpop.f32.mrf.mxu0
    %3518 = vdwg.mxu0
    %3519 = vmatpush.bf16.msra.mxu0 %v2468
    %3520 = vmatpush.bf16.msra.mxu0 %v2464
    %3521 = vmatpush.bf16.msra.mxu0 %v2460
    %3522 = vmatpush.bf16.msra.mxu0 %v2456
    %3523 = vmatpush.bf16.msra.mxu0 %v2452
    %3524 = vmatpush.bf16.msra.mxu0 %v2448
    %3525 = vmatpush.bf16.msra.mxu0 %v2444
    %3526 = vmatpush.bf16.msra.mxu0 %v2440
    %3527 = vmatmul.bf16.gmra.mxu0 %v117
    %v3528 = vpop.f32.mrf.mxu0
    %v3529 = vadd.f32 %v3516, %v3528
    %v3530 = vpop.f32.mrf.mxu0
    %3531 = vdwg.mxu0
    %3532 = vmatpush.bf16.msra.mxu0 %v2500
    %3533 = vmatpush.bf16.msra.mxu0 %v2496
    %3534 = vmatpush.bf16.msra.mxu0 %v2492
    %3535 = vmatpush.bf16.msra.mxu0 %v2488
    %3536 = vmatpush.bf16.msra.mxu0 %v2484
    %3537 = vmatpush.bf16.msra.mxu0 %v2480
    %3538 = vmatpush.bf16.msra.mxu0 %v2476
    %3539 = vmatpush.bf16.msra.mxu0 %v2472
    %3540 = vmatmul.bf16.gmra.mxu0 %v118
    %v3541 = vpop.f32.mrf.mxu0
    %v3542 = vadd.f32 %v3529, %v3541
    %v3543 = vpop.f32.mrf.mxu0
    %3544 = vdwg.mxu0
    %3545 = vmatpush.bf16.msra.mxu0 %v2532
    %3546 = vmatpush.bf16.msra.mxu0 %v2528
    %3547 = vmatpush.bf16.msra.mxu0 %v2524
    %3548 = vmatpush.bf16.msra.mxu0 %v2520
    %3549 = vmatpush.bf16.msra.mxu0 %v2516
    %3550 = vmatpush.bf16.msra.mxu0 %v2512
    %3551 = vmatpush.bf16.msra.mxu0 %v2508
    %3552 = vmatpush.bf16.msra.mxu0 %v2504
    %3553 = vmatmul.bf16.gmra.mxu0 %v119
    %v3554 = vpop.f32.mrf.mxu0
    %v3555 = vadd.f32 %v3542, %v3554
    %v3556 = vpop.f32.mrf.mxu0
    %3557 = vdwg.mxu0
    %3558 = vmatpush.bf16.msra.mxu0 %v2564
    %3559 = vmatpush.bf16.msra.mxu0 %v2560
    %3560 = vmatpush.bf16.msra.mxu0 %v2556
    %3561 = vmatpush.bf16.msra.mxu0 %v2552
    %3562 = vmatpush.bf16.msra.mxu0 %v2548
    %3563 = vmatpush.bf16.msra.mxu0 %v2544
    %3564 = vmatpush.bf16.msra.mxu0 %v2540
    %3565 = vmatpush.bf16.msra.mxu0 %v2536
    %3566 = vmatmul.bf16.gmra.mxu0 %v120
    %v3567 = vpop.f32.mrf.mxu0
    %v3568 = vadd.f32 %v3555, %v3567
    %v3569 = vpop.f32.mrf.mxu0
    %3570 = vdwg.mxu0
    %3571 = vmatpush.bf16.msra.mxu0 %v2596
    %3572 = vmatpush.bf16.msra.mxu0 %v2592
    %3573 = vmatpush.bf16.msra.mxu0 %v2588
    %3574 = vmatpush.bf16.msra.mxu0 %v2584
    %3575 = vmatpush.bf16.msra.mxu0 %v2580
    %3576 = vmatpush.bf16.msra.mxu0 %v2576
    %3577 = vmatpush.bf16.msra.mxu0 %v2572
    %3578 = vmatpush.bf16.msra.mxu0 %v2568
    %3579 = vmatmul.bf16.gmra.mxu0 %v121
    %v3580 = vpop.f32.mrf.mxu0
    %v3581 = vadd.f32 %v3568, %v3580
    %v3582 = vpop.f32.mrf.mxu0
    %3583 = vdwg.mxu0
    %3584 = vmatpush.bf16.msra.mxu0 %v2628
    %3585 = vmatpush.bf16.msra.mxu0 %v2624
    %3586 = vmatpush.bf16.msra.mxu0 %v2620
    %3587 = vmatpush.bf16.msra.mxu0 %v2616
    %3588 = vmatpush.bf16.msra.mxu0 %v2612
    %3589 = vmatpush.bf16.msra.mxu0 %v2608
    %3590 = vmatpush.bf16.msra.mxu0 %v2604
    %3591 = vmatpush.bf16.msra.mxu0 %v2600
    %3592 = vmatmul.bf16.gmra.mxu0 %v122
    %v3593 = vpop.f32.mrf.mxu0
    %v3594 = vadd.f32 %v3581, %v3593
    %v3595 = vpop.f32.mrf.mxu0
    %3596 = vdwg.mxu0
    %3597 = vmatpush.bf16.msra.mxu0 %v2660
    %3598 = vmatpush.bf16.msra.mxu0 %v2656
    %3599 = vmatpush.bf16.msra.mxu0 %v2652
    %3600 = vmatpush.bf16.msra.mxu0 %v2648
    %3601 = vmatpush.bf16.msra.mxu0 %v2644
    %3602 = vmatpush.bf16.msra.mxu0 %v2640
    %3603 = vmatpush.bf16.msra.mxu0 %v2636
    %3604 = vmatpush.bf16.msra.mxu0 %v2632
    %3605 = vmatmul.bf16.gmra.mxu0 %v123
    %v3606 = vpop.f32.mrf.mxu0
    %v3607 = vadd.f32 %v3594, %v3606
    %v3608 = vpop.f32.mrf.mxu0
    %3609 = vdwg.mxu0
    %3610 = vmatpush.bf16.msra.mxu0 %v2692
    %3611 = vmatpush.bf16.msra.mxu0 %v2688
    %3612 = vmatpush.bf16.msra.mxu0 %v2684
    %3613 = vmatpush.bf16.msra.mxu0 %v2680
    %3614 = vmatpush.bf16.msra.mxu0 %v2676
    %3615 = vmatpush.bf16.msra.mxu0 %v2672
    %3616 = vmatpush.bf16.msra.mxu0 %v2668
    %3617 = vmatpush.bf16.msra.mxu0 %v2664
    %3618 = vmatmul.bf16.gmra.mxu0 %v124
    %v3619 = vpop.f32.mrf.mxu0
    %v3620 = vadd.f32 %v3607, %v3619
    %v3621 = vpop.f32.mrf.mxu0
    %3622 = vdwg.mxu0
    %3623 = vmatpush.bf16.msra.mxu0 %v2213
    %3624 = vmatpush.bf16.msra.mxu0 %v2209
    %3625 = vmatpush.bf16.msra.mxu0 %v2205
    %3626 = vmatpush.bf16.msra.mxu0 %v2201
    %3627 = vmatpush.bf16.msra.mxu0 %v2197
    %3628 = vmatpush.bf16.msra.mxu0 %v2193
    %3629 = vmatpush.bf16.msra.mxu0 %v2189
    %3630 = vmatpush.bf16.msra.mxu0 %v2185
    %3631 = vmatmul.bf16.gmra.mxu0 %v109
    %v3632 = vpop.f32.mrf.mxu0
    %v3633 = vadd.f32 %v641, %v3632
    %v3634 = vpop.f32.mrf.mxu0
    %3635 = vdwg.mxu0
    %3636 = vmatpush.bf16.msra.mxu0 %v2245
    %3637 = vmatpush.bf16.msra.mxu0 %v2241
    %3638 = vmatpush.bf16.msra.mxu0 %v2237
    %3639 = vmatpush.bf16.msra.mxu0 %v2233
    %3640 = vmatpush.bf16.msra.mxu0 %v2229
    %3641 = vmatpush.bf16.msra.mxu0 %v2225
    %3642 = vmatpush.bf16.msra.mxu0 %v2221
    %3643 = vmatpush.bf16.msra.mxu0 %v2217
    %3644 = vmatmul.bf16.gmra.mxu0 %v110
    %v3645 = vpop.f32.mrf.mxu0
    %v3646 = vadd.f32 %v3633, %v3645
    %v3647 = vpop.f32.mrf.mxu0
    %3648 = vdwg.mxu0
    %3649 = vmatpush.bf16.msra.mxu0 %v2277
    %3650 = vmatpush.bf16.msra.mxu0 %v2273
    %3651 = vmatpush.bf16.msra.mxu0 %v2269
    %3652 = vmatpush.bf16.msra.mxu0 %v2265
    %3653 = vmatpush.bf16.msra.mxu0 %v2261
    %3654 = vmatpush.bf16.msra.mxu0 %v2257
    %3655 = vmatpush.bf16.msra.mxu0 %v2253
    %3656 = vmatpush.bf16.msra.mxu0 %v2249
    %3657 = vmatmul.bf16.gmra.mxu0 %v111
    %v3658 = vpop.f32.mrf.mxu0
    %v3659 = vadd.f32 %v3646, %v3658
    %v3660 = vpop.f32.mrf.mxu0
    %3661 = vdwg.mxu0
    %3662 = vmatpush.bf16.msra.mxu0 %v2309
    %3663 = vmatpush.bf16.msra.mxu0 %v2305
    %3664 = vmatpush.bf16.msra.mxu0 %v2301
    %3665 = vmatpush.bf16.msra.mxu0 %v2297
    %3666 = vmatpush.bf16.msra.mxu0 %v2293
    %3667 = vmatpush.bf16.msra.mxu0 %v2289
    %3668 = vmatpush.bf16.msra.mxu0 %v2285
    %3669 = vmatpush.bf16.msra.mxu0 %v2281
    %3670 = vmatmul.bf16.gmra.mxu0 %v112
    %v3671 = vpop.f32.mrf.mxu0
    %v3672 = vadd.f32 %v3659, %v3671
    %v3673 = vpop.f32.mrf.mxu0
    %3674 = vdwg.mxu0
    %3675 = vmatpush.bf16.msra.mxu0 %v2341
    %3676 = vmatpush.bf16.msra.mxu0 %v2337
    %3677 = vmatpush.bf16.msra.mxu0 %v2333
    %3678 = vmatpush.bf16.msra.mxu0 %v2329
    %3679 = vmatpush.bf16.msra.mxu0 %v2325
    %3680 = vmatpush.bf16.msra.mxu0 %v2321
    %3681 = vmatpush.bf16.msra.mxu0 %v2317
    %3682 = vmatpush.bf16.msra.mxu0 %v2313
    %3683 = vmatmul.bf16.gmra.mxu0 %v113
    %v3684 = vpop.f32.mrf.mxu0
    %v3685 = vadd.f32 %v3672, %v3684
    %v3686 = vpop.f32.mrf.mxu0
    %3687 = vdwg.mxu0
    %3688 = vmatpush.bf16.msra.mxu0 %v2373
    %3689 = vmatpush.bf16.msra.mxu0 %v2369
    %3690 = vmatpush.bf16.msra.mxu0 %v2365
    %3691 = vmatpush.bf16.msra.mxu0 %v2361
    %3692 = vmatpush.bf16.msra.mxu0 %v2357
    %3693 = vmatpush.bf16.msra.mxu0 %v2353
    %3694 = vmatpush.bf16.msra.mxu0 %v2349
    %3695 = vmatpush.bf16.msra.mxu0 %v2345
    %3696 = vmatmul.bf16.gmra.mxu0 %v114
    %v3697 = vpop.f32.mrf.mxu0
    %v3698 = vadd.f32 %v3685, %v3697
    %v3699 = vpop.f32.mrf.mxu0
    %3700 = vdwg.mxu0
    %3701 = vmatpush.bf16.msra.mxu0 %v2405
    %3702 = vmatpush.bf16.msra.mxu0 %v2401
    %3703 = vmatpush.bf16.msra.mxu0 %v2397
    %3704 = vmatpush.bf16.msra.mxu0 %v2393
    %3705 = vmatpush.bf16.msra.mxu0 %v2389
    %3706 = vmatpush.bf16.msra.mxu0 %v2385
    %3707 = vmatpush.bf16.msra.mxu0 %v2381
    %3708 = vmatpush.bf16.msra.mxu0 %v2377
    %3709 = vmatmul.bf16.gmra.mxu0 %v115
    %v3710 = vpop.f32.mrf.mxu0
    %v3711 = vadd.f32 %v3698, %v3710
    %v3712 = vpop.f32.mrf.mxu0
    %3713 = vdwg.mxu0
    %3714 = vmatpush.bf16.msra.mxu0 %v2437
    %3715 = vmatpush.bf16.msra.mxu0 %v2433
    %3716 = vmatpush.bf16.msra.mxu0 %v2429
    %3717 = vmatpush.bf16.msra.mxu0 %v2425
    %3718 = vmatpush.bf16.msra.mxu0 %v2421
    %3719 = vmatpush.bf16.msra.mxu0 %v2417
    %3720 = vmatpush.bf16.msra.mxu0 %v2413
    %3721 = vmatpush.bf16.msra.mxu0 %v2409
    %3722 = vmatmul.bf16.gmra.mxu0 %v116
    %v3723 = vpop.f32.mrf.mxu0
    %v3724 = vadd.f32 %v3711, %v3723
    %v3725 = vpop.f32.mrf.mxu0
    %3726 = vdwg.mxu0
    %3727 = vmatpush.bf16.msra.mxu0 %v2469
    %3728 = vmatpush.bf16.msra.mxu0 %v2465
    %3729 = vmatpush.bf16.msra.mxu0 %v2461
    %3730 = vmatpush.bf16.msra.mxu0 %v2457
    %3731 = vmatpush.bf16.msra.mxu0 %v2453
    %3732 = vmatpush.bf16.msra.mxu0 %v2449
    %3733 = vmatpush.bf16.msra.mxu0 %v2445
    %3734 = vmatpush.bf16.msra.mxu0 %v2441
    %3735 = vmatmul.bf16.gmra.mxu0 %v117
    %v3736 = vpop.f32.mrf.mxu0
    %v3737 = vadd.f32 %v3724, %v3736
    %v3738 = vpop.f32.mrf.mxu0
    %3739 = vdwg.mxu0
    %3740 = vmatpush.bf16.msra.mxu0 %v2501
    %3741 = vmatpush.bf16.msra.mxu0 %v2497
    %3742 = vmatpush.bf16.msra.mxu0 %v2493
    %3743 = vmatpush.bf16.msra.mxu0 %v2489
    %3744 = vmatpush.bf16.msra.mxu0 %v2485
    %3745 = vmatpush.bf16.msra.mxu0 %v2481
    %3746 = vmatpush.bf16.msra.mxu0 %v2477
    %3747 = vmatpush.bf16.msra.mxu0 %v2473
    %3748 = vmatmul.bf16.gmra.mxu0 %v118
    %v3749 = vpop.f32.mrf.mxu0
    %v3750 = vadd.f32 %v3737, %v3749
    %v3751 = vpop.f32.mrf.mxu0
    %3752 = vdwg.mxu0
    %3753 = vmatpush.bf16.msra.mxu0 %v2533
    %3754 = vmatpush.bf16.msra.mxu0 %v2529
    %3755 = vmatpush.bf16.msra.mxu0 %v2525
    %3756 = vmatpush.bf16.msra.mxu0 %v2521
    %3757 = vmatpush.bf16.msra.mxu0 %v2517
    %3758 = vmatpush.bf16.msra.mxu0 %v2513
    %3759 = vmatpush.bf16.msra.mxu0 %v2509
    %3760 = vmatpush.bf16.msra.mxu0 %v2505
    %3761 = vmatmul.bf16.gmra.mxu0 %v119
    %v3762 = vpop.f32.mrf.mxu0
    %v3763 = vadd.f32 %v3750, %v3762
    %v3764 = vpop.f32.mrf.mxu0
    %3765 = vdwg.mxu0
    %3766 = vmatpush.bf16.msra.mxu0 %v2565
    %3767 = vmatpush.bf16.msra.mxu0 %v2561
    %3768 = vmatpush.bf16.msra.mxu0 %v2557
    %3769 = vmatpush.bf16.msra.mxu0 %v2553
    %3770 = vmatpush.bf16.msra.mxu0 %v2549
    %3771 = vmatpush.bf16.msra.mxu0 %v2545
    %3772 = vmatpush.bf16.msra.mxu0 %v2541
    %3773 = vmatpush.bf16.msra.mxu0 %v2537
    %3774 = vmatmul.bf16.gmra.mxu0 %v120
    %v3775 = vpop.f32.mrf.mxu0
    %v3776 = vadd.f32 %v3763, %v3775
    %v3777 = vpop.f32.mrf.mxu0
    %3778 = vdwg.mxu0
    %3779 = vmatpush.bf16.msra.mxu0 %v2597
    %3780 = vmatpush.bf16.msra.mxu0 %v2593
    %3781 = vmatpush.bf16.msra.mxu0 %v2589
    %3782 = vmatpush.bf16.msra.mxu0 %v2585
    %3783 = vmatpush.bf16.msra.mxu0 %v2581
    %3784 = vmatpush.bf16.msra.mxu0 %v2577
    %3785 = vmatpush.bf16.msra.mxu0 %v2573
    %3786 = vmatpush.bf16.msra.mxu0 %v2569
    %3787 = vmatmul.bf16.gmra.mxu0 %v121
    %v3788 = vpop.f32.mrf.mxu0
    %v3789 = vadd.f32 %v3776, %v3788
    %v3790 = vpop.f32.mrf.mxu0
    %3791 = vdwg.mxu0
    %3792 = vmatpush.bf16.msra.mxu0 %v2629
    %3793 = vmatpush.bf16.msra.mxu0 %v2625
    %3794 = vmatpush.bf16.msra.mxu0 %v2621
    %3795 = vmatpush.bf16.msra.mxu0 %v2617
    %3796 = vmatpush.bf16.msra.mxu0 %v2613
    %3797 = vmatpush.bf16.msra.mxu0 %v2609
    %3798 = vmatpush.bf16.msra.mxu0 %v2605
    %3799 = vmatpush.bf16.msra.mxu0 %v2601
    %3800 = vmatmul.bf16.gmra.mxu0 %v122
    %v3801 = vpop.f32.mrf.mxu0
    %v3802 = vadd.f32 %v3789, %v3801
    %v3803 = vpop.f32.mrf.mxu0
    %3804 = vdwg.mxu0
    %3805 = vmatpush.bf16.msra.mxu0 %v2661
    %3806 = vmatpush.bf16.msra.mxu0 %v2657
    %3807 = vmatpush.bf16.msra.mxu0 %v2653
    %3808 = vmatpush.bf16.msra.mxu0 %v2649
    %3809 = vmatpush.bf16.msra.mxu0 %v2645
    %3810 = vmatpush.bf16.msra.mxu0 %v2641
    %3811 = vmatpush.bf16.msra.mxu0 %v2637
    %3812 = vmatpush.bf16.msra.mxu0 %v2633
    %3813 = vmatmul.bf16.gmra.mxu0 %v123
    %v3814 = vpop.f32.mrf.mxu0
    %v3815 = vadd.f32 %v3802, %v3814
    %v3816 = vpop.f32.mrf.mxu0
    %3817 = vdwg.mxu0
    %3818 = vmatpush.bf16.msra.mxu0 %v2693
    %3819 = vmatpush.bf16.msra.mxu0 %v2689
    %3820 = vmatpush.bf16.msra.mxu0 %v2685
    %3821 = vmatpush.bf16.msra.mxu0 %v2681
    %3822 = vmatpush.bf16.msra.mxu0 %v2677
    %3823 = vmatpush.bf16.msra.mxu0 %v2673
    %3824 = vmatpush.bf16.msra.mxu0 %v2669
    %3825 = vmatpush.bf16.msra.mxu0 %v2665
    %3826 = vmatmul.bf16.gmra.mxu0 %v124
    %v3827 = vpop.f32.mrf.mxu0
    %v3828 = vadd.f32 %v3815, %v3827
    %v3829 = vpop.f32.mrf.mxu0
    %3830 = vdwg.mxu0
    %3831 = vmatpush.bf16.msra.mxu0 %v2214
    %3832 = vmatpush.bf16.msra.mxu0 %v2210
    %3833 = vmatpush.bf16.msra.mxu0 %v2206
    %3834 = vmatpush.bf16.msra.mxu0 %v2202
    %3835 = vmatpush.bf16.msra.mxu0 %v2198
    %3836 = vmatpush.bf16.msra.mxu0 %v2194
    %3837 = vmatpush.bf16.msra.mxu0 %v2190
    %3838 = vmatpush.bf16.msra.mxu0 %v2186
    %3839 = vmatmul.bf16.gmra.mxu0 %v109
    %v3840 = vpop.f32.mrf.mxu0
    %v3841 = vadd.f32 %v642, %v3840
    %v3842 = vpop.f32.mrf.mxu0
    %3843 = vdwg.mxu0
    %3844 = vmatpush.bf16.msra.mxu0 %v2246
    %3845 = vmatpush.bf16.msra.mxu0 %v2242
    %3846 = vmatpush.bf16.msra.mxu0 %v2238
    %3847 = vmatpush.bf16.msra.mxu0 %v2234
    %3848 = vmatpush.bf16.msra.mxu0 %v2230
    %3849 = vmatpush.bf16.msra.mxu0 %v2226
    %3850 = vmatpush.bf16.msra.mxu0 %v2222
    %3851 = vmatpush.bf16.msra.mxu0 %v2218
    %3852 = vmatmul.bf16.gmra.mxu0 %v110
    %v3853 = vpop.f32.mrf.mxu0
    %v3854 = vadd.f32 %v3841, %v3853
    %v3855 = vpop.f32.mrf.mxu0
    %3856 = vdwg.mxu0
    %3857 = vmatpush.bf16.msra.mxu0 %v2278
    %3858 = vmatpush.bf16.msra.mxu0 %v2274
    %3859 = vmatpush.bf16.msra.mxu0 %v2270
    %3860 = vmatpush.bf16.msra.mxu0 %v2266
    %3861 = vmatpush.bf16.msra.mxu0 %v2262
    %3862 = vmatpush.bf16.msra.mxu0 %v2258
    %3863 = vmatpush.bf16.msra.mxu0 %v2254
    %3864 = vmatpush.bf16.msra.mxu0 %v2250
    %3865 = vmatmul.bf16.gmra.mxu0 %v111
    %v3866 = vpop.f32.mrf.mxu0
    %v3867 = vadd.f32 %v3854, %v3866
    %v3868 = vpop.f32.mrf.mxu0
    %3869 = vdwg.mxu0
    %3870 = vmatpush.bf16.msra.mxu0 %v2310
    %3871 = vmatpush.bf16.msra.mxu0 %v2306
    %3872 = vmatpush.bf16.msra.mxu0 %v2302
    %3873 = vmatpush.bf16.msra.mxu0 %v2298
    %3874 = vmatpush.bf16.msra.mxu0 %v2294
    %3875 = vmatpush.bf16.msra.mxu0 %v2290
    %3876 = vmatpush.bf16.msra.mxu0 %v2286
    %3877 = vmatpush.bf16.msra.mxu0 %v2282
    %3878 = vmatmul.bf16.gmra.mxu0 %v112
    %v3879 = vpop.f32.mrf.mxu0
    %v3880 = vadd.f32 %v3867, %v3879
    %v3881 = vpop.f32.mrf.mxu0
    %3882 = vdwg.mxu0
    %3883 = vmatpush.bf16.msra.mxu0 %v2342
    %3884 = vmatpush.bf16.msra.mxu0 %v2338
    %3885 = vmatpush.bf16.msra.mxu0 %v2334
    %3886 = vmatpush.bf16.msra.mxu0 %v2330
    %3887 = vmatpush.bf16.msra.mxu0 %v2326
    %3888 = vmatpush.bf16.msra.mxu0 %v2322
    %3889 = vmatpush.bf16.msra.mxu0 %v2318
    %3890 = vmatpush.bf16.msra.mxu0 %v2314
    %3891 = vmatmul.bf16.gmra.mxu0 %v113
    %v3892 = vpop.f32.mrf.mxu0
    %v3893 = vadd.f32 %v3880, %v3892
    %v3894 = vpop.f32.mrf.mxu0
    %3895 = vdwg.mxu0
    %3896 = vmatpush.bf16.msra.mxu0 %v2374
    %3897 = vmatpush.bf16.msra.mxu0 %v2370
    %3898 = vmatpush.bf16.msra.mxu0 %v2366
    %3899 = vmatpush.bf16.msra.mxu0 %v2362
    %3900 = vmatpush.bf16.msra.mxu0 %v2358
    %3901 = vmatpush.bf16.msra.mxu0 %v2354
    %3902 = vmatpush.bf16.msra.mxu0 %v2350
    %3903 = vmatpush.bf16.msra.mxu0 %v2346
    %3904 = vmatmul.bf16.gmra.mxu0 %v114
    %v3905 = vpop.f32.mrf.mxu0
    %v3906 = vadd.f32 %v3893, %v3905
    %v3907 = vpop.f32.mrf.mxu0
    %3908 = vdwg.mxu0
    %3909 = vmatpush.bf16.msra.mxu0 %v2406
    %3910 = vmatpush.bf16.msra.mxu0 %v2402
    %3911 = vmatpush.bf16.msra.mxu0 %v2398
    %3912 = vmatpush.bf16.msra.mxu0 %v2394
    %3913 = vmatpush.bf16.msra.mxu0 %v2390
    %3914 = vmatpush.bf16.msra.mxu0 %v2386
    %3915 = vmatpush.bf16.msra.mxu0 %v2382
    %3916 = vmatpush.bf16.msra.mxu0 %v2378
    %3917 = vmatmul.bf16.gmra.mxu0 %v115
    %v3918 = vpop.f32.mrf.mxu0
    %v3919 = vadd.f32 %v3906, %v3918
    %v3920 = vpop.f32.mrf.mxu0
    %3921 = vdwg.mxu0
    %3922 = vmatpush.bf16.msra.mxu0 %v2438
    %3923 = vmatpush.bf16.msra.mxu0 %v2434
    %3924 = vmatpush.bf16.msra.mxu0 %v2430
    %3925 = vmatpush.bf16.msra.mxu0 %v2426
    %3926 = vmatpush.bf16.msra.mxu0 %v2422
    %3927 = vmatpush.bf16.msra.mxu0 %v2418
    %3928 = vmatpush.bf16.msra.mxu0 %v2414
    %3929 = vmatpush.bf16.msra.mxu0 %v2410
    %3930 = vmatmul.bf16.gmra.mxu0 %v116
    %v3931 = vpop.f32.mrf.mxu0
    %v3932 = vadd.f32 %v3919, %v3931
    %v3933 = vpop.f32.mrf.mxu0
    %3934 = vdwg.mxu0
    %3935 = vmatpush.bf16.msra.mxu0 %v2470
    %3936 = vmatpush.bf16.msra.mxu0 %v2466
    %3937 = vmatpush.bf16.msra.mxu0 %v2462
    %3938 = vmatpush.bf16.msra.mxu0 %v2458
    %3939 = vmatpush.bf16.msra.mxu0 %v2454
    %3940 = vmatpush.bf16.msra.mxu0 %v2450
    %3941 = vmatpush.bf16.msra.mxu0 %v2446
    %3942 = vmatpush.bf16.msra.mxu0 %v2442
    %3943 = vmatmul.bf16.gmra.mxu0 %v117
    %v3944 = vpop.f32.mrf.mxu0
    %v3945 = vadd.f32 %v3932, %v3944
    %v3946 = vpop.f32.mrf.mxu0
    %3947 = vdwg.mxu0
    %3948 = vmatpush.bf16.msra.mxu0 %v2502
    %3949 = vmatpush.bf16.msra.mxu0 %v2498
    %3950 = vmatpush.bf16.msra.mxu0 %v2494
    %3951 = vmatpush.bf16.msra.mxu0 %v2490
    %3952 = vmatpush.bf16.msra.mxu0 %v2486
    %3953 = vmatpush.bf16.msra.mxu0 %v2482
    %3954 = vmatpush.bf16.msra.mxu0 %v2478
    %3955 = vmatpush.bf16.msra.mxu0 %v2474
    %3956 = vmatmul.bf16.gmra.mxu0 %v118
    %v3957 = vpop.f32.mrf.mxu0
    %v3958 = vadd.f32 %v3945, %v3957
    %v3959 = vpop.f32.mrf.mxu0
    %3960 = vdwg.mxu0
    %3961 = vmatpush.bf16.msra.mxu0 %v2534
    %3962 = vmatpush.bf16.msra.mxu0 %v2530
    %3963 = vmatpush.bf16.msra.mxu0 %v2526
    %3964 = vmatpush.bf16.msra.mxu0 %v2522
    %3965 = vmatpush.bf16.msra.mxu0 %v2518
    %3966 = vmatpush.bf16.msra.mxu0 %v2514
    %3967 = vmatpush.bf16.msra.mxu0 %v2510
    %3968 = vmatpush.bf16.msra.mxu0 %v2506
    %3969 = vmatmul.bf16.gmra.mxu0 %v119
    %v3970 = vpop.f32.mrf.mxu0
    %v3971 = vadd.f32 %v3958, %v3970
    %v3972 = vpop.f32.mrf.mxu0
    %3973 = vdwg.mxu0
    %3974 = vmatpush.bf16.msra.mxu0 %v2566
    %3975 = vmatpush.bf16.msra.mxu0 %v2562
    %3976 = vmatpush.bf16.msra.mxu0 %v2558
    %3977 = vmatpush.bf16.msra.mxu0 %v2554
    %3978 = vmatpush.bf16.msra.mxu0 %v2550
    %3979 = vmatpush.bf16.msra.mxu0 %v2546
    %3980 = vmatpush.bf16.msra.mxu0 %v2542
    %3981 = vmatpush.bf16.msra.mxu0 %v2538
    %3982 = vmatmul.bf16.gmra.mxu0 %v120
    %v3983 = vpop.f32.mrf.mxu0
    %v3984 = vadd.f32 %v3971, %v3983
    %v3985 = vpop.f32.mrf.mxu0
    %3986 = vdwg.mxu0
    %3987 = vmatpush.bf16.msra.mxu0 %v2598
    %3988 = vmatpush.bf16.msra.mxu0 %v2594
    %3989 = vmatpush.bf16.msra.mxu0 %v2590
    %3990 = vmatpush.bf16.msra.mxu0 %v2586
    %3991 = vmatpush.bf16.msra.mxu0 %v2582
    %3992 = vmatpush.bf16.msra.mxu0 %v2578
    %3993 = vmatpush.bf16.msra.mxu0 %v2574
    %3994 = vmatpush.bf16.msra.mxu0 %v2570
    %3995 = vmatmul.bf16.gmra.mxu0 %v121
    %v3996 = vpop.f32.mrf.mxu0
    %v3997 = vadd.f32 %v3984, %v3996
    %v3998 = vpop.f32.mrf.mxu0
    %3999 = vdwg.mxu0
    %4000 = vmatpush.bf16.msra.mxu0 %v2630
    %4001 = vmatpush.bf16.msra.mxu0 %v2626
    %4002 = vmatpush.bf16.msra.mxu0 %v2622
    %4003 = vmatpush.bf16.msra.mxu0 %v2618
    %4004 = vmatpush.bf16.msra.mxu0 %v2614
    %4005 = vmatpush.bf16.msra.mxu0 %v2610
    %4006 = vmatpush.bf16.msra.mxu0 %v2606
    %4007 = vmatpush.bf16.msra.mxu0 %v2602
    %4008 = vmatmul.bf16.gmra.mxu0 %v122
    %v4009 = vpop.f32.mrf.mxu0
    %v4010 = vadd.f32 %v3997, %v4009
    %v4011 = vpop.f32.mrf.mxu0
    %4012 = vdwg.mxu0
    %4013 = vmatpush.bf16.msra.mxu0 %v2662
    %4014 = vmatpush.bf16.msra.mxu0 %v2658
    %4015 = vmatpush.bf16.msra.mxu0 %v2654
    %4016 = vmatpush.bf16.msra.mxu0 %v2650
    %4017 = vmatpush.bf16.msra.mxu0 %v2646
    %4018 = vmatpush.bf16.msra.mxu0 %v2642
    %4019 = vmatpush.bf16.msra.mxu0 %v2638
    %4020 = vmatpush.bf16.msra.mxu0 %v2634
    %4021 = vmatmul.bf16.gmra.mxu0 %v123
    %v4022 = vpop.f32.mrf.mxu0
    %v4023 = vadd.f32 %v4010, %v4022
    %v4024 = vpop.f32.mrf.mxu0
    %4025 = vdwg.mxu0
    %4026 = vmatpush.bf16.msra.mxu0 %v2694
    %4027 = vmatpush.bf16.msra.mxu0 %v2690
    %4028 = vmatpush.bf16.msra.mxu0 %v2686
    %4029 = vmatpush.bf16.msra.mxu0 %v2682
    %4030 = vmatpush.bf16.msra.mxu0 %v2678
    %4031 = vmatpush.bf16.msra.mxu0 %v2674
    %4032 = vmatpush.bf16.msra.mxu0 %v2670
    %4033 = vmatpush.bf16.msra.mxu0 %v2666
    %4034 = vmatmul.bf16.gmra.mxu0 %v124
    %v4035 = vpop.f32.mrf.mxu0
    %v4036 = vadd.f32 %v4023, %v4035
    %v4037 = vpop.f32.mrf.mxu0
    %4038 = vdwg.mxu0
    %v4039 = vmax.f32 %v3412, 0.0
    %v4040 = vmax.f32 %v3620, 0.0
    %v4041 = vmax.f32 %v3828, 0.0
    %v4042 = vmax.f32 %v4036, 0.0
    %v4043 = vpack.c.bf16 %v4039, %v4039
    %v4044 = vpack.c.bf16 %v4040, %v4040
    %v4045 = vpack.c.bf16 %v4041, %v4041
    %v4046 = vpack.c.bf16 %v4042, %v4042
    %v4047 = vld [vmem:[#allocation8] sm:$0xf]
    %v4048 = vld [vmem:[#allocation8 + $0x4] sm:$0xf]
    %v4049 = vld [vmem:[#allocation8 + $0x8] sm:$0xf]
    %v4050 = vld [vmem:[#allocation8 + $0xc] sm:$0xf]
    %v4051 = vld [vmem:[#allocation8 + $0x10] sm:$0xf]
    %v4052 = vld [vmem:[#allocation8 + $0x14] sm:$0xf]
    %v4053 = vld [vmem:[#allocation8 + $0x18] sm:$0xf]
    %v4054 = vld [vmem:[#allocation8 + $0x1c] sm:$0xf]
    %v4055 = vld [vmem:[#allocation8 + $0x20] sm:$0xf]
    %v4056 = vld [vmem:[#allocation8 + $0x24] sm:$0xf]
    %v4057 = vld [vmem:[#allocation8 + $0x28] sm:$0xf]
    %v4058 = vld [vmem:[#allocation8 + $0x2c] sm:$0xf]
    %v4059 = vld [vmem:[#allocation8 + $0x30] sm:$0xf]
    %v4060 = vld [vmem:[#allocation8 + $0x34] sm:$0xf]
    %v4061 = vld [vmem:[#allocation8 + $0x38] sm:$0xf]
    %v4062 = vld [vmem:[#allocation8 + $0x3c] sm:$0xf]
    %v4063 = vld [vmem:[#allocation8 + $0x40] sm:$0xf]
    %v4064 = vld [vmem:[#allocation8 + $0x44] sm:$0xf]
    %v4065 = vld [vmem:[#allocation8 + $0x48] sm:$0xf]
    %v4066 = vld [vmem:[#allocation8 + $0x4c] sm:$0xf]
    %v4067 = vld [vmem:[#allocation8 + $0x50] sm:$0xf]
    %v4068 = vld [vmem:[#allocation8 + $0x54] sm:$0xf]
    %v4069 = vld [vmem:[#allocation8 + $0x58] sm:$0xf]
    %v4070 = vld [vmem:[#allocation8 + $0x5c] sm:$0xf]
    %v4071 = vld [vmem:[#allocation8 + $0x60] sm:$0xf]
    %v4072 = vld [vmem:[#allocation8 + $0x64] sm:$0xf]
    %v4073 = vld [vmem:[#allocation8 + $0x68] sm:$0xf]
    %v4074 = vld [vmem:[#allocation8 + $0x6c] sm:$0xf]
    %v4075 = vld [vmem:[#allocation8 + $0x70] sm:$0xf]
    %v4076 = vld [vmem:[#allocation8 + $0x74] sm:$0xf]
    %v4077 = vld [vmem:[#allocation8 + $0x78] sm:$0xf]
    %v4078 = vld [vmem:[#allocation8 + $0x7c] sm:$0xf]
    %v4079 = vld [vmem:[#allocation8 + $0x80] sm:$0xf]
    %v4080 = vld [vmem:[#allocation8 + $0x84] sm:$0xf]
    %v4081 = vld [vmem:[#allocation8 + $0x88] sm:$0xf]
    %v4082 = vld [vmem:[#allocation8 + $0x8c] sm:$0xf]
    %v4083 = vld [vmem:[#allocation8 + $0x90] sm:$0xf]
    %v4084 = vld [vmem:[#allocation8 + $0x94] sm:$0xf]
    %v4085 = vld [vmem:[#allocation8 + $0x98] sm:$0xf]
    %v4086 = vld [vmem:[#allocation8 + $0x9c] sm:$0xf]
    %v4087 = vld [vmem:[#allocation8 + $0xa0] sm:$0xf]
    %v4088 = vld [vmem:[#allocation8 + $0xa4] sm:$0xf]
    %v4089 = vld [vmem:[#allocation8 + $0xa8] sm:$0xf]
    %v4090 = vld [vmem:[#allocation8 + $0xac] sm:$0xf]
    %v4091 = vld [vmem:[#allocation8 + $0xb0] sm:$0xf]
    %v4092 = vld [vmem:[#allocation8 + $0xb4] sm:$0xf]
    %v4093 = vld [vmem:[#allocation8 + $0xb8] sm:$0xf]
    %v4094 = vld [vmem:[#allocation8 + $0xbc] sm:$0xf]
    %v4095 = vld [vmem:[#allocation8 + $0xc0] sm:$0xf]
    %v4096 = vld [vmem:[#allocation8 + $0xc4] sm:$0xf]
    %v4097 = vld [vmem:[#allocation8 + $0xc8] sm:$0xf]
    %v4098 = vld [vmem:[#allocation8 + $0xcc] sm:$0xf]
    %v4099 = vld [vmem:[#allocation8 + $0xd0] sm:$0xf]
    %v4100 = vld [vmem:[#allocation8 + $0xd4] sm:$0xf]
    %v4101 = vld [vmem:[#allocation8 + $0xd8] sm:$0xf]
    %v4102 = vld [vmem:[#allocation8 + $0xdc] sm:$0xf]
    %v4103 = vld [vmem:[#allocation8 + $0xe0] sm:$0xf]
    %v4104 = vld [vmem:[#allocation8 + $0xe4] sm:$0xf]
    %v4105 = vld [vmem:[#allocation8 + $0xe8] sm:$0xf]
    %v4106 = vld [vmem:[#allocation8 + $0xec] sm:$0xf]
    %v4107 = vld [vmem:[#allocation8 + $0xf0] sm:$0xf]
    %v4108 = vld [vmem:[#allocation8 + $0xf4] sm:$0xf]
    %v4109 = vld [vmem:[#allocation8 + $0xf8] sm:$0xf]
    %v4110 = vld [vmem:[#allocation8 + $0xfc] sm:$0xf]
    %v4111 = vld [vmem:[#allocation10] sm:$0x1]
    %v4113 = vperm.slane %v4111, 0
    %v4179 = vunpack.c.l.b16 %v4047
    %v4180 = vunpack.c.l.b16 %v4048
    %v4181 = vunpack.c.l.b16 %v4049
    %v4182 = vunpack.c.l.b16 %v4050
    %v4183 = vunpack.c.l.b16 %v4051
    %v4184 = vunpack.c.l.b16 %v4052
    %v4185 = vunpack.c.l.b16 %v4053
    %v4186 = vunpack.c.l.b16 %v4054
    %v4187 = vunpack.c.l.b16 %v4055
    %v4188 = vunpack.c.l.b16 %v4056
    %v4189 = vunpack.c.l.b16 %v4057
    %v4190 = vunpack.c.l.b16 %v4058
    %v4191 = vunpack.c.l.b16 %v4059
    %v4192 = vunpack.c.l.b16 %v4060
    %v4193 = vunpack.c.l.b16 %v4061
    %v4194 = vunpack.c.l.b16 %v4062
    %v4195 = vunpack.c.l.b16 %v4063
    %v4196 = vunpack.c.l.b16 %v4064
    %v4197 = vunpack.c.l.b16 %v4065
    %v4198 = vunpack.c.l.b16 %v4066
    %v4199 = vunpack.c.l.b16 %v4067
    %v4200 = vunpack.c.l.b16 %v4068
    %v4201 = vunpack.c.l.b16 %v4069
    %v4202 = vunpack.c.l.b16 %v4070
    %v4203 = vunpack.c.l.b16 %v4071
    %v4204 = vunpack.c.l.b16 %v4072
    %v4205 = vunpack.c.l.b16 %v4073
    %v4206 = vunpack.c.l.b16 %v4074
    %v4207 = vunpack.c.l.b16 %v4075
    %v4208 = vunpack.c.l.b16 %v4076
    %v4209 = vunpack.c.l.b16 %v4077
    %v4210 = vunpack.c.l.b16 %v4078
    %v4211 = vunpack.c.l.b16 %v4079
    %v4212 = vunpack.c.l.b16 %v4080
    %v4213 = vunpack.c.l.b16 %v4081
    %v4214 = vunpack.c.l.b16 %v4082
    %v4215 = vunpack.c.l.b16 %v4083
    %v4216 = vunpack.c.l.b16 %v4084
    %v4217 = vunpack.c.l.b16 %v4085
    %v4218 = vunpack.c.l.b16 %v4086
    %v4219 = vunpack.c.l.b16 %v4087
    %v4220 = vunpack.c.l.b16 %v4088
    %v4221 = vunpack.c.l.b16 %v4089
    %v4222 = vunpack.c.l.b16 %v4090
    %v4223 = vunpack.c.l.b16 %v4091
    %v4224 = vunpack.c.l.b16 %v4092
    %v4225 = vunpack.c.l.b16 %v4093
    %v4226 = vunpack.c.l.b16 %v4094
    %v4227 = vunpack.c.l.b16 %v4095
    %v4228 = vunpack.c.l.b16 %v4096
    %v4229 = vunpack.c.l.b16 %v4097
    %v4230 = vunpack.c.l.b16 %v4098
    %v4231 = vunpack.c.l.b16 %v4099
    %v4232 = vunpack.c.l.b16 %v4100
    %v4233 = vunpack.c.l.b16 %v4101
    %v4234 = vunpack.c.l.b16 %v4102
    %v4235 = vunpack.c.l.b16 %v4103
    %v4236 = vunpack.c.l.b16 %v4104
    %v4237 = vunpack.c.l.b16 %v4105
    %v4238 = vunpack.c.l.b16 %v4106
    %v4239 = vunpack.c.l.b16 %v4107
    %v4240 = vunpack.c.l.b16 %v4108
    %v4241 = vunpack.c.l.b16 %v4109
    %v4242 = vunpack.c.l.b16 %v4110
    %v4243 = vpack.c.b16 %v4180, %v4179
    %v4244 = vpack.c.b16 %v4182, %v4181
    %v4245 = vpack.c.b16 %v4184, %v4183
    %v4246 = vpack.c.b16 %v4186, %v4185
    %v4247 = vpack.c.b16 %v4188, %v4187
    %v4248 = vpack.c.b16 %v4190, %v4189
    %v4249 = vpack.c.b16 %v4192, %v4191
    %v4250 = vpack.c.b16 %v4194, %v4193
    %v4251 = vpack.c.b16 %v4196, %v4195
    %v4252 = vpack.c.b16 %v4198, %v4197
    %v4253 = vpack.c.b16 %v4200, %v4199
    %v4254 = vpack.c.b16 %v4202, %v4201
    %v4255 = vpack.c.b16 %v4204, %v4203
    %v4256 = vpack.c.b16 %v4206, %v4205
    %v4257 = vpack.c.b16 %v4208, %v4207
    %v4258 = vpack.c.b16 %v4210, %v4209
    %v4259 = vpack.c.b16 %v4212, %v4211
    %v4260 = vpack.c.b16 %v4214, %v4213
    %v4261 = vpack.c.b16 %v4216, %v4215
    %v4262 = vpack.c.b16 %v4218, %v4217
    %v4263 = vpack.c.b16 %v4220, %v4219
    %v4264 = vpack.c.b16 %v4222, %v4221
    %v4265 = vpack.c.b16 %v4224, %v4223
    %v4266 = vpack.c.b16 %v4226, %v4225
    %v4267 = vpack.c.b16 %v4228, %v4227
    %v4268 = vpack.c.b16 %v4230, %v4229
    %v4269 = vpack.c.b16 %v4232, %v4231
    %v4270 = vpack.c.b16 %v4234, %v4233
    %v4271 = vpack.c.b16 %v4236, %v4235
    %v4272 = vpack.c.b16 %v4238, %v4237
    %v4273 = vpack.c.b16 %v4240, %v4239
    %v4274 = vpack.c.b16 %v4242, %v4241
    %4307 = vmatpush.bf16.msra.mxu0 %v4250
    %4308 = vmatpush.bf16.msra.mxu0 %v4249
    %4309 = vmatpush.bf16.msra.mxu0 %v4248
    %4310 = vmatpush.bf16.msra.mxu0 %v4247
    %4311 = vmatpush.bf16.msra.mxu0 %v4246
    %4312 = vmatpush.bf16.msra.mxu0 %v4245
    %4313 = vmatpush.bf16.msra.mxu0 %v4244
    %4314 = vmatpush.bf16.msra.mxu0 %v4243
    %4315 = vmatmul.bf16.gmra.mxu0 %v4043
    %v4316 = vpop.f32.mrf.mxu0
    %v4317 = vadd.f32 %v4113, %v4316
    %v4318 = vpop.f32.mrf.mxu0
    %4319 = vdwg.mxu0
    %4320 = vmatpush.bf16.msra.mxu0 %v4258
    %4321 = vmatpush.bf16.msra.mxu0 %v4257
    %4322 = vmatpush.bf16.msra.mxu0 %v4256
    %4323 = vmatpush.bf16.msra.mxu0 %v4255
    %4324 = vmatpush.bf16.msra.mxu0 %v4254
    %4325 = vmatpush.bf16.msra.mxu0 %v4253
    %4326 = vmatpush.bf16.msra.mxu0 %v4252
    %4327 = vmatpush.bf16.msra.mxu0 %v4251
    %4328 = vmatmul.bf16.gmra.mxu0 %v4044
    %v4329 = vpop.f32.mrf.mxu0
    %v4330 = vadd.f32 %v4317, %v4329
    %v4331 = vpop.f32.mrf.mxu0
    %4332 = vdwg.mxu0
    %4333 = vmatpush.bf16.msra.mxu0 %v4266
    %4334 = vmatpush.bf16.msra.mxu0 %v4265
    %4335 = vmatpush.bf16.msra.mxu0 %v4264
    %4336 = vmatpush.bf16.msra.mxu0 %v4263
    %4337 = vmatpush.bf16.msra.mxu0 %v4262
    %4338 = vmatpush.bf16.msra.mxu0 %v4261
    %4339 = vmatpush.bf16.msra.mxu0 %v4260
    %4340 = vmatpush.bf16.msra.mxu0 %v4259
    %4341 = vmatmul.bf16.gmra.mxu0 %v4045
    %v4342 = vpop.f32.mrf.mxu0
    %v4343 = vadd.f32 %v4330, %v4342
    %v4344 = vpop.f32.mrf.mxu0
    %4345 = vdwg.mxu0
    %4346 = vmatpush.bf16.msra.mxu0 %v4274
    %4347 = vmatpush.bf16.msra.mxu0 %v4273
    %4348 = vmatpush.bf16.msra.mxu0 %v4272
    %4349 = vmatpush.bf16.msra.mxu0 %v4271
    %4350 = vmatpush.bf16.msra.mxu0 %v4270
    %4351 = vmatpush.bf16.msra.mxu0 %v4269
    %4352 = vmatpush.bf16.msra.mxu0 %v4268
    %4353 = vmatpush.bf16.msra.mxu0 %v4267
    %4354 = vmatmul.bf16.gmra.mxu0 %v4046
    %v4355 = vpop.f32.mrf.mxu0
    %v4356 = vadd.f32 %v4343, %v4355
    %v4357 = vpop.f32.mrf.mxu0
    %4358 = vdwg.mxu0
    %4359 = vmax.xlane.f32.xlu0 %v4356
    %v4360 = vpop.xlane.xlu0 %4359
    %v4361 = vsub.f32 %v4356, %v4360
    %v4362 = vmul.f32 %v4361, 1.442695
    %v4363 = vpow.pop %v4362
    %4364 = vadd.xlane.f32.xlu0 %v4363
    %v4365 = vpop.xlane.xlu0 %4364
    %v4366 = vlog2.pop %v4365
    %v4367 = vmul.f32 %v4366, 0.6931472
    %v4368 = vsub.f32 %v4361, %v4367
    %4369 = vst [vmem:[#allocation11] sm:$0xff] %v4368
    // Predicated region
    $region42: #{tpu_custom_call.1} parent=1 // pred_check
      _
    $region43: #{tpu_custom_call.1} parent=1 // pred_check_branch
      %4371 = sbr.rel (0) target = $region45
    $region44: #{tpu_custom_call.1} parent=1 // pred_region
      %4373 = vsyncadd [#allocation4], 0
      %s4375 = sshll.u32 [#allocation11], 4
      %s4376 = int_to_ptr.vmem [resolvable:$true] %s4375
      %s4377 = sshll.u32 %s5, 4
      %s4378 = int_to_ptr.hbm [resolvable:$true] %s4377
      %4380 = dma.vmem_to_hbm [thread:$0]  %s4376, 128, %s4378, [#allocation4]
    $region45: #{tpu_custom_call.1} parent=1 // pred_fallthru
      _
    // Predicated region
    $region46: #{tpu_custom_call.1} parent=1 // pred_check
      _
    $region47: #{tpu_custom_call.1} parent=1 // pred_check_branch
      %4382 = sbr.rel (0) target = $region49
    $region48: #{tpu_custom_call.1} parent=1 // pred_region
      %4384 = dma.done [#allocation4], 128
    $region49: #{tpu_custom_call.1} parent=1 // pred_fallthru
      _
    %4385 = vsyncpa [#allocation3], 1
    %4386 = vsyncpa [#allocation6], 1
    %4387 = vsyncpa [#allocation9], 1
    %4388 = vsyncpa [#allocation4], 1

</llo_original>
